<compile_context>
chip_gen: v7x
topology: tpu7x:2x2x1
jax: 0.10.0
libtpu: 0.0.40
codegen_flags: <defaults>
</compile_context>

<pallas_src>
import math
import jax
import jax.numpy as jnp
from jax import lax
from jax.experimental import pallas as pl
from jax.experimental.pallas import tpu as pltpu

# Set to jnp.bfloat16 on v6e/v7x: native bf16 MXU (~2x throughput) + half the W_hh bytes.
# Gate math / carries stay f32 regardless (required on v5e: no bf16 VPU/EUP).
MXU_DTYPE = jnp.float32


# ----------------------------- Pallas fused BiLSTM kernel -----------------------------

def _make_bilstm_kernel(T, H2):
    def kernel(gx_ref, whh_ref, mask_ref, out_ref, hlast_ref):
        # gx_ref:   [2, T, Bp, 4*H2]  precomputed x@W_ih + b; d=0 fwd (time order), d=1 bwd
        #                             (pre-reversed -> step order)
        # whh_ref:  [2, H2, 4*H2]     recurrent weights (W_hh^T) per direction
        # mask_ref: [2, T, Bp, 1]     f32 validity mask per direction, step order
        # out_ref:  [T, Bp, 2*H2]     fwd half in lanes [:H2], bwd half in lanes [H2:]
        # hlast_ref:[Bp, 2*H2]
        Bp = hlast_ref.shape[0]
        w_f = whh_ref[0]                      # hoisted: loop-invariant W_hh loads
        w_b = whh_ref[1]
        zeros = jnp.zeros((Bp, H2), jnp.float32)

        def gates(g, c):
            i_g = jax.nn.sigmoid(g[:, 0 * H2:1 * H2])   # PyTorch gate order i, f, g, o
            f_g = jax.nn.sigmoid(g[:, 1 * H2:2 * H2])
            g_g = jnp.tanh(g[:, 2 * H2:3 * H2])
            o_g = jax.nn.sigmoid(g[:, 3 * H2:4 * H2])
            c_n = f_g * c + i_g * g_g
            h_n = o_g * jnp.tanh(c_n)
            return h_n, c_n

        def step(s, carry):
            h_f, c_f, h_b, c_b = carry
            tr = T - 1 - s                                # true time index of the bwd step
            # Two independent recurrent matmuls issued back-to-back (latency overlap).
            g_f = gx_ref[0, s] + jnp.dot(h_f.astype(w_f.dtype), w_f,
                                         preferred_element_type=jnp.float32)
            g_b = gx_ref[1, s] + jnp.dot(h_b.astype(w_b.dtype), w_b,
                                         preferred_element_type=jnp.float32)
            m_f = mask_ref[0, s]                          # [Bp, 1], broadcasts over H2
            m_b = mask_ref[1, s]

            hf_n, cf_n = gates(g_f, c_f)
            hb_n, cb_n = gates(g_b, c_b)

            # padded positions emit 0 (mask is 0/1 float); stores are 128-lane dense & aligned
            out_ref[s, :, 0:H2] = hf_n * m_f
            out_ref[tr, :, H2:2 * H2] = hb_n * m_b

            # freeze carries past the true length: lerp with the mask (pure VPU mul/add)
            h_f = h_f + m_f * (hf_n - h_f)
            c_f = c_f + m_f * (cf_n - c_f)
            h_b = h_b + m_b * (hb_n - h_b)
            c_b = c_b + m_b * (cb_n - c_b)
            return (h_f, c_f, h_b, c_b)

        unroll = True if T <= 16 else 2
        h_f, _, h_b, _ = lax.fori_loop(0, T, step, (zeros, zeros, zeros, zeros), unroll=unroll)
        hlast_ref[:, 0:H2] = h_f                           # final hiddens, written once
        hlast_ref[:, H2:2 * H2] = h_b
    return kernel


def bilstm_pallas(x_bte, lens, fwd_params, bwd_params, *, mxu_dtype=MXU_DTYPE):
    """Bidirectional single-layer LSTM, batch_first in/out. Returns ([B,T,H], [B,H])."""
    B, T, E = x_bte.shape
    H2 = fwd_params[1].shape[0]
    G = 4 * H2
    Bp = ((B + 7) // 8) * 8                                # pad batch (sublane) dim to mult of 8

    x = x_bte.astype(jnp.float32)
    lens = jnp.asarray(lens, jnp.int32)

    # Hoisted input projection: two (T*B, E) x (E, G) GEMMs, result born time-major.
    # The backward direction uses the time-reversed input so its gx is already in step order.
    x_tbe = jnp.transpose(x, (1, 0, 2))                    # [T, B, E] (small transpose on x)
    x_rev = x_tbe[::-1]
    gx_f = (x_tbe.reshape(T * B, E) @ fwd_params[0]).reshape(T, B, G) + fwd_params[2].reshape(1, 1, G)
    gx_b = (x_rev.reshape(T * B, E) @ bwd_params[0]).reshape(T, B, G) + bwd_params[2].reshape(1, 1, G)
    gx = jnp.stack([gx_f, gx_b])                           # [2, T, B, G]
    if Bp != B:
        gx = jnp.pad(gx, ((0, 0), (0, 0), (0, Bp - B), (0, 0)))

    # Precomputed validity masks (step order per direction). Padded rows have lens=0 -> all zero.
    lens_p = jnp.zeros((Bp,), jnp.int32).at[:B].set(lens)
    t_idx = jnp.arange(T, dtype=jnp.int32)
    m_fwd = (t_idx[:, None] < lens_p[None, :]).astype(jnp.float32)             # [T, Bp]
    m_bwd = ((T - 1 - t_idx)[:, None] < lens_p[None, :]).astype(jnp.float32)   # [T, Bp]
    mask = jnp.stack([m_fwd, m_bwd])[..., None]            # [2, T, Bp, 1]

    whh = jnp.stack([fwd_params[1], bwd_params[1]]).astype(mxu_dtype)          # [2, H2, G]

    # VMEM budget: everything is resident; x2 for buffering + margin. (v5e default scoped = 16 MiB)
    need = (gx.size * 4 + mask.size * 4 + whh.size * whh.dtype.itemsize
            + T * Bp * 2 * H2 * 4 + Bp * 2 * H2 * 4)
    vmem_limit = int(min(max(2 * need + (2 << 20), 32 * 1024 * 1024), 100 * 1024 * 1024))

    out, hlast = pl.pallas_call(
        _make_bilstm_kernel(T, H2),
        out_shape=(jax.ShapeDtypeStruct((T, Bp, 2 * H2), jnp.float32),
                   jax.ShapeDtypeStruct((Bp, 2 * H2), jnp.float32)),
        grid_spec=pltpu.PrefetchScalarGridSpec(
            num_scalar_prefetch=0,
            grid=(1,),                                                  # whole problem is VMEM-resident
            in_specs=[
                pl.BlockSpec((2, T, Bp, G), lambda i: (0, 0, 0, 0)),    # precomputed gate inputs
                pl.BlockSpec((2, H2, G), lambda i: (0, 0, 0)),          # W_hh^T (both directions)
                pl.BlockSpec((2, T, Bp, 1), lambda i: (0, 0, 0, 0)),    # validity masks
            ],
            out_specs=(pl.BlockSpec((T, Bp, 2 * H2), lambda i: (0, 0, 0)),
                       pl.BlockSpec((Bp, 2 * H2), lambda i: (0, 0))),
        ),
        compiler_params=pltpu.CompilerParams(
            dimension_semantics=("arbitrary",),
            vmem_limit_bytes=vmem_limit),
    )(gx, whh, mask)

    outputs = jnp.transpose(out, (1, 0, 2))[:B]            # [B, T, H]  (both halves already merged)
    hiddens = hlast[:B]                                    # [B, H]
    return outputs, hiddens


# ----------------------------- pure-JAX reference (for sanity) -----------------------------

def _lstm_dir_ref(x_tbe, lens, w_ih, w_hh, b, reverse):
    T, B, _ = x_tbe.shape
    H2 = w_hh.shape[0]
    ts = jnp.arange(T)[::-1] if reverse else jnp.arange(T)

    def step(carry, ta):
        h, c = carry
        xt = x_tbe[ta]
        g = xt @ w_ih + h @ w_hh + b
        i = jax.nn.sigmoid(g[:, :H2]); f = jax.nn.sigmoid(g[:, H2:2 * H2])
        gg = jnp.tanh(g[:, 2 * H2:3 * H2]); o = jax.nn.sigmoid(g[:, 3 * H2:])
        cn = f * c + i * gg
        hn = o * jnp.tanh(cn)
        valid = lens[:, None] > ta
        return (jnp.where(valid, hn, h), jnp.where(valid, cn, c)), jnp.where(valid, hn, 0.0)

    init = (jnp.zeros((B, H2), jnp.float32), jnp.zeros((B, H2), jnp.float32))
    (hT, _), outs = jax.lax.scan(step, init, ts)
    outs = outs[::-1] if reverse else outs
    return outs, hT


def bilstm_ref(x_bte, lens, fwd_params, bwd_params):
    x_tbe = jnp.transpose(x_bte, (1, 0, 2)).astype(jnp.float32)
    lens = jnp.asarray(lens, jnp.int32)
    out_f, h_f = _lstm_dir_ref(x_tbe, lens, *fwd_params, reverse=False)
    out_b, h_b = _lstm_dir_ref(x_tbe, lens, *bwd_params, reverse=True)
    return (jnp.transpose(jnp.concatenate([out_f, out_b], -1), (1, 0, 2)),
            jnp.concatenate([h_f, h_b], -1))


# ----------------------------- parameter init (deterministic, synthetic) -----------------------------

def _init_lstm_dir(key, E, H2):
    k1, k2, k3 = jax.random.split(key, 3)
    bound = 1.0 / math.sqrt(H2)
    w_ih = jax.random.uniform(k1, (E, 4 * H2), jnp.float32, -bound, bound)          # W_ih^T
    w_hh = jax.random.uniform(k2, (H2, 4 * H2), jnp.float32, -bound, bound)         # W_hh^T
    bias = jax.random.uniform(k3, (1, 4 * H2), jnp.float32, -2 * bound, 2 * bound)  # b_ih + b_hh
    return w_ih, w_hh, bias


# ----------------------------- GraphInputLayer forward -----------------------------

def graph_input_forward(embed_w, q_params, s_params, batch):
    # word embedding lookup (glue; padding_idx=0 row is zero)
    q_emb = embed_w[batch["questions"]]
    t_emb = embed_w[batch["tables"]]
    c_emb = embed_w[batch["columns"]]
    # nn.Dropout(p=0.2): eval mode -> identity.
    # TODO(synk): masked_scatter_ unk-embedding path omitted (batch.*_unk_mask is None here).

    q_out, _ = bilstm_pallas(q_emb, batch["question_lens"], *q_params)    # question_lstm outputs

    # tables and columns share schema_lstm weights -> fuse into one kernel launch
    Nt, Tt, _ = t_emb.shape
    Nc, Tc, _ = c_emb.shape
    Tm = max(Tt, Tc)
    s_emb = jnp.concatenate([jnp.pad(t_emb, ((0, 0), (0, Tm - Tt), (0, 0))),
                             jnp.pad(c_emb, ((0, 0), (0, Tm - Tc), (0, 0)))], axis=0)
    s_lens = jnp.concatenate([jnp.asarray(batch["table_word_lens"], jnp.int32),
                              jnp.asarray(batch["column_word_lens"], jnp.int32)])
    _, s_hid = bilstm_pallas(s_emb, s_lens, *s_params)                    # head+tail aggregation
    t_hid, c_hid = s_hid[:Nt], s_hid[Nt:Nt + Nc]

    q_lens = batch["question_lens_py"]
    t_lens = batch["table_lens_py"]
    c_lens = batch["column_lens_py"]
    pieces, t_off, c_off = [], 0, 0
    for b in range(len(q_lens)):
        pieces.append(q_out[b, :q_lens[b]])                 # valid question positions
        pieces.append(t_hid[t_off:t_off + t_lens[b]]); t_off += t_lens[b]
        pieces.append(c_hid[c_off:c_off + c_lens[b]]); c_off += c_lens[b]
    return jnp.concatenate(pieces, axis=0), q_out, t_hid, c_hid


if __name__ == "__main__":
    V, E, H = 64, 128, 256          # word_vocab, embed_size, hidden_size
    H2 = H // 2

    key = jax.random.PRNGKey(0)
    k_emb, kq, ks, k_tok = jax.random.split(key, 4)

    embed_w = 0.1 * jax.random.normal(k_emb, (V, E), jnp.float32)
    embed_w = embed_w.at[0].set(0.0)                        # padding_idx=0

    q_params = (_init_lstm_dir(jax.random.fold_in(kq, 0), E, H2),
                _init_lstm_dir(jax.random.fold_in(kq, 1), E, H2))   # question_lstm (fwd, rev)
    s_params = (_init_lstm_dir(jax.random.fold_in(ks, 0), E, H2),
                _init_lstm_dir(jax.random.fold_in(ks, 1), E, H2))   # schema_lstm (fwd, rev)

    # synthetic batch (small)
    Bq, Tq = 2, 8
    q_lens = [8, 5]
    Nt, Tt = 5, 4
    t_word_lens = [3, 2, 4, 1, 2]
    table_lens = [2, 3]
    Nc, Tc = 7, 4
    c_word_lens = [2, 4, 1, 3, 2, 2, 1]
    column_lens = [3, 4]

    def make_tokens(k, n, t, lens):
        ids = jax.random.randint(k, (n, t), 1, V)
        mask = jnp.arange(t)[None, :] < jnp.asarray(lens)[:, None]
        return jnp.where(mask, ids, 0).astype(jnp.int32)

    kq_tok, kt_tok, kc_tok = jax.random.split(k_tok, 3)
    batch = {
        "questions": make_tokens(kq_tok, Bq, Tq, q_lens),
        "tables": make_tokens(kt_tok, Nt, Tt, t_word_lens),
        "columns": make_tokens(kc_tok, Nc, Tc, c_word_lens),
        "question_lens": jnp.asarray(q_lens, jnp.int32),
        "table_word_lens": jnp.asarray(t_word_lens, jnp.int32),
        "column_word_lens": jnp.asarray(c_word_lens, jnp.int32),
        "question_lens_py": q_lens,
        "table_lens_py": table_lens,
        "column_lens_py": column_lens,
    }

    outputs, q_out, t_hid, c_hid = graph_input_forward(embed_w, q_params, s_params, batch)
    outputs = jax.block_until_ready(outputs)

    # sanity check against a pure-JAX lax.scan LSTM reference
    ref_q_out, _ = bilstm_ref(embed_w[batch["questions"]], batch["question_lens"], *q_params)
    _, ref_t_hid = bilstm_ref(embed_w[batch["tables"]], batch["table_word_lens"], *s_params)
    _, ref_c_hid = bilstm_ref(embed_w[batch["columns"]], batch["column_word_lens"], *s_params)
    assert jnp.allclose(q_out, ref_q_out, atol=2e-3, rtol=2e-3)
    assert jnp.allclose(t_hid, ref_t_hid, atol=2e-3, rtol=2e-3)
    assert jnp.allclose(c_hid, ref_c_hid, atol=2e-3, rtol=2e-3)
    assert outputs.shape == (sum(q_lens) + Nt + Nc, H)

    print("KERNEL_OK")
</pallas_src>

<mosaic_0001>
module attributes {stable_mosaic.version = 11 : i64} {
  func.func @kernel(%arg0: i32, %arg1: memref<2x8x8x512xf32, #tpu.memory_space<vmem>>, %arg2: memref<2x128x512xf32, #tpu.memory_space<vmem>>, %arg3: memref<2x8x8x1xf32, #tpu.memory_space<vmem>>, %arg4: memref<8x8x256xf32, #tpu.memory_space<vmem>>, %arg5: memref<8x256xf32, #tpu.memory_space<vmem>>) attributes {dimension_semantics = [#tpu.dimension_semantics<arbitrary>], iteration_bounds = array<i64: 1>, scalar_prefetch = 0 : i64, scratch_operands = 0 : i64, tpu.core_type = #tpu.core_type<tc>, window_params = [{pipeline_mode = #tpu.pipeline_mode<synchronous>, transform_indices = @transform_0, window_bounds = array<i64: 2, 8, 8, 512>}, {pipeline_mode = #tpu.pipeline_mode<synchronous>, transform_indices = @transform_1, window_bounds = array<i64: 2, 128, 512>}, {pipeline_mode = #tpu.pipeline_mode<synchronous>, transform_indices = @transform_2, window_bounds = array<i64: 2, 8, 8, 1>}, {pipeline_mode = #tpu.pipeline_mode<synchronous>, transform_indices = @transform_3, window_bounds = array<i64: 8, 8, 256>}, {pipeline_mode = #tpu.pipeline_mode<synchronous>, transform_indices = @transform_4, window_bounds = array<i64: 8, 256>}]} {
    %c0 = arith.constant 0 : index
    %c0_0 = arith.constant 0 : index
    %c0_1 = arith.constant 0 : index
    %0 = vector.load %arg2[%c0, %c0_0, %c0_1] : memref<2x128x512xf32, #tpu.memory_space<vmem>>, vector<1x128x512xf32>
    %1 = vector.shape_cast %0 : vector<1x128x512xf32> to vector<128x512xf32>
    %c1 = arith.constant 1 : index
    %c0_2 = arith.constant 0 : index
    %c0_3 = arith.constant 0 : index
    %2 = vector.load %arg2[%c1, %c0_2, %c0_3] : memref<2x128x512xf32, #tpu.memory_space<vmem>>, vector<1x128x512xf32>
    %3 = vector.shape_cast %2 : vector<1x128x512xf32> to vector<128x512xf32>
    %cst = arith.constant 0.000000e+00 : f32
    %4 = vector.broadcast %cst : f32 to vector<8x128xf32>
    %c0_i32 = arith.constant 0 : i32
    %c7_i32 = arith.constant 7 : i32
    %5 = arith.subi %c7_i32, %c0_i32 : i32
    %c0_4 = arith.constant 0 : index
    %6 = arith.index_cast %c0_i32 : i32 to index
    %c0_5 = arith.constant 0 : index
    %c0_6 = arith.constant 0 : index
    %7 = vector.load %arg1[%c0_4, %6, %c0_5, %c0_6] : memref<2x8x8x512xf32, #tpu.memory_space<vmem>>, vector<1x1x8x512xf32>
    %8 = vector.shape_cast %7 : vector<1x1x8x512xf32> to vector<8x512xf32>
    %cst_7 = arith.constant dense<0.000000e+00> : vector<8x512xf32>
    %9 = tpu.matmul %4, %1, %cst_7 {dimension_numbers = #tpu.dot_dimension_numbers<[1], [0], [0], [1], [0, 0, 1, 1], [], []>} : vector<8x128xf32>, vector<128x512xf32>, vector<8x512xf32> -> vector<8x512xf32>
    %10 = arith.addf %8, %9 : vector<8x512xf32>
    %c1_8 = arith.constant 1 : index
    %11 = arith.index_cast %c0_i32 : i32 to index
    %c0_9 = arith.constant 0 : index
    %c0_10 = arith.constant 0 : index
    %12 = vector.load %arg1[%c1_8, %11, %c0_9, %c0_10] : memref<2x8x8x512xf32, #tpu.memory_space<vmem>>, vector<1x1x8x512xf32>
    %13 = vector.shape_cast %12 : vector<1x1x8x512xf32> to vector<8x512xf32>
    %cst_11 = arith.constant dense<0.000000e+00> : vector<8x512xf32>
    %14 = tpu.matmul %4, %3, %cst_11 {dimension_numbers = #tpu.dot_dimension_numbers<[1], [0], [0], [1], [0, 0, 1, 1], [], []>} : vector<8x128xf32>, vector<128x512xf32>, vector<8x512xf32> -> vector<8x512xf32>
    %15 = arith.addf %13, %14 : vector<8x512xf32>
    %c0_12 = arith.constant 0 : index
    %16 = arith.index_cast %c0_i32 : i32 to index
    %c0_13 = arith.constant 0 : index
    %c0_14 = arith.constant 0 : index
    %17 = vector.load %arg3[%c0_12, %16, %c0_13, %c0_14] : memref<2x8x8x1xf32, #tpu.memory_space<vmem>>, vector<1x1x8x1xf32>
    %18 = vector.shape_cast %17 : vector<1x1x8x1xf32> to vector<8x1xf32>
    %c1_15 = arith.constant 1 : index
    %19 = arith.index_cast %c0_i32 : i32 to index
    %c0_16 = arith.constant 0 : index
    %c0_17 = arith.constant 0 : index
    %20 = vector.load %arg3[%c1_15, %19, %c0_16, %c0_17] : memref<2x8x8x1xf32, #tpu.memory_space<vmem>>, vector<1x1x8x1xf32>
    %21 = vector.shape_cast %20 : vector<1x1x8x1xf32> to vector<8x1xf32>
    %22 = vector.extract_strided_slice %10 {offsets = [0, 0], sizes = [8, 128], strides = [1, 1]} : vector<8x512xf32> to vector<8x128xf32>
    %23 = arith.negf %22 : vector<8x128xf32>
    %24 = math.exp %23 : vector<8x128xf32>
    %cst_18 = arith.constant 1.000000e+00 : f32
    %25 = vector.broadcast %cst_18 : f32 to vector<8x128xf32>
    %26 = arith.addf %25, %24 : vector<8x128xf32>
    %27 = arith.divf %25, %26 : vector<8x128xf32>
    %28 = vector.extract_strided_slice %10 {offsets = [0, 128], sizes = [8, 128], strides = [1, 1]} : vector<8x512xf32> to vector<8x128xf32>
    %29 = arith.negf %28 : vector<8x128xf32>
    %30 = math.exp %29 : vector<8x128xf32>
    %cst_19 = arith.constant 1.000000e+00 : f32
    %31 = vector.broadcast %cst_19 : f32 to vector<8x128xf32>
    %32 = arith.addf %31, %30 : vector<8x128xf32>
    %33 = arith.divf %31, %32 : vector<8x128xf32>
    %34 = vector.extract_strided_slice %10 {offsets = [0, 256], sizes = [8, 128], strides = [1, 1]} : vector<8x512xf32> to vector<8x128xf32>
    %35 = math.tanh %34 : vector<8x128xf32>
    %36 = vector.extract_strided_slice %10 {offsets = [0, 384], sizes = [8, 128], strides = [1, 1]} : vector<8x512xf32> to vector<8x128xf32>
    %37 = arith.negf %36 : vector<8x128xf32>
    %38 = math.exp %37 : vector<8x128xf32>
    %cst_20 = arith.constant 1.000000e+00 : f32
    %39 = vector.broadcast %cst_20 : f32 to vector<8x128xf32>
    %40 = arith.addf %39, %38 : vector<8x128xf32>
    %41 = arith.divf %39, %40 : vector<8x128xf32>
    %42 = arith.mulf %33, %4 : vector<8x128xf32>
    %43 = arith.mulf %27, %35 : vector<8x128xf32>
    %44 = arith.addf %42, %43 : vector<8x128xf32>
    %45 = math.tanh %44 : vector<8x128xf32>
    %46 = arith.mulf %41, %45 : vector<8x128xf32>
    %47 = vector.extract_strided_slice %15 {offsets = [0, 0], sizes = [8, 128], strides = [1, 1]} : vector<8x512xf32> to vector<8x128xf32>
    %48 = arith.negf %47 : vector<8x128xf32>
    %49 = math.exp %48 : vector<8x128xf32>
    %cst_21 = arith.constant 1.000000e+00 : f32
    %50 = vector.broadcast %cst_21 : f32 to vector<8x128xf32>
    %51 = arith.addf %50, %49 : vector<8x128xf32>
    %52 = arith.divf %50, %51 : vector<8x128xf32>
    %53 = vector.extract_strided_slice %15 {offsets = [0, 128], sizes = [8, 128], strides = [1, 1]} : vector<8x512xf32> to vector<8x128xf32>
    %54 = arith.negf %53 : vector<8x128xf32>
    %55 = math.exp %54 : vector<8x128xf32>
    %cst_22 = arith.constant 1.000000e+00 : f32
    %56 = vector.broadcast %cst_22 : f32 to vector<8x128xf32>
    %57 = arith.addf %56, %55 : vector<8x128xf32>
    %58 = arith.divf %56, %57 : vector<8x128xf32>
    %59 = vector.extract_strided_slice %15 {offsets = [0, 256], sizes = [8, 128], strides = [1, 1]} : vector<8x512xf32> to vector<8x128xf32>
    %60 = math.tanh %59 : vector<8x128xf32>
    %61 = vector.extract_strided_slice %15 {offsets = [0, 384], sizes = [8, 128], strides = [1, 1]} : vector<8x512xf32> to vector<8x128xf32>
    %62 = arith.negf %61 : vector<8x128xf32>
    %63 = math.exp %62 : vector<8x128xf32>
    %cst_23 = arith.constant 1.000000e+00 : f32
    %64 = vector.broadcast %cst_23 : f32 to vector<8x128xf32>
    %65 = arith.addf %64, %63 : vector<8x128xf32>
    %66 = arith.divf %64, %65 : vector<8x128xf32>
    %67 = arith.mulf %58, %4 : vector<8x128xf32>
    %68 = arith.mulf %52, %60 : vector<8x128xf32>
    %69 = arith.addf %67, %68 : vector<8x128xf32>
    %70 = math.tanh %69 : vector<8x128xf32>
    %71 = arith.mulf %66, %70 : vector<8x128xf32>
    %72 = vector.broadcast %18 : vector<8x1xf32> to vector<8x128xf32>
    %73 = arith.mulf %46, %72 : vector<8x128xf32>
    %74 = arith.index_cast %c0_i32 : i32 to index
    %c0_24 = arith.constant 0 : index
    %c0_25 = arith.constant 0 : index
    %75 = vector.load %arg4[%74, %c0_24, %c0_25] : memref<8x8x256xf32, #tpu.memory_space<vmem>>, vector<1x8x128xf32>
    %76 = vector.shape_cast %75 : vector<1x8x128xf32> to vector<8x128xf32>
    %77 = vector.shape_cast %73 : vector<8x128xf32> to vector<1x8x128xf32>
    tpu.vector_store %arg4[%74, %c0_24, %c0_25], %77 {strides = array<i32>} : memref<8x8x256xf32, #tpu.memory_space<vmem>>, vector<1x8x128xf32>,
    %78 = vector.broadcast %21 : vector<8x1xf32> to vector<8x128xf32>
    %79 = arith.mulf %71, %78 : vector<8x128xf32>
    %80 = arith.index_cast %5 : i32 to index
    %c0_26 = arith.constant 0 : index
    %c128 = arith.constant 128 : index
    %81 = vector.load %arg4[%80, %c0_26, %c128] : memref<8x8x256xf32, #tpu.memory_space<vmem>>, vector<1x8x128xf32>
    %82 = vector.shape_cast %81 : vector<1x8x128xf32> to vector<8x128xf32>
    %83 = vector.shape_cast %79 : vector<8x128xf32> to vector<1x8x128xf32>
    tpu.vector_store %arg4[%80, %c0_26, %c128], %83 {strides = array<i32>} : memref<8x8x256xf32, #tpu.memory_space<vmem>>, vector<1x8x128xf32>,
    %84 = arith.subf %46, %4 : vector<8x128xf32>
    %85 = vector.broadcast %18 : vector<8x1xf32> to vector<8x128xf32>
    %86 = arith.mulf %85, %84 : vector<8x128xf32>
    %87 = arith.addf %4, %86 : vector<8x128xf32>
    %88 = arith.subf %44, %4 : vector<8x128xf32>
    %89 = vector.broadcast %18 : vector<8x1xf32> to vector<8x128xf32>
    %90 = arith.mulf %89, %88 : vector<8x128xf32>
    %91 = arith.addf %4, %90 : vector<8x128xf32>
    %92 = arith.subf %71, %4 : vector<8x128xf32>
    %93 = vector.broadcast %21 : vector<8x1xf32> to vector<8x128xf32>
    %94 = arith.mulf %93, %92 : vector<8x128xf32>
    %95 = arith.addf %4, %94 : vector<8x128xf32>
    %96 = arith.subf %69, %4 : vector<8x128xf32>
    %97 = vector.broadcast %21 : vector<8x1xf32> to vector<8x128xf32>
    %98 = arith.mulf %97, %96 : vector<8x128xf32>
    %99 = arith.addf %4, %98 : vector<8x128xf32>
    %c1_i32 = arith.constant 1 : i32
    %c7_i32_27 = arith.constant 7 : i32
    %100 = arith.subi %c7_i32_27, %c1_i32 : i32
    %c0_28 = arith.constant 0 : index
    %101 = arith.index_cast %c1_i32 : i32 to index
    %c0_29 = arith.constant 0 : index
    %c0_30 = arith.constant 0 : index
    %102 = vector.load %arg1[%c0_28, %101, %c0_29, %c0_30] : memref<2x8x8x512xf32, #tpu.memory_space<vmem>>, vector<1x1x8x512xf32>
    %103 = vector.shape_cast %102 : vector<1x1x8x512xf32> to vector<8x512xf32>
    %cst_31 = arith.constant dense<0.000000e+00> : vector<8x512xf32>
    %104 = tpu.matmul %87, %1, %cst_31 {dimension_numbers = #tpu.dot_dimension_numbers<[1], [0], [0], [1], [0, 0, 1, 1], [], []>} : vector<8x128xf32>, vector<128x512xf32>, vector<8x512xf32> -> vector<8x512xf32>
    %105 = arith.addf %103, %104 : vector<8x512xf32>
    %c1_32 = arith.constant 1 : index
    %106 = arith.index_cast %c1_i32 : i32 to index
    %c0_33 = arith.constant 0 : index
    %c0_34 = arith.constant 0 : index
    %107 = vector.load %arg1[%c1_32, %106, %c0_33, %c0_34] : memref<2x8x8x512xf32, #tpu.memory_space<vmem>>, vector<1x1x8x512xf32>
    %108 = vector.shape_cast %107 : vector<1x1x8x512xf32> to vector<8x512xf32>
    %cst_35 = arith.constant dense<0.000000e+00> : vector<8x512xf32>
    %109 = tpu.matmul %95, %3, %cst_35 {dimension_numbers = #tpu.dot_dimension_numbers<[1], [0], [0], [1], [0, 0, 1, 1], [], []>} : vector<8x128xf32>, vector<128x512xf32>, vector<8x512xf32> -> vector<8x512xf32>
    %110 = arith.addf %108, %109 : vector<8x512xf32>
    %c0_36 = arith.constant 0 : index
    %111 = arith.index_cast %c1_i32 : i32 to index
    %c0_37 = arith.constant 0 : index
    %c0_38 = arith.constant 0 : index
    %112 = vector.load %arg3[%c0_36, %111, %c0_37, %c0_38] : memref<2x8x8x1xf32, #tpu.memory_space<vmem>>, vector<1x1x8x1xf32>
    %113 = vector.shape_cast %112 : vector<1x1x8x1xf32> to vector<8x1xf32>
    %c1_39 = arith.constant 1 : index
    %114 = arith.index_cast %c1_i32 : i32 to index
    %c0_40 = arith.constant 0 : index
    %c0_41 = arith.constant 0 : index
    %115 = vector.load %arg3[%c1_39, %114, %c0_40, %c0_41] : memref<2x8x8x1xf32, #tpu.memory_space<vmem>>, vector<1x1x8x1xf32>
    %116 = vector.shape_cast %115 : vector<1x1x8x1xf32> to vector<8x1xf32>
    %117 = vector.extract_strided_slice %105 {offsets = [0, 0], sizes = [8, 128], strides = [1, 1]} : vector<8x512xf32> to vector<8x128xf32>
    %118 = arith.negf %117 : vector<8x128xf32>
    %119 = math.exp %118 : vector<8x128xf32>
    %cst_42 = arith.constant 1.000000e+00 : f32
    %120 = vector.broadcast %cst_42 : f32 to vector<8x128xf32>
    %121 = arith.addf %120, %119 : vector<8x128xf32>
    %122 = arith.divf %120, %121 : vector<8x128xf32>
    %123 = vector.extract_strided_slice %105 {offsets = [0, 128], sizes = [8, 128], strides = [1, 1]} : vector<8x512xf32> to vector<8x128xf32>
    %124 = arith.negf %123 : vector<8x128xf32>
    %125 = math.exp %124 : vector<8x128xf32>
    %cst_43 = arith.constant 1.000000e+00 : f32
    %126 = vector.broadcast %cst_43 : f32 to vector<8x128xf32>
    %127 = arith.addf %126, %125 : vector<8x128xf32>
    %128 = arith.divf %126, %127 : vector<8x128xf32>
    %129 = vector.extract_strided_slice %105 {offsets = [0, 256], sizes = [8, 128], strides = [1, 1]} : vector<8x512xf32> to vector<8x128xf32>
    %130 = math.tanh %129 : vector<8x128xf32>
    %131 = vector.extract_strided_slice %105 {offsets = [0, 384], sizes = [8, 128], strides = [1, 1]} : vector<8x512xf32> to vector<8x128xf32>
    %132 = arith.negf %131 : vector<8x128xf32>
    %133 = math.exp %132 : vector<8x128xf32>
    %cst_44 = arith.constant 1.000000e+00 : f32
    %134 = vector.broadcast %cst_44 : f32 to vector<8x128xf32>
    %135 = arith.addf %134, %133 : vector<8x128xf32>
    %136 = arith.divf %134, %135 : vector<8x128xf32>
    %137 = arith.mulf %128, %91 : vector<8x128xf32>
    %138 = arith.mulf %122, %130 : vector<8x128xf32>
    %139 = arith.addf %137, %138 : vector<8x128xf32>
    %140 = math.tanh %139 : vector<8x128xf32>
    %141 = arith.mulf %136, %140 : vector<8x128xf32>
    %142 = vector.extract_strided_slice %110 {offsets = [0, 0], sizes = [8, 128], strides = [1, 1]} : vector<8x512xf32> to vector<8x128xf32>
    %143 = arith.negf %142 : vector<8x128xf32>
    %144 = math.exp %143 : vector<8x128xf32>
    %cst_45 = arith.constant 1.000000e+00 : f32
    %145 = vector.broadcast %cst_45 : f32 to vector<8x128xf32>
    %146 = arith.addf %145, %144 : vector<8x128xf32>
    %147 = arith.divf %145, %146 : vector<8x128xf32>
    %148 = vector.extract_strided_slice %110 {offsets = [0, 128], sizes = [8, 128], strides = [1, 1]} : vector<8x512xf32> to vector<8x128xf32>
    %149 = arith.negf %148 : vector<8x128xf32>
    %150 = math.exp %149 : vector<8x128xf32>
    %cst_46 = arith.constant 1.000000e+00 : f32
    %151 = vector.broadcast %cst_46 : f32 to vector<8x128xf32>
    %152 = arith.addf %151, %150 : vector<8x128xf32>
    %153 = arith.divf %151, %152 : vector<8x128xf32>
    %154 = vector.extract_strided_slice %110 {offsets = [0, 256], sizes = [8, 128], strides = [1, 1]} : vector<8x512xf32> to vector<8x128xf32>
    %155 = math.tanh %154 : vector<8x128xf32>
    %156 = vector.extract_strided_slice %110 {offsets = [0, 384], sizes = [8, 128], strides = [1, 1]} : vector<8x512xf32> to vector<8x128xf32>
    %157 = arith.negf %156 : vector<8x128xf32>
    %158 = math.exp %157 : vector<8x128xf32>
    %cst_47 = arith.constant 1.000000e+00 : f32
    %159 = vector.broadcast %cst_47 : f32 to vector<8x128xf32>
    %160 = arith.addf %159, %158 : vector<8x128xf32>
    %161 = arith.divf %159, %160 : vector<8x128xf32>
    %162 = arith.mulf %153, %99 : vector<8x128xf32>
    %163 = arith.mulf %147, %155 : vector<8x128xf32>
    %164 = arith.addf %162, %163 : vector<8x128xf32>
    %165 = math.tanh %164 : vector<8x128xf32>
    %166 = arith.mulf %161, %165 : vector<8x128xf32>
    %167 = vector.broadcast %113 : vector<8x1xf32> to vector<8x128xf32>
    %168 = arith.mulf %141, %167 : vector<8x128xf32>
    %169 = arith.index_cast %c1_i32 : i32 to index
    %c0_48 = arith.constant 0 : index
    %c0_49 = arith.constant 0 : index
    %170 = vector.load %arg4[%169, %c0_48, %c0_49] : memref<8x8x256xf32, #tpu.memory_space<vmem>>, vector<1x8x128xf32>
    %171 = vector.shape_cast %170 : vector<1x8x128xf32> to vector<8x128xf32>
    %172 = vector.shape_cast %168 : vector<8x128xf32> to vector<1x8x128xf32>
    tpu.vector_store %arg4[%169, %c0_48, %c0_49], %172 {strides = array<i32>} : memref<8x8x256xf32, #tpu.memory_space<vmem>>, vector<1x8x128xf32>,
    %173 = vector.broadcast %116 : vector<8x1xf32> to vector<8x128xf32>
    %174 = arith.mulf %166, %173 : vector<8x128xf32>
    %175 = arith.index_cast %100 : i32 to index
    %c0_50 = arith.constant 0 : index
    %c128_51 = arith.constant 128 : index
    %176 = vector.load %arg4[%175, %c0_50, %c128_51] : memref<8x8x256xf32, #tpu.memory_space<vmem>>, vector<1x8x128xf32>
    %177 = vector.shape_cast %176 : vector<1x8x128xf32> to vector<8x128xf32>
    %178 = vector.shape_cast %174 : vector<8x128xf32> to vector<1x8x128xf32>
    tpu.vector_store %arg4[%175, %c0_50, %c128_51], %178 {strides = array<i32>} : memref<8x8x256xf32, #tpu.memory_space<vmem>>, vector<1x8x128xf32>,
    %179 = arith.subf %141, %87 : vector<8x128xf32>
    %180 = vector.broadcast %113 : vector<8x1xf32> to vector<8x128xf32>
    %181 = arith.mulf %180, %179 : vector<8x128xf32>
    %182 = arith.addf %87, %181 : vector<8x128xf32>
    %183 = arith.subf %139, %91 : vector<8x128xf32>
    %184 = vector.broadcast %113 : vector<8x1xf32> to vector<8x128xf32>
    %185 = arith.mulf %184, %183 : vector<8x128xf32>
    %186 = arith.addf %91, %185 : vector<8x128xf32>
    %187 = arith.subf %166, %95 : vector<8x128xf32>
    %188 = vector.broadcast %116 : vector<8x1xf32> to vector<8x128xf32>
    %189 = arith.mulf %188, %187 : vector<8x128xf32>
    %190 = arith.addf %95, %189 : vector<8x128xf32>
    %191 = arith.subf %164, %99 : vector<8x128xf32>
    %192 = vector.broadcast %116 : vector<8x1xf32> to vector<8x128xf32>
    %193 = arith.mulf %192, %191 : vector<8x128xf32>
    %194 = arith.addf %99, %193 : vector<8x128xf32>
    %c2_i32 = arith.constant 2 : i32
    %c7_i32_52 = arith.constant 7 : i32
    %195 = arith.subi %c7_i32_52, %c2_i32 : i32
    %c0_53 = arith.constant 0 : index
    %196 = arith.index_cast %c2_i32 : i32 to index
    %c0_54 = arith.constant 0 : index
    %c0_55 = arith.constant 0 : index
    %197 = vector.load %arg1[%c0_53, %196, %c0_54, %c0_55] : memref<2x8x8x512xf32, #tpu.memory_space<vmem>>, vector<1x1x8x512xf32>
    %198 = vector.shape_cast %197 : vector<1x1x8x512xf32> to vector<8x512xf32>
    %cst_56 = arith.constant dense<0.000000e+00> : vector<8x512xf32>
    %199 = tpu.matmul %182, %1, %cst_56 {dimension_numbers = #tpu.dot_dimension_numbers<[1], [0], [0], [1], [0, 0, 1, 1], [], []>} : vector<8x128xf32>, vector<128x512xf32>, vector<8x512xf32> -> vector<8x512xf32>
    %200 = arith.addf %198, %199 : vector<8x512xf32>
    %c1_57 = arith.constant 1 : index
    %201 = arith.index_cast %c2_i32 : i32 to index
    %c0_58 = arith.constant 0 : index
    %c0_59 = arith.constant 0 : index
    %202 = vector.load %arg1[%c1_57, %201, %c0_58, %c0_59] : memref<2x8x8x512xf32, #tpu.memory_space<vmem>>, vector<1x1x8x512xf32>
    %203 = vector.shape_cast %202 : vector<1x1x8x512xf32> to vector<8x512xf32>
    %cst_60 = arith.constant dense<0.000000e+00> : vector<8x512xf32>
    %204 = tpu.matmul %190, %3, %cst_60 {dimension_numbers = #tpu.dot_dimension_numbers<[1], [0], [0], [1], [0, 0, 1, 1], [], []>} : vector<8x128xf32>, vector<128x512xf32>, vector<8x512xf32> -> vector<8x512xf32>
    %205 = arith.addf %203, %204 : vector<8x512xf32>
    %c0_61 = arith.constant 0 : index
    %206 = arith.index_cast %c2_i32 : i32 to index
    %c0_62 = arith.constant 0 : index
    %c0_63 = arith.constant 0 : index
    %207 = vector.load %arg3[%c0_61, %206, %c0_62, %c0_63] : memref<2x8x8x1xf32, #tpu.memory_space<vmem>>, vector<1x1x8x1xf32>
    %208 = vector.shape_cast %207 : vector<1x1x8x1xf32> to vector<8x1xf32>
    %c1_64 = arith.constant 1 : index
    %209 = arith.index_cast %c2_i32 : i32 to index
    %c0_65 = arith.constant 0 : index
    %c0_66 = arith.constant 0 : index
    %210 = vector.load %arg3[%c1_64, %209, %c0_65, %c0_66] : memref<2x8x8x1xf32, #tpu.memory_space<vmem>>, vector<1x1x8x1xf32>
    %211 = vector.shape_cast %210 : vector<1x1x8x1xf32> to vector<8x1xf32>
    %212 = vector.extract_strided_slice %200 {offsets = [0, 0], sizes = [8, 128], strides = [1, 1]} : vector<8x512xf32> to vector<8x128xf32>
    %213 = arith.negf %212 : vector<8x128xf32>
    %214 = math.exp %213 : vector<8x128xf32>
    %cst_67 = arith.constant 1.000000e+00 : f32
    %215 = vector.broadcast %cst_67 : f32 to vector<8x128xf32>
    %216 = arith.addf %215, %214 : vector<8x128xf32>
    %217 = arith.divf %215, %216 : vector<8x128xf32>
    %218 = vector.extract_strided_slice %200 {offsets = [0, 128], sizes = [8, 128], strides = [1, 1]} : vector<8x512xf32> to vector<8x128xf32>
    %219 = arith.negf %218 : vector<8x128xf32>
    %220 = math.exp %219 : vector<8x128xf32>
    %cst_68 = arith.constant 1.000000e+00 : f32
    %221 = vector.broadcast %cst_68 : f32 to vector<8x128xf32>
    %222 = arith.addf %221, %220 : vector<8x128xf32>
    %223 = arith.divf %221, %222 : vector<8x128xf32>
    %224 = vector.extract_strided_slice %200 {offsets = [0, 256], sizes = [8, 128], strides = [1, 1]} : vector<8x512xf32> to vector<8x128xf32>
    %225 = math.tanh %224 : vector<8x128xf32>
    %226 = vector.extract_strided_slice %200 {offsets = [0, 384], sizes = [8, 128], strides = [1, 1]} : vector<8x512xf32> to vector<8x128xf32>
    %227 = arith.negf %226 : vector<8x128xf32>
    %228 = math.exp %227 : vector<8x128xf32>
    %cst_69 = arith.constant 1.000000e+00 : f32
    %229 = vector.broadcast %cst_69 : f32 to vector<8x128xf32>
    %230 = arith.addf %229, %228 : vector<8x128xf32>
    %231 = arith.divf %229, %230 : vector<8x128xf32>
    %232 = arith.mulf %223, %186 : vector<8x128xf32>
    %233 = arith.mulf %217, %225 : vector<8x128xf32>
    %234 = arith.addf %232, %233 : vector<8x128xf32>
    %235 = math.tanh %234 : vector<8x128xf32>
    %236 = arith.mulf %231, %235 : vector<8x128xf32>
    %237 = vector.extract_strided_slice %205 {offsets = [0, 0], sizes = [8, 128], strides = [1, 1]} : vector<8x512xf32> to vector<8x128xf32>
    %238 = arith.negf %237 : vector<8x128xf32>
    %239 = math.exp %238 : vector<8x128xf32>
    %cst_70 = arith.constant 1.000000e+00 : f32
    %240 = vector.broadcast %cst_70 : f32 to vector<8x128xf32>
    %241 = arith.addf %240, %239 : vector<8x128xf32>
    %242 = arith.divf %240, %241 : vector<8x128xf32>
    %243 = vector.extract_strided_slice %205 {offsets = [0, 128], sizes = [8, 128], strides = [1, 1]} : vector<8x512xf32> to vector<8x128xf32>
    %244 = arith.negf %243 : vector<8x128xf32>
    %245 = math.exp %244 : vector<8x128xf32>
    %cst_71 = arith.constant 1.000000e+00 : f32
    %246 = vector.broadcast %cst_71 : f32 to vector<8x128xf32>
    %247 = arith.addf %246, %245 : vector<8x128xf32>
    %248 = arith.divf %246, %247 : vector<8x128xf32>
    %249 = vector.extract_strided_slice %205 {offsets = [0, 256], sizes = [8, 128], strides = [1, 1]} : vector<8x512xf32> to vector<8x128xf32>
    %250 = math.tanh %249 : vector<8x128xf32>
    %251 = vector.extract_strided_slice %205 {offsets = [0, 384], sizes = [8, 128], strides = [1, 1]} : vector<8x512xf32> to vector<8x128xf32>
    %252 = arith.negf %251 : vector<8x128xf32>
    %253 = math.exp %252 : vector<8x128xf32>
    %cst_72 = arith.constant 1.000000e+00 : f32
    %254 = vector.broadcast %cst_72 : f32 to vector<8x128xf32>
    %255 = arith.addf %254, %253 : vector<8x128xf32>
    %256 = arith.divf %254, %255 : vector<8x128xf32>
    %257 = arith.mulf %248, %194 : vector<8x128xf32>
    %258 = arith.mulf %242, %250 : vector<8x128xf32>
    %259 = arith.addf %257, %258 : vector<8x128xf32>
    %260 = math.tanh %259 : vector<8x128xf32>
    %261 = arith.mulf %256, %260 : vector<8x128xf32>
    %262 = vector.broadcast %208 : vector<8x1xf32> to vector<8x128xf32>
    %263 = arith.mulf %236, %262 : vector<8x128xf32>
    %264 = arith.index_cast %c2_i32 : i32 to index
    %c0_73 = arith.constant 0 : index
    %c0_74 = arith.constant 0 : index
    %265 = vector.load %arg4[%264, %c0_73, %c0_74] : memref<8x8x256xf32, #tpu.memory_space<vmem>>, vector<1x8x128xf32>
    %266 = vector.shape_cast %265 : vector<1x8x128xf32> to vector<8x128xf32>
    %267 = vector.shape_cast %263 : vector<8x128xf32> to vector<1x8x128xf32>
    tpu.vector_store %arg4[%264, %c0_73, %c0_74], %267 {strides = array<i32>} : memref<8x8x256xf32, #tpu.memory_space<vmem>>, vector<1x8x128xf32>,
    %268 = vector.broadcast %211 : vector<8x1xf32> to vector<8x128xf32>
    %269 = arith.mulf %261, %268 : vector<8x128xf32>
    %270 = arith.index_cast %195 : i32 to index
    %c0_75 = arith.constant 0 : index
    %c128_76 = arith.constant 128 : index
    %271 = vector.load %arg4[%270, %c0_75, %c128_76] : memref<8x8x256xf32, #tpu.memory_space<vmem>>, vector<1x8x128xf32>
    %272 = vector.shape_cast %271 : vector<1x8x128xf32> to vector<8x128xf32>
    %273 = vector.shape_cast %269 : vector<8x128xf32> to vector<1x8x128xf32>
    tpu.vector_store %arg4[%270, %c0_75, %c128_76], %273 {strides = array<i32>} : memref<8x8x256xf32, #tpu.memory_space<vmem>>, vector<1x8x128xf32>,
    %274 = arith.subf %236, %182 : vector<8x128xf32>
    %275 = vector.broadcast %208 : vector<8x1xf32> to vector<8x128xf32>
    %276 = arith.mulf %275, %274 : vector<8x128xf32>
    %277 = arith.addf %182, %276 : vector<8x128xf32>
    %278 = arith.subf %234, %186 : vector<8x128xf32>
    %279 = vector.broadcast %208 : vector<8x1xf32> to vector<8x128xf32>
    %280 = arith.mulf %279, %278 : vector<8x128xf32>
    %281 = arith.addf %186, %280 : vector<8x128xf32>
    %282 = arith.subf %261, %190 : vector<8x128xf32>
    %283 = vector.broadcast %211 : vector<8x1xf32> to vector<8x128xf32>
    %284 = arith.mulf %283, %282 : vector<8x128xf32>
    %285 = arith.addf %190, %284 : vector<8x128xf32>
    %286 = arith.subf %259, %194 : vector<8x128xf32>
    %287 = vector.broadcast %211 : vector<8x1xf32> to vector<8x128xf32>
    %288 = arith.mulf %287, %286 : vector<8x128xf32>
    %289 = arith.addf %194, %288 : vector<8x128xf32>
    %c3_i32 = arith.constant 3 : i32
    %c7_i32_77 = arith.constant 7 : i32
    %290 = arith.subi %c7_i32_77, %c3_i32 : i32
    %c0_78 = arith.constant 0 : index
    %291 = arith.index_cast %c3_i32 : i32 to index
    %c0_79 = arith.constant 0 : index
    %c0_80 = arith.constant 0 : index
    %292 = vector.load %arg1[%c0_78, %291, %c0_79, %c0_80] : memref<2x8x8x512xf32, #tpu.memory_space<vmem>>, vector<1x1x8x512xf32>
    %293 = vector.shape_cast %292 : vector<1x1x8x512xf32> to vector<8x512xf32>
    %cst_81 = arith.constant dense<0.000000e+00> : vector<8x512xf32>
    %294 = tpu.matmul %277, %1, %cst_81 {dimension_numbers = #tpu.dot_dimension_numbers<[1], [0], [0], [1], [0, 0, 1, 1], [], []>} : vector<8x128xf32>, vector<128x512xf32>, vector<8x512xf32> -> vector<8x512xf32>
    %295 = arith.addf %293, %294 : vector<8x512xf32>
    %c1_82 = arith.constant 1 : index
    %296 = arith.index_cast %c3_i32 : i32 to index
    %c0_83 = arith.constant 0 : index
    %c0_84 = arith.constant 0 : index
    %297 = vector.load %arg1[%c1_82, %296, %c0_83, %c0_84] : memref<2x8x8x512xf32, #tpu.memory_space<vmem>>, vector<1x1x8x512xf32>
    %298 = vector.shape_cast %297 : vector<1x1x8x512xf32> to vector<8x512xf32>
    %cst_85 = arith.constant dense<0.000000e+00> : vector<8x512xf32>
    %299 = tpu.matmul %285, %3, %cst_85 {dimension_numbers = #tpu.dot_dimension_numbers<[1], [0], [0], [1], [0, 0, 1, 1], [], []>} : vector<8x128xf32>, vector<128x512xf32>, vector<8x512xf32> -> vector<8x512xf32>
    %300 = arith.addf %298, %299 : vector<8x512xf32>
    %c0_86 = arith.constant 0 : index
    %301 = arith.index_cast %c3_i32 : i32 to index
    %c0_87 = arith.constant 0 : index
    %c0_88 = arith.constant 0 : index
    %302 = vector.load %arg3[%c0_86, %301, %c0_87, %c0_88] : memref<2x8x8x1xf32, #tpu.memory_space<vmem>>, vector<1x1x8x1xf32>
    %303 = vector.shape_cast %302 : vector<1x1x8x1xf32> to vector<8x1xf32>
    %c1_89 = arith.constant 1 : index
    %304 = arith.index_cast %c3_i32 : i32 to index
    %c0_90 = arith.constant 0 : index
    %c0_91 = arith.constant 0 : index
    %305 = vector.load %arg3[%c1_89, %304, %c0_90, %c0_91] : memref<2x8x8x1xf32, #tpu.memory_space<vmem>>, vector<1x1x8x1xf32>
    %306 = vector.shape_cast %305 : vector<1x1x8x1xf32> to vector<8x1xf32>
    %307 = vector.extract_strided_slice %295 {offsets = [0, 0], sizes = [8, 128], strides = [1, 1]} : vector<8x512xf32> to vector<8x128xf32>
    %308 = arith.negf %307 : vector<8x128xf32>
    %309 = math.exp %308 : vector<8x128xf32>
    %cst_92 = arith.constant 1.000000e+00 : f32
    %310 = vector.broadcast %cst_92 : f32 to vector<8x128xf32>
    %311 = arith.addf %310, %309 : vector<8x128xf32>
    %312 = arith.divf %310, %311 : vector<8x128xf32>
    %313 = vector.extract_strided_slice %295 {offsets = [0, 128], sizes = [8, 128], strides = [1, 1]} : vector<8x512xf32> to vector<8x128xf32>
    %314 = arith.negf %313 : vector<8x128xf32>
    %315 = math.exp %314 : vector<8x128xf32>
    %cst_93 = arith.constant 1.000000e+00 : f32
    %316 = vector.broadcast %cst_93 : f32 to vector<8x128xf32>
    %317 = arith.addf %316, %315 : vector<8x128xf32>
    %318 = arith.divf %316, %317 : vector<8x128xf32>
    %319 = vector.extract_strided_slice %295 {offsets = [0, 256], sizes = [8, 128], strides = [1, 1]} : vector<8x512xf32> to vector<8x128xf32>
    %320 = math.tanh %319 : vector<8x128xf32>
    %321 = vector.extract_strided_slice %295 {offsets = [0, 384], sizes = [8, 128], strides = [1, 1]} : vector<8x512xf32> to vector<8x128xf32>
    %322 = arith.negf %321 : vector<8x128xf32>
    %323 = math.exp %322 : vector<8x128xf32>
    %cst_94 = arith.constant 1.000000e+00 : f32
    %324 = vector.broadcast %cst_94 : f32 to vector<8x128xf32>
    %325 = arith.addf %324, %323 : vector<8x128xf32>
    %326 = arith.divf %324, %325 : vector<8x128xf32>
    %327 = arith.mulf %318, %281 : vector<8x128xf32>
    %328 = arith.mulf %312, %320 : vector<8x128xf32>
    %329 = arith.addf %327, %328 : vector<8x128xf32>
    %330 = math.tanh %329 : vector<8x128xf32>
    %331 = arith.mulf %326, %330 : vector<8x128xf32>
    %332 = vector.extract_strided_slice %300 {offsets = [0, 0], sizes = [8, 128], strides = [1, 1]} : vector<8x512xf32> to vector<8x128xf32>
    %333 = arith.negf %332 : vector<8x128xf32>
    %334 = math.exp %333 : vector<8x128xf32>
    %cst_95 = arith.constant 1.000000e+00 : f32
    %335 = vector.broadcast %cst_95 : f32 to vector<8x128xf32>
    %336 = arith.addf %335, %334 : vector<8x128xf32>
    %337 = arith.divf %335, %336 : vector<8x128xf32>
    %338 = vector.extract_strided_slice %300 {offsets = [0, 128], sizes = [8, 128], strides = [1, 1]} : vector<8x512xf32> to vector<8x128xf32>
    %339 = arith.negf %338 : vector<8x128xf32>
    %340 = math.exp %339 : vector<8x128xf32>
    %cst_96 = arith.constant 1.000000e+00 : f32
    %341 = vector.broadcast %cst_96 : f32 to vector<8x128xf32>
    %342 = arith.addf %341, %340 : vector<8x128xf32>
    %343 = arith.divf %341, %342 : vector<8x128xf32>
    %344 = vector.extract_strided_slice %300 {offsets = [0, 256], sizes = [8, 128], strides = [1, 1]} : vector<8x512xf32> to vector<8x128xf32>
    %345 = math.tanh %344 : vector<8x128xf32>
    %346 = vector.extract_strided_slice %300 {offsets = [0, 384], sizes = [8, 128], strides = [1, 1]} : vector<8x512xf32> to vector<8x128xf32>
    %347 = arith.negf %346 : vector<8x128xf32>
    %348 = math.exp %347 : vector<8x128xf32>
    %cst_97 = arith.constant 1.000000e+00 : f32
    %349 = vector.broadcast %cst_97 : f32 to vector<8x128xf32>
    %350 = arith.addf %349, %348 : vector<8x128xf32>
    %351 = arith.divf %349, %350 : vector<8x128xf32>
    %352 = arith.mulf %343, %289 : vector<8x128xf32>
    %353 = arith.mulf %337, %345 : vector<8x128xf32>
    %354 = arith.addf %352, %353 : vector<8x128xf32>
    %355 = math.tanh %354 : vector<8x128xf32>
    %356 = arith.mulf %351, %355 : vector<8x128xf32>
    %357 = vector.broadcast %303 : vector<8x1xf32> to vector<8x128xf32>
    %358 = arith.mulf %331, %357 : vector<8x128xf32>
    %359 = arith.index_cast %c3_i32 : i32 to index
    %c0_98 = arith.constant 0 : index
    %c0_99 = arith.constant 0 : index
    %360 = vector.load %arg4[%359, %c0_98, %c0_99] : memref<8x8x256xf32, #tpu.memory_space<vmem>>, vector<1x8x128xf32>
    %361 = vector.shape_cast %360 : vector<1x8x128xf32> to vector<8x128xf32>
    %362 = vector.shape_cast %358 : vector<8x128xf32> to vector<1x8x128xf32>
    tpu.vector_store %arg4[%359, %c0_98, %c0_99], %362 {strides = array<i32>} : memref<8x8x256xf32, #tpu.memory_space<vmem>>, vector<1x8x128xf32>,
    %363 = vector.broadcast %306 : vector<8x1xf32> to vector<8x128xf32>
    %364 = arith.mulf %356, %363 : vector<8x128xf32>
    %365 = arith.index_cast %290 : i32 to index
    %c0_100 = arith.constant 0 : index
    %c128_101 = arith.constant 128 : index
    %366 = vector.load %arg4[%365, %c0_100, %c128_101] : memref<8x8x256xf32, #tpu.memory_space<vmem>>, vector<1x8x128xf32>
    %367 = vector.shape_cast %366 : vector<1x8x128xf32> to vector<8x128xf32>
    %368 = vector.shape_cast %364 : vector<8x128xf32> to vector<1x8x128xf32>
    tpu.vector_store %arg4[%365, %c0_100, %c128_101], %368 {strides = array<i32>} : memref<8x8x256xf32, #tpu.memory_space<vmem>>, vector<1x8x128xf32>,
    %369 = arith.subf %331, %277 : vector<8x128xf32>
    %370 = vector.broadcast %303 : vector<8x1xf32> to vector<8x128xf32>
    %371 = arith.mulf %370, %369 : vector<8x128xf32>
    %372 = arith.addf %277, %371 : vector<8x128xf32>
    %373 = arith.subf %329, %281 : vector<8x128xf32>
    %374 = vector.broadcast %303 : vector<8x1xf32> to vector<8x128xf32>
    %375 = arith.mulf %374, %373 : vector<8x128xf32>
    %376 = arith.addf %281, %375 : vector<8x128xf32>
    %377 = arith.subf %356, %285 : vector<8x128xf32>
    %378 = vector.broadcast %306 : vector<8x1xf32> to vector<8x128xf32>
    %379 = arith.mulf %378, %377 : vector<8x128xf32>
    %380 = arith.addf %285, %379 : vector<8x128xf32>
    %381 = arith.subf %354, %289 : vector<8x128xf32>
    %382 = vector.broadcast %306 : vector<8x1xf32> to vector<8x128xf32>
    %383 = arith.mulf %382, %381 : vector<8x128xf32>
    %384 = arith.addf %289, %383 : vector<8x128xf32>
    %c4_i32 = arith.constant 4 : i32
    %c7_i32_102 = arith.constant 7 : i32
    %385 = arith.subi %c7_i32_102, %c4_i32 : i32
    %c0_103 = arith.constant 0 : index
    %386 = arith.index_cast %c4_i32 : i32 to index
    %c0_104 = arith.constant 0 : index
    %c0_105 = arith.constant 0 : index
    %387 = vector.load %arg1[%c0_103, %386, %c0_104, %c0_105] : memref<2x8x8x512xf32, #tpu.memory_space<vmem>>, vector<1x1x8x512xf32>
    %388 = vector.shape_cast %387 : vector<1x1x8x512xf32> to vector<8x512xf32>
    %cst_106 = arith.constant dense<0.000000e+00> : vector<8x512xf32>
    %389 = tpu.matmul %372, %1, %cst_106 {dimension_numbers = #tpu.dot_dimension_numbers<[1], [0], [0], [1], [0, 0, 1, 1], [], []>} : vector<8x128xf32>, vector<128x512xf32>, vector<8x512xf32> -> vector<8x512xf32>
    %390 = arith.addf %388, %389 : vector<8x512xf32>
    %c1_107 = arith.constant 1 : index
    %391 = arith.index_cast %c4_i32 : i32 to index
    %c0_108 = arith.constant 0 : index
    %c0_109 = arith.constant 0 : index
    %392 = vector.load %arg1[%c1_107, %391, %c0_108, %c0_109] : memref<2x8x8x512xf32, #tpu.memory_space<vmem>>, vector<1x1x8x512xf32>
    %393 = vector.shape_cast %392 : vector<1x1x8x512xf32> to vector<8x512xf32>
    %cst_110 = arith.constant dense<0.000000e+00> : vector<8x512xf32>
    %394 = tpu.matmul %380, %3, %cst_110 {dimension_numbers = #tpu.dot_dimension_numbers<[1], [0], [0], [1], [0, 0, 1, 1], [], []>} : vector<8x128xf32>, vector<128x512xf32>, vector<8x512xf32> -> vector<8x512xf32>
    %395 = arith.addf %393, %394 : vector<8x512xf32>
    %c0_111 = arith.constant 0 : index
    %396 = arith.index_cast %c4_i32 : i32 to index
    %c0_112 = arith.constant 0 : index
    %c0_113 = arith.constant 0 : index
    %397 = vector.load %arg3[%c0_111, %396, %c0_112, %c0_113] : memref<2x8x8x1xf32, #tpu.memory_space<vmem>>, vector<1x1x8x1xf32>
    %398 = vector.shape_cast %397 : vector<1x1x8x1xf32> to vector<8x1xf32>
    %c1_114 = arith.constant 1 : index
    %399 = arith.index_cast %c4_i32 : i32 to index
    %c0_115 = arith.constant 0 : index
    %c0_116 = arith.constant 0 : index
    %400 = vector.load %arg3[%c1_114, %399, %c0_115, %c0_116] : memref<2x8x8x1xf32, #tpu.memory_space<vmem>>, vector<1x1x8x1xf32>
    %401 = vector.shape_cast %400 : vector<1x1x8x1xf32> to vector<8x1xf32>
    %402 = vector.extract_strided_slice %390 {offsets = [0, 0], sizes = [8, 128], strides = [1, 1]} : vector<8x512xf32> to vector<8x128xf32>
    %403 = arith.negf %402 : vector<8x128xf32>
    %404 = math.exp %403 : vector<8x128xf32>
    %cst_117 = arith.constant 1.000000e+00 : f32
    %405 = vector.broadcast %cst_117 : f32 to vector<8x128xf32>
    %406 = arith.addf %405, %404 : vector<8x128xf32>
    %407 = arith.divf %405, %406 : vector<8x128xf32>
    %408 = vector.extract_strided_slice %390 {offsets = [0, 128], sizes = [8, 128], strides = [1, 1]} : vector<8x512xf32> to vector<8x128xf32>
    %409 = arith.negf %408 : vector<8x128xf32>
    %410 = math.exp %409 : vector<8x128xf32>
    %cst_118 = arith.constant 1.000000e+00 : f32
    %411 = vector.broadcast %cst_118 : f32 to vector<8x128xf32>
    %412 = arith.addf %411, %410 : vector<8x128xf32>
    %413 = arith.divf %411, %412 : vector<8x128xf32>
    %414 = vector.extract_strided_slice %390 {offsets = [0, 256], sizes = [8, 128], strides = [1, 1]} : vector<8x512xf32> to vector<8x128xf32>
    %415 = math.tanh %414 : vector<8x128xf32>
    %416 = vector.extract_strided_slice %390 {offsets = [0, 384], sizes = [8, 128], strides = [1, 1]} : vector<8x512xf32> to vector<8x128xf32>
    %417 = arith.negf %416 : vector<8x128xf32>
    %418 = math.exp %417 : vector<8x128xf32>
    %cst_119 = arith.constant 1.000000e+00 : f32
    %419 = vector.broadcast %cst_119 : f32 to vector<8x128xf32>
    %420 = arith.addf %419, %418 : vector<8x128xf32>
    %421 = arith.divf %419, %420 : vector<8x128xf32>
    %422 = arith.mulf %413, %376 : vector<8x128xf32>
    %423 = arith.mulf %407, %415 : vector<8x128xf32>
    %424 = arith.addf %422, %423 : vector<8x128xf32>
    %425 = math.tanh %424 : vector<8x128xf32>
    %426 = arith.mulf %421, %425 : vector<8x128xf32>
    %427 = vector.extract_strided_slice %395 {offsets = [0, 0], sizes = [8, 128], strides = [1, 1]} : vector<8x512xf32> to vector<8x128xf32>
    %428 = arith.negf %427 : vector<8x128xf32>
    %429 = math.exp %428 : vector<8x128xf32>
    %cst_120 = arith.constant 1.000000e+00 : f32
    %430 = vector.broadcast %cst_120 : f32 to vector<8x128xf32>
    %431 = arith.addf %430, %429 : vector<8x128xf32>
    %432 = arith.divf %430, %431 : vector<8x128xf32>
    %433 = vector.extract_strided_slice %395 {offsets = [0, 128], sizes = [8, 128], strides = [1, 1]} : vector<8x512xf32> to vector<8x128xf32>
    %434 = arith.negf %433 : vector<8x128xf32>
    %435 = math.exp %434 : vector<8x128xf32>
    %cst_121 = arith.constant 1.000000e+00 : f32
    %436 = vector.broadcast %cst_121 : f32 to vector<8x128xf32>
    %437 = arith.addf %436, %435 : vector<8x128xf32>
    %438 = arith.divf %436, %437 : vector<8x128xf32>
    %439 = vector.extract_strided_slice %395 {offsets = [0, 256], sizes = [8, 128], strides = [1, 1]} : vector<8x512xf32> to vector<8x128xf32>
    %440 = math.tanh %439 : vector<8x128xf32>
    %441 = vector.extract_strided_slice %395 {offsets = [0, 384], sizes = [8, 128], strides = [1, 1]} : vector<8x512xf32> to vector<8x128xf32>
    %442 = arith.negf %441 : vector<8x128xf32>
    %443 = math.exp %442 : vector<8x128xf32>
    %cst_122 = arith.constant 1.000000e+00 : f32
    %444 = vector.broadcast %cst_122 : f32 to vector<8x128xf32>
    %445 = arith.addf %444, %443 : vector<8x128xf32>
    %446 = arith.divf %444, %445 : vector<8x128xf32>
    %447 = arith.mulf %438, %384 : vector<8x128xf32>
    %448 = arith.mulf %432, %440 : vector<8x128xf32>
    %449 = arith.addf %447, %448 : vector<8x128xf32>
    %450 = math.tanh %449 : vector<8x128xf32>
    %451 = arith.mulf %446, %450 : vector<8x128xf32>
    %452 = vector.broadcast %398 : vector<8x1xf32> to vector<8x128xf32>
    %453 = arith.mulf %426, %452 : vector<8x128xf32>
    %454 = arith.index_cast %c4_i32 : i32 to index
    %c0_123 = arith.constant 0 : index
    %c0_124 = arith.constant 0 : index
    %455 = vector.load %arg4[%454, %c0_123, %c0_124] : memref<8x8x256xf32, #tpu.memory_space<vmem>>, vector<1x8x128xf32>
    %456 = vector.shape_cast %455 : vector<1x8x128xf32> to vector<8x128xf32>
    %457 = vector.shape_cast %453 : vector<8x128xf32> to vector<1x8x128xf32>
    tpu.vector_store %arg4[%454, %c0_123, %c0_124], %457 {strides = array<i32>} : memref<8x8x256xf32, #tpu.memory_space<vmem>>, vector<1x8x128xf32>,
    %458 = vector.broadcast %401 : vector<8x1xf32> to vector<8x128xf32>
    %459 = arith.mulf %451, %458 : vector<8x128xf32>
    %460 = arith.index_cast %385 : i32 to index
    %c0_125 = arith.constant 0 : index
    %c128_126 = arith.constant 128 : index
    %461 = vector.load %arg4[%460, %c0_125, %c128_126] : memref<8x8x256xf32, #tpu.memory_space<vmem>>, vector<1x8x128xf32>
    %462 = vector.shape_cast %461 : vector<1x8x128xf32> to vector<8x128xf32>
    %463 = vector.shape_cast %459 : vector<8x128xf32> to vector<1x8x128xf32>
    tpu.vector_store %arg4[%460, %c0_125, %c128_126], %463 {strides = array<i32>} : memref<8x8x256xf32, #tpu.memory_space<vmem>>, vector<1x8x128xf32>,
    %464 = arith.subf %426, %372 : vector<8x128xf32>
    %465 = vector.broadcast %398 : vector<8x1xf32> to vector<8x128xf32>
    %466 = arith.mulf %465, %464 : vector<8x128xf32>
    %467 = arith.addf %372, %466 : vector<8x128xf32>
    %468 = arith.subf %424, %376 : vector<8x128xf32>
    %469 = vector.broadcast %398 : vector<8x1xf32> to vector<8x128xf32>
    %470 = arith.mulf %469, %468 : vector<8x128xf32>
    %471 = arith.addf %376, %470 : vector<8x128xf32>
    %472 = arith.subf %451, %380 : vector<8x128xf32>
    %473 = vector.broadcast %401 : vector<8x1xf32> to vector<8x128xf32>
    %474 = arith.mulf %473, %472 : vector<8x128xf32>
    %475 = arith.addf %380, %474 : vector<8x128xf32>
    %476 = arith.subf %449, %384 : vector<8x128xf32>
    %477 = vector.broadcast %401 : vector<8x1xf32> to vector<8x128xf32>
    %478 = arith.mulf %477, %476 : vector<8x128xf32>
    %479 = arith.addf %384, %478 : vector<8x128xf32>
    %c5_i32 = arith.constant 5 : i32
    %c7_i32_127 = arith.constant 7 : i32
    %480 = arith.subi %c7_i32_127, %c5_i32 : i32
    %c0_128 = arith.constant 0 : index
    %481 = arith.index_cast %c5_i32 : i32 to index
    %c0_129 = arith.constant 0 : index
    %c0_130 = arith.constant 0 : index
    %482 = vector.load %arg1[%c0_128, %481, %c0_129, %c0_130] : memref<2x8x8x512xf32, #tpu.memory_space<vmem>>, vector<1x1x8x512xf32>
    %483 = vector.shape_cast %482 : vector<1x1x8x512xf32> to vector<8x512xf32>
    %cst_131 = arith.constant dense<0.000000e+00> : vector<8x512xf32>
    %484 = tpu.matmul %467, %1, %cst_131 {dimension_numbers = #tpu.dot_dimension_numbers<[1], [0], [0], [1], [0, 0, 1, 1], [], []>} : vector<8x128xf32>, vector<128x512xf32>, vector<8x512xf32> -> vector<8x512xf32>
    %485 = arith.addf %483, %484 : vector<8x512xf32>
    %c1_132 = arith.constant 1 : index
    %486 = arith.index_cast %c5_i32 : i32 to index
    %c0_133 = arith.constant 0 : index
    %c0_134 = arith.constant 0 : index
    %487 = vector.load %arg1[%c1_132, %486, %c0_133, %c0_134] : memref<2x8x8x512xf32, #tpu.memory_space<vmem>>, vector<1x1x8x512xf32>
    %488 = vector.shape_cast %487 : vector<1x1x8x512xf32> to vector<8x512xf32>
    %cst_135 = arith.constant dense<0.000000e+00> : vector<8x512xf32>
    %489 = tpu.matmul %475, %3, %cst_135 {dimension_numbers = #tpu.dot_dimension_numbers<[1], [0], [0], [1], [0, 0, 1, 1], [], []>} : vector<8x128xf32>, vector<128x512xf32>, vector<8x512xf32> -> vector<8x512xf32>
    %490 = arith.addf %488, %489 : vector<8x512xf32>
    %c0_136 = arith.constant 0 : index
    %491 = arith.index_cast %c5_i32 : i32 to index
    %c0_137 = arith.constant 0 : index
    %c0_138 = arith.constant 0 : index
    %492 = vector.load %arg3[%c0_136, %491, %c0_137, %c0_138] : memref<2x8x8x1xf32, #tpu.memory_space<vmem>>, vector<1x1x8x1xf32>
    %493 = vector.shape_cast %492 : vector<1x1x8x1xf32> to vector<8x1xf32>
    %c1_139 = arith.constant 1 : index
    %494 = arith.index_cast %c5_i32 : i32 to index
    %c0_140 = arith.constant 0 : index
    %c0_141 = arith.constant 0 : index
    %495 = vector.load %arg3[%c1_139, %494, %c0_140, %c0_141] : memref<2x8x8x1xf32, #tpu.memory_space<vmem>>, vector<1x1x8x1xf32>
    %496 = vector.shape_cast %495 : vector<1x1x8x1xf32> to vector<8x1xf32>
    %497 = vector.extract_strided_slice %485 {offsets = [0, 0], sizes = [8, 128], strides = [1, 1]} : vector<8x512xf32> to vector<8x128xf32>
    %498 = arith.negf %497 : vector<8x128xf32>
    %499 = math.exp %498 : vector<8x128xf32>
    %cst_142 = arith.constant 1.000000e+00 : f32
    %500 = vector.broadcast %cst_142 : f32 to vector<8x128xf32>
    %501 = arith.addf %500, %499 : vector<8x128xf32>
    %502 = arith.divf %500, %501 : vector<8x128xf32>
    %503 = vector.extract_strided_slice %485 {offsets = [0, 128], sizes = [8, 128], strides = [1, 1]} : vector<8x512xf32> to vector<8x128xf32>
    %504 = arith.negf %503 : vector<8x128xf32>
    %505 = math.exp %504 : vector<8x128xf32>
    %cst_143 = arith.constant 1.000000e+00 : f32
    %506 = vector.broadcast %cst_143 : f32 to vector<8x128xf32>
    %507 = arith.addf %506, %505 : vector<8x128xf32>
    %508 = arith.divf %506, %507 : vector<8x128xf32>
    %509 = vector.extract_strided_slice %485 {offsets = [0, 256], sizes = [8, 128], strides = [1, 1]} : vector<8x512xf32> to vector<8x128xf32>
    %510 = math.tanh %509 : vector<8x128xf32>
    %511 = vector.extract_strided_slice %485 {offsets = [0, 384], sizes = [8, 128], strides = [1, 1]} : vector<8x512xf32> to vector<8x128xf32>
    %512 = arith.negf %511 : vector<8x128xf32>
    %513 = math.exp %512 : vector<8x128xf32>
    %cst_144 = arith.constant 1.000000e+00 : f32
    %514 = vector.broadcast %cst_144 : f32 to vector<8x128xf32>
    %515 = arith.addf %514, %513 : vector<8x128xf32>
    %516 = arith.divf %514, %515 : vector<8x128xf32>
    %517 = arith.mulf %508, %471 : vector<8x128xf32>
    %518 = arith.mulf %502, %510 : vector<8x128xf32>
    %519 = arith.addf %517, %518 : vector<8x128xf32>
    %520 = math.tanh %519 : vector<8x128xf32>
    %521 = arith.mulf %516, %520 : vector<8x128xf32>
    %522 = vector.extract_strided_slice %490 {offsets = [0, 0], sizes = [8, 128], strides = [1, 1]} : vector<8x512xf32> to vector<8x128xf32>
    %523 = arith.negf %522 : vector<8x128xf32>
    %524 = math.exp %523 : vector<8x128xf32>
    %cst_145 = arith.constant 1.000000e+00 : f32
    %525 = vector.broadcast %cst_145 : f32 to vector<8x128xf32>
    %526 = arith.addf %525, %524 : vector<8x128xf32>
    %527 = arith.divf %525, %526 : vector<8x128xf32>
    %528 = vector.extract_strided_slice %490 {offsets = [0, 128], sizes = [8, 128], strides = [1, 1]} : vector<8x512xf32> to vector<8x128xf32>
    %529 = arith.negf %528 : vector<8x128xf32>
    %530 = math.exp %529 : vector<8x128xf32>
    %cst_146 = arith.constant 1.000000e+00 : f32
    %531 = vector.broadcast %cst_146 : f32 to vector<8x128xf32>
    %532 = arith.addf %531, %530 : vector<8x128xf32>
    %533 = arith.divf %531, %532 : vector<8x128xf32>
    %534 = vector.extract_strided_slice %490 {offsets = [0, 256], sizes = [8, 128], strides = [1, 1]} : vector<8x512xf32> to vector<8x128xf32>
    %535 = math.tanh %534 : vector<8x128xf32>
    %536 = vector.extract_strided_slice %490 {offsets = [0, 384], sizes = [8, 128], strides = [1, 1]} : vector<8x512xf32> to vector<8x128xf32>
    %537 = arith.negf %536 : vector<8x128xf32>
    %538 = math.exp %537 : vector<8x128xf32>
    %cst_147 = arith.constant 1.000000e+00 : f32
    %539 = vector.broadcast %cst_147 : f32 to vector<8x128xf32>
    %540 = arith.addf %539, %538 : vector<8x128xf32>
    %541 = arith.divf %539, %540 : vector<8x128xf32>
    %542 = arith.mulf %533, %479 : vector<8x128xf32>
    %543 = arith.mulf %527, %535 : vector<8x128xf32>
    %544 = arith.addf %542, %543 : vector<8x128xf32>
    %545 = math.tanh %544 : vector<8x128xf32>
    %546 = arith.mulf %541, %545 : vector<8x128xf32>
    %547 = vector.broadcast %493 : vector<8x1xf32> to vector<8x128xf32>
    %548 = arith.mulf %521, %547 : vector<8x128xf32>
    %549 = arith.index_cast %c5_i32 : i32 to index
    %c0_148 = arith.constant 0 : index
    %c0_149 = arith.constant 0 : index
    %550 = vector.load %arg4[%549, %c0_148, %c0_149] : memref<8x8x256xf32, #tpu.memory_space<vmem>>, vector<1x8x128xf32>
    %551 = vector.shape_cast %550 : vector<1x8x128xf32> to vector<8x128xf32>
    %552 = vector.shape_cast %548 : vector<8x128xf32> to vector<1x8x128xf32>
    tpu.vector_store %arg4[%549, %c0_148, %c0_149], %552 {strides = array<i32>} : memref<8x8x256xf32, #tpu.memory_space<vmem>>, vector<1x8x128xf32>,
    %553 = vector.broadcast %496 : vector<8x1xf32> to vector<8x128xf32>
    %554 = arith.mulf %546, %553 : vector<8x128xf32>
    %555 = arith.index_cast %480 : i32 to index
    %c0_150 = arith.constant 0 : index
    %c128_151 = arith.constant 128 : index
    %556 = vector.load %arg4[%555, %c0_150, %c128_151] : memref<8x8x256xf32, #tpu.memory_space<vmem>>, vector<1x8x128xf32>
    %557 = vector.shape_cast %556 : vector<1x8x128xf32> to vector<8x128xf32>
    %558 = vector.shape_cast %554 : vector<8x128xf32> to vector<1x8x128xf32>
    tpu.vector_store %arg4[%555, %c0_150, %c128_151], %558 {strides = array<i32>} : memref<8x8x256xf32, #tpu.memory_space<vmem>>, vector<1x8x128xf32>,
    %559 = arith.subf %521, %467 : vector<8x128xf32>
    %560 = vector.broadcast %493 : vector<8x1xf32> to vector<8x128xf32>
    %561 = arith.mulf %560, %559 : vector<8x128xf32>
    %562 = arith.addf %467, %561 : vector<8x128xf32>
    %563 = arith.subf %519, %471 : vector<8x128xf32>
    %564 = vector.broadcast %493 : vector<8x1xf32> to vector<8x128xf32>
    %565 = arith.mulf %564, %563 : vector<8x128xf32>
    %566 = arith.addf %471, %565 : vector<8x128xf32>
    %567 = arith.subf %546, %475 : vector<8x128xf32>
    %568 = vector.broadcast %496 : vector<8x1xf32> to vector<8x128xf32>
    %569 = arith.mulf %568, %567 : vector<8x128xf32>
    %570 = arith.addf %475, %569 : vector<8x128xf32>
    %571 = arith.subf %544, %479 : vector<8x128xf32>
    %572 = vector.broadcast %496 : vector<8x1xf32> to vector<8x128xf32>
    %573 = arith.mulf %572, %571 : vector<8x128xf32>
    %574 = arith.addf %479, %573 : vector<8x128xf32>
    %c6_i32 = arith.constant 6 : i32
    %c7_i32_152 = arith.constant 7 : i32
    %575 = arith.subi %c7_i32_152, %c6_i32 : i32
    %c0_153 = arith.constant 0 : index
    %576 = arith.index_cast %c6_i32 : i32 to index
    %c0_154 = arith.constant 0 : index
    %c0_155 = arith.constant 0 : index
    %577 = vector.load %arg1[%c0_153, %576, %c0_154, %c0_155] : memref<2x8x8x512xf32, #tpu.memory_space<vmem>>, vector<1x1x8x512xf32>
    %578 = vector.shape_cast %577 : vector<1x1x8x512xf32> to vector<8x512xf32>
    %cst_156 = arith.constant dense<0.000000e+00> : vector<8x512xf32>
    %579 = tpu.matmul %562, %1, %cst_156 {dimension_numbers = #tpu.dot_dimension_numbers<[1], [0], [0], [1], [0, 0, 1, 1], [], []>} : vector<8x128xf32>, vector<128x512xf32>, vector<8x512xf32> -> vector<8x512xf32>
    %580 = arith.addf %578, %579 : vector<8x512xf32>
    %c1_157 = arith.constant 1 : index
    %581 = arith.index_cast %c6_i32 : i32 to index
    %c0_158 = arith.constant 0 : index
    %c0_159 = arith.constant 0 : index
    %582 = vector.load %arg1[%c1_157, %581, %c0_158, %c0_159] : memref<2x8x8x512xf32, #tpu.memory_space<vmem>>, vector<1x1x8x512xf32>
    %583 = vector.shape_cast %582 : vector<1x1x8x512xf32> to vector<8x512xf32>
    %cst_160 = arith.constant dense<0.000000e+00> : vector<8x512xf32>
    %584 = tpu.matmul %570, %3, %cst_160 {dimension_numbers = #tpu.dot_dimension_numbers<[1], [0], [0], [1], [0, 0, 1, 1], [], []>} : vector<8x128xf32>, vector<128x512xf32>, vector<8x512xf32> -> vector<8x512xf32>
    %585 = arith.addf %583, %584 : vector<8x512xf32>
    %c0_161 = arith.constant 0 : index
    %586 = arith.index_cast %c6_i32 : i32 to index
    %c0_162 = arith.constant 0 : index
    %c0_163 = arith.constant 0 : index
    %587 = vector.load %arg3[%c0_161, %586, %c0_162, %c0_163] : memref<2x8x8x1xf32, #tpu.memory_space<vmem>>, vector<1x1x8x1xf32>
    %588 = vector.shape_cast %587 : vector<1x1x8x1xf32> to vector<8x1xf32>
    %c1_164 = arith.constant 1 : index
    %589 = arith.index_cast %c6_i32 : i32 to index
    %c0_165 = arith.constant 0 : index
    %c0_166 = arith.constant 0 : index
    %590 = vector.load %arg3[%c1_164, %589, %c0_165, %c0_166] : memref<2x8x8x1xf32, #tpu.memory_space<vmem>>, vector<1x1x8x1xf32>
    %591 = vector.shape_cast %590 : vector<1x1x8x1xf32> to vector<8x1xf32>
    %592 = vector.extract_strided_slice %580 {offsets = [0, 0], sizes = [8, 128], strides = [1, 1]} : vector<8x512xf32> to vector<8x128xf32>
    %593 = arith.negf %592 : vector<8x128xf32>
    %594 = math.exp %593 : vector<8x128xf32>
    %cst_167 = arith.constant 1.000000e+00 : f32
    %595 = vector.broadcast %cst_167 : f32 to vector<8x128xf32>
    %596 = arith.addf %595, %594 : vector<8x128xf32>
    %597 = arith.divf %595, %596 : vector<8x128xf32>
    %598 = vector.extract_strided_slice %580 {offsets = [0, 128], sizes = [8, 128], strides = [1, 1]} : vector<8x512xf32> to vector<8x128xf32>
    %599 = arith.negf %598 : vector<8x128xf32>
    %600 = math.exp %599 : vector<8x128xf32>
    %cst_168 = arith.constant 1.000000e+00 : f32
    %601 = vector.broadcast %cst_168 : f32 to vector<8x128xf32>
    %602 = arith.addf %601, %600 : vector<8x128xf32>
    %603 = arith.divf %601, %602 : vector<8x128xf32>
    %604 = vector.extract_strided_slice %580 {offsets = [0, 256], sizes = [8, 128], strides = [1, 1]} : vector<8x512xf32> to vector<8x128xf32>
    %605 = math.tanh %604 : vector<8x128xf32>
    %606 = vector.extract_strided_slice %580 {offsets = [0, 384], sizes = [8, 128], strides = [1, 1]} : vector<8x512xf32> to vector<8x128xf32>
    %607 = arith.negf %606 : vector<8x128xf32>
    %608 = math.exp %607 : vector<8x128xf32>
    %cst_169 = arith.constant 1.000000e+00 : f32
    %609 = vector.broadcast %cst_169 : f32 to vector<8x128xf32>
    %610 = arith.addf %609, %608 : vector<8x128xf32>
    %611 = arith.divf %609, %610 : vector<8x128xf32>
    %612 = arith.mulf %603, %566 : vector<8x128xf32>
    %613 = arith.mulf %597, %605 : vector<8x128xf32>
    %614 = arith.addf %612, %613 : vector<8x128xf32>
    %615 = math.tanh %614 : vector<8x128xf32>
    %616 = arith.mulf %611, %615 : vector<8x128xf32>
    %617 = vector.extract_strided_slice %585 {offsets = [0, 0], sizes = [8, 128], strides = [1, 1]} : vector<8x512xf32> to vector<8x128xf32>
    %618 = arith.negf %617 : vector<8x128xf32>
    %619 = math.exp %618 : vector<8x128xf32>
    %cst_170 = arith.constant 1.000000e+00 : f32
    %620 = vector.broadcast %cst_170 : f32 to vector<8x128xf32>
    %621 = arith.addf %620, %619 : vector<8x128xf32>
    %622 = arith.divf %620, %621 : vector<8x128xf32>
    %623 = vector.extract_strided_slice %585 {offsets = [0, 128], sizes = [8, 128], strides = [1, 1]} : vector<8x512xf32> to vector<8x128xf32>
    %624 = arith.negf %623 : vector<8x128xf32>
    %625 = math.exp %624 : vector<8x128xf32>
    %cst_171 = arith.constant 1.000000e+00 : f32
    %626 = vector.broadcast %cst_171 : f32 to vector<8x128xf32>
    %627 = arith.addf %626, %625 : vector<8x128xf32>
    %628 = arith.divf %626, %627 : vector<8x128xf32>
    %629 = vector.extract_strided_slice %585 {offsets = [0, 256], sizes = [8, 128], strides = [1, 1]} : vector<8x512xf32> to vector<8x128xf32>
    %630 = math.tanh %629 : vector<8x128xf32>
    %631 = vector.extract_strided_slice %585 {offsets = [0, 384], sizes = [8, 128], strides = [1, 1]} : vector<8x512xf32> to vector<8x128xf32>
    %632 = arith.negf %631 : vector<8x128xf32>
    %633 = math.exp %632 : vector<8x128xf32>
    %cst_172 = arith.constant 1.000000e+00 : f32
    %634 = vector.broadcast %cst_172 : f32 to vector<8x128xf32>
    %635 = arith.addf %634, %633 : vector<8x128xf32>
    %636 = arith.divf %634, %635 : vector<8x128xf32>
    %637 = arith.mulf %628, %574 : vector<8x128xf32>
    %638 = arith.mulf %622, %630 : vector<8x128xf32>
    %639 = arith.addf %637, %638 : vector<8x128xf32>
    %640 = math.tanh %639 : vector<8x128xf32>
    %641 = arith.mulf %636, %640 : vector<8x128xf32>
    %642 = vector.broadcast %588 : vector<8x1xf32> to vector<8x128xf32>
    %643 = arith.mulf %616, %642 : vector<8x128xf32>
    %644 = arith.index_cast %c6_i32 : i32 to index
    %c0_173 = arith.constant 0 : index
    %c0_174 = arith.constant 0 : index
    %645 = vector.load %arg4[%644, %c0_173, %c0_174] : memref<8x8x256xf32, #tpu.memory_space<vmem>>, vector<1x8x128xf32>
    %646 = vector.shape_cast %645 : vector<1x8x128xf32> to vector<8x128xf32>
    %647 = vector.shape_cast %643 : vector<8x128xf32> to vector<1x8x128xf32>
    tpu.vector_store %arg4[%644, %c0_173, %c0_174], %647 {strides = array<i32>} : memref<8x8x256xf32, #tpu.memory_space<vmem>>, vector<1x8x128xf32>,
    %648 = vector.broadcast %591 : vector<8x1xf32> to vector<8x128xf32>
    %649 = arith.mulf %641, %648 : vector<8x128xf32>
    %650 = arith.index_cast %575 : i32 to index
    %c0_175 = arith.constant 0 : index
    %c128_176 = arith.constant 128 : index
    %651 = vector.load %arg4[%650, %c0_175, %c128_176] : memref<8x8x256xf32, #tpu.memory_space<vmem>>, vector<1x8x128xf32>
    %652 = vector.shape_cast %651 : vector<1x8x128xf32> to vector<8x128xf32>
    %653 = vector.shape_cast %649 : vector<8x128xf32> to vector<1x8x128xf32>
    tpu.vector_store %arg4[%650, %c0_175, %c128_176], %653 {strides = array<i32>} : memref<8x8x256xf32, #tpu.memory_space<vmem>>, vector<1x8x128xf32>,
    %654 = arith.subf %616, %562 : vector<8x128xf32>
    %655 = vector.broadcast %588 : vector<8x1xf32> to vector<8x128xf32>
    %656 = arith.mulf %655, %654 : vector<8x128xf32>
    %657 = arith.addf %562, %656 : vector<8x128xf32>
    %658 = arith.subf %614, %566 : vector<8x128xf32>
    %659 = vector.broadcast %588 : vector<8x1xf32> to vector<8x128xf32>
    %660 = arith.mulf %659, %658 : vector<8x128xf32>
    %661 = arith.addf %566, %660 : vector<8x128xf32>
    %662 = arith.subf %641, %570 : vector<8x128xf32>
    %663 = vector.broadcast %591 : vector<8x1xf32> to vector<8x128xf32>
    %664 = arith.mulf %663, %662 : vector<8x128xf32>
    %665 = arith.addf %570, %664 : vector<8x128xf32>
    %666 = arith.subf %639, %574 : vector<8x128xf32>
    %667 = vector.broadcast %591 : vector<8x1xf32> to vector<8x128xf32>
    %668 = arith.mulf %667, %666 : vector<8x128xf32>
    %669 = arith.addf %574, %668 : vector<8x128xf32>
    %c7_i32_177 = arith.constant 7 : i32
    %c7_i32_178 = arith.constant 7 : i32
    %670 = arith.subi %c7_i32_178, %c7_i32_177 : i32
    %c0_179 = arith.constant 0 : index
    %671 = arith.index_cast %c7_i32_177 : i32 to index
    %c0_180 = arith.constant 0 : index
    %c0_181 = arith.constant 0 : index
    %672 = vector.load %arg1[%c0_179, %671, %c0_180, %c0_181] : memref<2x8x8x512xf32, #tpu.memory_space<vmem>>, vector<1x1x8x512xf32>
    %673 = vector.shape_cast %672 : vector<1x1x8x512xf32> to vector<8x512xf32>
    %cst_182 = arith.constant dense<0.000000e+00> : vector<8x512xf32>
    %674 = tpu.matmul %657, %1, %cst_182 {dimension_numbers = #tpu.dot_dimension_numbers<[1], [0], [0], [1], [0, 0, 1, 1], [], []>} : vector<8x128xf32>, vector<128x512xf32>, vector<8x512xf32> -> vector<8x512xf32>
    %675 = arith.addf %673, %674 : vector<8x512xf32>
    %c1_183 = arith.constant 1 : index
    %676 = arith.index_cast %c7_i32_177 : i32 to index
    %c0_184 = arith.constant 0 : index
    %c0_185 = arith.constant 0 : index
    %677 = vector.load %arg1[%c1_183, %676, %c0_184, %c0_185] : memref<2x8x8x512xf32, #tpu.memory_space<vmem>>, vector<1x1x8x512xf32>
    %678 = vector.shape_cast %677 : vector<1x1x8x512xf32> to vector<8x512xf32>
    %cst_186 = arith.constant dense<0.000000e+00> : vector<8x512xf32>
    %679 = tpu.matmul %665, %3, %cst_186 {dimension_numbers = #tpu.dot_dimension_numbers<[1], [0], [0], [1], [0, 0, 1, 1], [], []>} : vector<8x128xf32>, vector<128x512xf32>, vector<8x512xf32> -> vector<8x512xf32>
    %680 = arith.addf %678, %679 : vector<8x512xf32>
    %c0_187 = arith.constant 0 : index
    %681 = arith.index_cast %c7_i32_177 : i32 to index
    %c0_188 = arith.constant 0 : index
    %c0_189 = arith.constant 0 : index
    %682 = vector.load %arg3[%c0_187, %681, %c0_188, %c0_189] : memref<2x8x8x1xf32, #tpu.memory_space<vmem>>, vector<1x1x8x1xf32>
    %683 = vector.shape_cast %682 : vector<1x1x8x1xf32> to vector<8x1xf32>
    %c1_190 = arith.constant 1 : index
    %684 = arith.index_cast %c7_i32_177 : i32 to index
    %c0_191 = arith.constant 0 : index
    %c0_192 = arith.constant 0 : index
    %685 = vector.load %arg3[%c1_190, %684, %c0_191, %c0_192] : memref<2x8x8x1xf32, #tpu.memory_space<vmem>>, vector<1x1x8x1xf32>
    %686 = vector.shape_cast %685 : vector<1x1x8x1xf32> to vector<8x1xf32>
    %687 = vector.extract_strided_slice %675 {offsets = [0, 0], sizes = [8, 128], strides = [1, 1]} : vector<8x512xf32> to vector<8x128xf32>
    %688 = arith.negf %687 : vector<8x128xf32>
    %689 = math.exp %688 : vector<8x128xf32>
    %cst_193 = arith.constant 1.000000e+00 : f32
    %690 = vector.broadcast %cst_193 : f32 to vector<8x128xf32>
    %691 = arith.addf %690, %689 : vector<8x128xf32>
    %692 = arith.divf %690, %691 : vector<8x128xf32>
    %693 = vector.extract_strided_slice %675 {offsets = [0, 128], sizes = [8, 128], strides = [1, 1]} : vector<8x512xf32> to vector<8x128xf32>
    %694 = arith.negf %693 : vector<8x128xf32>
    %695 = math.exp %694 : vector<8x128xf32>
    %cst_194 = arith.constant 1.000000e+00 : f32
    %696 = vector.broadcast %cst_194 : f32 to vector<8x128xf32>
    %697 = arith.addf %696, %695 : vector<8x128xf32>
    %698 = arith.divf %696, %697 : vector<8x128xf32>
    %699 = vector.extract_strided_slice %675 {offsets = [0, 256], sizes = [8, 128], strides = [1, 1]} : vector<8x512xf32> to vector<8x128xf32>
    %700 = math.tanh %699 : vector<8x128xf32>
    %701 = vector.extract_strided_slice %675 {offsets = [0, 384], sizes = [8, 128], strides = [1, 1]} : vector<8x512xf32> to vector<8x128xf32>
    %702 = arith.negf %701 : vector<8x128xf32>
    %703 = math.exp %702 : vector<8x128xf32>
    %cst_195 = arith.constant 1.000000e+00 : f32
    %704 = vector.broadcast %cst_195 : f32 to vector<8x128xf32>
    %705 = arith.addf %704, %703 : vector<8x128xf32>
    %706 = arith.divf %704, %705 : vector<8x128xf32>
    %707 = arith.mulf %698, %661 : vector<8x128xf32>
    %708 = arith.mulf %692, %700 : vector<8x128xf32>
    %709 = arith.addf %707, %708 : vector<8x128xf32>
    %710 = math.tanh %709 : vector<8x128xf32>
    %711 = arith.mulf %706, %710 : vector<8x128xf32>
    %712 = vector.extract_strided_slice %680 {offsets = [0, 0], sizes = [8, 128], strides = [1, 1]} : vector<8x512xf32> to vector<8x128xf32>
    %713 = arith.negf %712 : vector<8x128xf32>
    %714 = math.exp %713 : vector<8x128xf32>
    %cst_196 = arith.constant 1.000000e+00 : f32
    %715 = vector.broadcast %cst_196 : f32 to vector<8x128xf32>
    %716 = arith.addf %715, %714 : vector<8x128xf32>
    %717 = arith.divf %715, %716 : vector<8x128xf32>
    %718 = vector.extract_strided_slice %680 {offsets = [0, 128], sizes = [8, 128], strides = [1, 1]} : vector<8x512xf32> to vector<8x128xf32>
    %719 = arith.negf %718 : vector<8x128xf32>
    %720 = math.exp %719 : vector<8x128xf32>
    %cst_197 = arith.constant 1.000000e+00 : f32
    %721 = vector.broadcast %cst_197 : f32 to vector<8x128xf32>
    %722 = arith.addf %721, %720 : vector<8x128xf32>
    %723 = arith.divf %721, %722 : vector<8x128xf32>
    %724 = vector.extract_strided_slice %680 {offsets = [0, 256], sizes = [8, 128], strides = [1, 1]} : vector<8x512xf32> to vector<8x128xf32>
    %725 = math.tanh %724 : vector<8x128xf32>
    %726 = vector.extract_strided_slice %680 {offsets = [0, 384], sizes = [8, 128], strides = [1, 1]} : vector<8x512xf32> to vector<8x128xf32>
    %727 = arith.negf %726 : vector<8x128xf32>
    %728 = math.exp %727 : vector<8x128xf32>
    %cst_198 = arith.constant 1.000000e+00 : f32
    %729 = vector.broadcast %cst_198 : f32 to vector<8x128xf32>
    %730 = arith.addf %729, %728 : vector<8x128xf32>
    %731 = arith.divf %729, %730 : vector<8x128xf32>
    %732 = arith.mulf %723, %669 : vector<8x128xf32>
    %733 = arith.mulf %717, %725 : vector<8x128xf32>
    %734 = arith.addf %732, %733 : vector<8x128xf32>
    %735 = math.tanh %734 : vector<8x128xf32>
    %736 = arith.mulf %731, %735 : vector<8x128xf32>
    %737 = vector.broadcast %683 : vector<8x1xf32> to vector<8x128xf32>
    %738 = arith.mulf %711, %737 : vector<8x128xf32>
    %739 = arith.index_cast %c7_i32_177 : i32 to index
    %c0_199 = arith.constant 0 : index
    %c0_200 = arith.constant 0 : index
    %740 = vector.load %arg4[%739, %c0_199, %c0_200] : memref<8x8x256xf32, #tpu.memory_space<vmem>>, vector<1x8x128xf32>
    %741 = vector.shape_cast %740 : vector<1x8x128xf32> to vector<8x128xf32>
    %742 = vector.shape_cast %738 : vector<8x128xf32> to vector<1x8x128xf32>
    tpu.vector_store %arg4[%739, %c0_199, %c0_200], %742 {strides = array<i32>} : memref<8x8x256xf32, #tpu.memory_space<vmem>>, vector<1x8x128xf32>,
    %743 = vector.broadcast %686 : vector<8x1xf32> to vector<8x128xf32>
    %744 = arith.mulf %736, %743 : vector<8x128xf32>
    %745 = arith.index_cast %670 : i32 to index
    %c0_201 = arith.constant 0 : index
    %c128_202 = arith.constant 128 : index
    %746 = vector.load %arg4[%745, %c0_201, %c128_202] : memref<8x8x256xf32, #tpu.memory_space<vmem>>, vector<1x8x128xf32>
    %747 = vector.shape_cast %746 : vector<1x8x128xf32> to vector<8x128xf32>
    %748 = vector.shape_cast %744 : vector<8x128xf32> to vector<1x8x128xf32>
    tpu.vector_store %arg4[%745, %c0_201, %c128_202], %748 {strides = array<i32>} : memref<8x8x256xf32, #tpu.memory_space<vmem>>, vector<1x8x128xf32>,
    %749 = arith.subf %711, %657 : vector<8x128xf32>
    %750 = vector.broadcast %683 : vector<8x1xf32> to vector<8x128xf32>
    %751 = arith.mulf %750, %749 : vector<8x128xf32>
    %752 = arith.addf %657, %751 : vector<8x128xf32>
    %753 = arith.subf %709, %661 : vector<8x128xf32>
    %754 = vector.broadcast %683 : vector<8x1xf32> to vector<8x128xf32>
    %755 = arith.mulf %754, %753 : vector<8x128xf32>
    %756 = arith.addf %661, %755 : vector<8x128xf32>
    %757 = arith.subf %736, %665 : vector<8x128xf32>
    %758 = vector.broadcast %686 : vector<8x1xf32> to vector<8x128xf32>
    %759 = arith.mulf %758, %757 : vector<8x128xf32>
    %760 = arith.addf %665, %759 : vector<8x128xf32>
    %761 = arith.subf %734, %669 : vector<8x128xf32>
    %762 = vector.broadcast %686 : vector<8x1xf32> to vector<8x128xf32>
    %763 = arith.mulf %762, %761 : vector<8x128xf32>
    %764 = arith.addf %669, %763 : vector<8x128xf32>
    %c8_i32 = arith.constant 8 : i32
    %c0_203 = arith.constant 0 : index
    %c0_204 = arith.constant 0 : index
    %765 = vector.load %arg5[%c0_203, %c0_204] : memref<8x256xf32, #tpu.memory_space<vmem>>, vector<8x128xf32>
    tpu.vector_store %arg5[%c0_203, %c0_204], %752 {strides = array<i32>} : memref<8x256xf32, #tpu.memory_space<vmem>>, vector<8x128xf32>,
    %c0_205 = arith.constant 0 : index
    %c128_206 = arith.constant 128 : index
    %766 = vector.load %arg5[%c0_205, %c128_206] : memref<8x256xf32, #tpu.memory_space<vmem>>, vector<8x128xf32>
    tpu.vector_store %arg5[%c0_205, %c128_206], %760 {strides = array<i32>} : memref<8x256xf32, #tpu.memory_space<vmem>>, vector<8x128xf32>,
    return
  }
  func.func @transform_0(%arg0: i32) -> (i32, i32, i32, i32) {
    %c0_i32 = arith.constant 0 : i32
    %c0_i32_0 = arith.constant 0 : i32
    %c0_i32_1 = arith.constant 0 : i32
    %c0_i32_2 = arith.constant 0 : i32
    %c0_i32_3 = arith.constant 0 : i32
    return %c0_i32, %c0_i32_0, %c0_i32_1, %c0_i32_2 : i32, i32, i32, i32
  }
  func.func @transform_1(%arg0: i32) -> (i32, i32, i32) {
    %c0_i32 = arith.constant 0 : i32
    %c0_i32_0 = arith.constant 0 : i32
    %c0_i32_1 = arith.constant 0 : i32
    %c0_i32_2 = arith.constant 0 : i32
    return %c0_i32, %c0_i32_0, %c0_i32_1 : i32, i32, i32
  }
  func.func @transform_2(%arg0: i32) -> (i32, i32, i32, i32) {
    %c0_i32 = arith.constant 0 : i32
    %c0_i32_0 = arith.constant 0 : i32
    %c0_i32_1 = arith.constant 0 : i32
    %c0_i32_2 = arith.constant 0 : i32
    %c0_i32_3 = arith.constant 0 : i32
    return %c0_i32, %c0_i32_0, %c0_i32_1, %c0_i32_2 : i32, i32, i32, i32
  }
  func.func @transform_3(%arg0: i32) -> (i32, i32, i32) {
    %c0_i32 = arith.constant 0 : i32
    %c0_i32_0 = arith.constant 0 : i32
    %c0_i32_1 = arith.constant 0 : i32
    %c0_i32_2 = arith.constant 0 : i32
    return %c0_i32, %c0_i32_0, %c0_i32_1 : i32, i32, i32
  }
  func.func @transform_4(%arg0: i32) -> (i32, i32) {
    %c0_i32 = arith.constant 0 : i32
    %c0_i32_0 = arith.constant 0 : i32
    %c0_i32_1 = arith.constant 0 : i32
    return %c0_i32, %c0_i32_0 : i32, i32
  }
}

</mosaic_0001>

<llo_original>
// kernel: tpu_custom_call.1
$region0: #{tpu_custom_call.1}
  #allocation0 [shape = 'u32[]', space=smem, size = 0x4, offset = 0x4, fixed_abs, tag = 'smem constant byte address 0x4 - core index']
  #allocation1 [shape = 'u32[144,128]{1,0:T(1,128)}', space=vmem, size = 0x12000, scoped, tag = 'internal scratch']
  %s0 = inlined_call_operand.hbm [shape: f32[2,8,8,512], index: 0, kind: input, shape index: {}]
  %s1 = inlined_call_operand.hbm [shape: f32[2,128,512], index: 1, kind: input, shape index: {}]
  %s2 = inlined_call_operand.vmem [shape: f32[2,8,8,1], index: 2, kind: input, shape index: {}]
  %s3 = inlined_call_operand.hbm [shape: f32[8,8,256], index: 3, kind: output, shape index: {0}]
  %s4 = inlined_call_operand.hbm [shape: f32[8,256], index: 4, kind: output, shape index: {1}]
  %5 = xla_tuple %s3, %s4
  %s6 = sld [smem:[#allocation0]]
  $region38: #{tpu_custom_call.1} parent=0
    _
  %s8 = ssub.s32 1, %s6
  %s9 = scalar_select 0, %s8, %s6
  $region1: #{tpu_custom_call.1} parent=0
    #allocation2 [shape = 'u8[262144]{0}', space=vmem, size = 0x40000, scoped, tag = 'input window, operand 0, single buffered']
    #allocation3 [shape = 's32[1]{0}', space=sflag, size = 0x4, scoped, tag = 'scoped memory for tpu_custom_call.1']
    #allocation4 [shape = 's32[1]{0}', space=sflag, size = 0x4, scoped, tag = 'scoped memory for tpu_custom_call.1']
    #allocation5 [shape = 'u8[524288]{0}', space=vmem, size = 0x80000, scoped, tag = 'input window, operand 1, single buffered']
    #allocation6 [shape = 's32[1]{0}', space=sflag, size = 0x4, scoped, tag = 'scoped memory for tpu_custom_call.1']
    #allocation7 [shape = 'u8[65536]{0}', space=vmem, size = 0x10000, scoped, tag = 'output window, operand 0, single buffered']
    #allocation8 [shape = 'u8[8192]{0}', space=vmem, size = 0x2000, scoped, tag = 'output window, operand 1, single buffered']
    #allocation9 [shape = 's32[1]{0}', space=sflag, size = 0x4, scoped, tag = 'scoped memory for tpu_custom_call.1']
    %10 = vsyncpa [#allocation3], 0
    %11 = vsyncpa [#allocation6], 0
    %12 = vsyncpa [#allocation4], 0
    %13 = vsyncpa [#allocation9], 0
    // Predicated region
    $region2: #{tpu_custom_call.1} parent=1 // pred_check
      _
    $region3: #{tpu_custom_call.1} parent=1 // pred_check_branch
      %15 = sbr.rel (0) target = $region5
    $region4: #{tpu_custom_call.1} parent=1 // pred_region
      %s17 = ssub.s32 8192, 8192
      %18 = vsyncadd [#allocation3], %s17
      %s19 = sshll.u32 [#allocation2], 4
      %s20 = int_to_ptr.vmem [resolvable:$true] %s19
      %25 = dma.hbm_to_vmem [thread:$0]  %s0, 8192, %s20, [#allocation3], 512, 512, 32
    $region5: #{tpu_custom_call.1} parent=1 // pred_fallthru
      _
    // Predicated region
    $region6: #{tpu_custom_call.1} parent=1 // pred_check
      _
    $region7: #{tpu_custom_call.1} parent=1 // pred_check_branch
      %27 = sbr.rel (0) target = $region9
    $region8: #{tpu_custom_call.1} parent=1 // pred_region
      %s29 = ssub.s32 16384, 16384
      %30 = vsyncadd [#allocation6], %s29
      %s31 = sshll.u32 [#allocation5], 4
      %s32 = int_to_ptr.vmem [resolvable:$true] %s31
      %37 = dma.hbm_to_vmem [thread:$0]  %s1, 16384, %s32, [#allocation6], 512, 512, 32
    $region9: #{tpu_custom_call.1} parent=1 // pred_fallthru
      _
    // Predicated region
    $region10: #{tpu_custom_call.1} parent=1 // pred_check
      _
    $region11: #{tpu_custom_call.1} parent=1 // pred_check_branch
      %39 = sbr.rel (0) target = $region13
    $region12: #{tpu_custom_call.1} parent=1 // pred_region
      _
    $region13: #{tpu_custom_call.1} parent=1 // pred_fallthru
      _
    // Predicated region
    $region14: #{tpu_custom_call.1} parent=1 // pred_check
      _
    $region15: #{tpu_custom_call.1} parent=1 // pred_check_branch
      %41 = sbr.rel (0) target = $region17
    $region16: #{tpu_custom_call.1} parent=1 // pred_region
      %42 = dma.done [#allocation3], 8192
    $region17: #{tpu_custom_call.1} parent=1 // pred_fallthru
      _
    // Predicated region
    $region18: #{tpu_custom_call.1} parent=1 // pred_check
      _
    $region19: #{tpu_custom_call.1} parent=1 // pred_check_branch
      %44 = sbr.rel (0) target = $region21
    $region20: #{tpu_custom_call.1} parent=1 // pred_region
      %45 = dma.done [#allocation6], 16384
    $region21: #{tpu_custom_call.1} parent=1 // pred_fallthru
      _
    %v46 = vld [vmem:[#allocation5] sm:$0xff]
    %v47 = vld [vmem:[#allocation5 + $0x8] sm:$0xff]
    %v48 = vld [vmem:[#allocation5 + $0x10] sm:$0xff]
    %v49 = vld [vmem:[#allocation5 + $0x18] sm:$0xff]
    %v50 = vld [vmem:[#allocation5 + $0x20] sm:$0xff]
    %v51 = vld [vmem:[#allocation5 + $0x28] sm:$0xff]
    %v52 = vld [vmem:[#allocation5 + $0x30] sm:$0xff]
    %v53 = vld [vmem:[#allocation5 + $0x38] sm:$0xff]
    %v54 = vld [vmem:[#allocation5 + $0x40] sm:$0xff]
    %v55 = vld [vmem:[#allocation5 + $0x48] sm:$0xff]
    %v56 = vld [vmem:[#allocation5 + $0x50] sm:$0xff]
    %v57 = vld [vmem:[#allocation5 + $0x58] sm:$0xff]
    %v58 = vld [vmem:[#allocation5 + $0x60] sm:$0xff]
    %v59 = vld [vmem:[#allocation5 + $0x68] sm:$0xff]
    %v60 = vld [vmem:[#allocation5 + $0x70] sm:$0xff]
    %v61 = vld [vmem:[#allocation5 + $0x78] sm:$0xff]
    %v62 = vld [vmem:[#allocation5 + $0x80] sm:$0xff]
    %v63 = vld [vmem:[#allocation5 + $0x88] sm:$0xff]
    %v64 = vld [vmem:[#allocation5 + $0x90] sm:$0xff]
    %v65 = vld [vmem:[#allocation5 + $0x98] sm:$0xff]
    %v66 = vld [vmem:[#allocation5 + $0xa0] sm:$0xff]
    %v67 = vld [vmem:[#allocation5 + $0xa8] sm:$0xff]
    %v68 = vld [vmem:[#allocation5 + $0xb0] sm:$0xff]
    %v69 = vld [vmem:[#allocation5 + $0xb8] sm:$0xff]
    %v70 = vld [vmem:[#allocation5 + $0xc0] sm:$0xff]
    %v71 = vld [vmem:[#allocation5 + $0xc8] sm:$0xff]
    %v72 = vld [vmem:[#allocation5 + $0xd0] sm:$0xff]
    %v73 = vld [vmem:[#allocation5 + $0xd8] sm:$0xff]
    %v74 = vld [vmem:[#allocation5 + $0xe0] sm:$0xff]
    %v75 = vld [vmem:[#allocation5 + $0xe8] sm:$0xff]
    %v76 = vld [vmem:[#allocation5 + $0xf0] sm:$0xff]
    %v77 = vld [vmem:[#allocation5 + $0xf8] sm:$0xff]
    %v78 = vld [vmem:[#allocation5 + $0x100] sm:$0xff]
    %v79 = vld [vmem:[#allocation5 + $0x108] sm:$0xff]
    %v80 = vld [vmem:[#allocation5 + $0x110] sm:$0xff]
    %v81 = vld [vmem:[#allocation5 + $0x118] sm:$0xff]
    %v82 = vld [vmem:[#allocation5 + $0x120] sm:$0xff]
    %v83 = vld [vmem:[#allocation5 + $0x128] sm:$0xff]
    %v84 = vld [vmem:[#allocation5 + $0x130] sm:$0xff]
    %v85 = vld [vmem:[#allocation5 + $0x138] sm:$0xff]
    %v86 = vld [vmem:[#allocation5 + $0x140] sm:$0xff]
    %v87 = vld [vmem:[#allocation5 + $0x148] sm:$0xff]
    %v88 = vld [vmem:[#allocation5 + $0x150] sm:$0xff]
    %v89 = vld [vmem:[#allocation5 + $0x158] sm:$0xff]
    %v90 = vld [vmem:[#allocation5 + $0x160] sm:$0xff]
    %v91 = vld [vmem:[#allocation5 + $0x168] sm:$0xff]
    %v92 = vld [vmem:[#allocation5 + $0x170] sm:$0xff]
    %v93 = vld [vmem:[#allocation5 + $0x178] sm:$0xff]
    %v94 = vld [vmem:[#allocation5 + $0x180] sm:$0xff]
    %v95 = vld [vmem:[#allocation5 + $0x188] sm:$0xff]
    %v96 = vld [vmem:[#allocation5 + $0x190] sm:$0xff]
    %v97 = vld [vmem:[#allocation5 + $0x198] sm:$0xff]
    %v98 = vld [vmem:[#allocation5 + $0x1a0] sm:$0xff]
    %v99 = vld [vmem:[#allocation5 + $0x1a8] sm:$0xff]
    %v100 = vld [vmem:[#allocation5 + $0x1b0] sm:$0xff]
    %v101 = vld [vmem:[#allocation5 + $0x1b8] sm:$0xff]
    %v102 = vld [vmem:[#allocation5 + $0x1c0] sm:$0xff]
    %v103 = vld [vmem:[#allocation5 + $0x1c8] sm:$0xff]
    %v104 = vld [vmem:[#allocation5 + $0x1d0] sm:$0xff]
    %v105 = vld [vmem:[#allocation5 + $0x1d8] sm:$0xff]
    %v106 = vld [vmem:[#allocation5 + $0x1e0] sm:$0xff]
    %v107 = vld [vmem:[#allocation5 + $0x1e8] sm:$0xff]
    %v108 = vld [vmem:[#allocation5 + $0x1f0] sm:$0xff]
    %v109 = vld [vmem:[#allocation5 + $0x1f8] sm:$0xff]
    %s110 = scalar_lea.vmem [#allocation5], 512
    %v111 = vld [vmem:[%s110] sm:$0xff]
    %v112 = vld [vmem:[%s110 + $0x8] sm:$0xff]
    %v113 = vld [vmem:[%s110 + $0x10] sm:$0xff]
    %v114 = vld [vmem:[%s110 + $0x18] sm:$0xff]
    %v115 = vld [vmem:[%s110 + $0x20] sm:$0xff]
    %v116 = vld [vmem:[%s110 + $0x28] sm:$0xff]
    %v117 = vld [vmem:[%s110 + $0x30] sm:$0xff]
    %v118 = vld [vmem:[%s110 + $0x38] sm:$0xff]
    %v119 = vld [vmem:[%s110 + $0x40] sm:$0xff]
    %v120 = vld [vmem:[%s110 + $0x48] sm:$0xff]
    %v121 = vld [vmem:[%s110 + $0x50] sm:$0xff]
    %v122 = vld [vmem:[%s110 + $0x58] sm:$0xff]
    %v123 = vld [vmem:[%s110 + $0x60] sm:$0xff]
    %v124 = vld [vmem:[%s110 + $0x68] sm:$0xff]
    %v125 = vld [vmem:[%s110 + $0x70] sm:$0xff]
    %v126 = vld [vmem:[%s110 + $0x78] sm:$0xff]
    %v127 = vld [vmem:[%s110 + $0x80] sm:$0xff]
    %v128 = vld [vmem:[%s110 + $0x88] sm:$0xff]
    %v129 = vld [vmem:[%s110 + $0x90] sm:$0xff]
    %v130 = vld [vmem:[%s110 + $0x98] sm:$0xff]
    %v131 = vld [vmem:[%s110 + $0xa0] sm:$0xff]
    %v132 = vld [vmem:[%s110 + $0xa8] sm:$0xff]
    %v133 = vld [vmem:[%s110 + $0xb0] sm:$0xff]
    %v134 = vld [vmem:[%s110 + $0xb8] sm:$0xff]
    %v135 = vld [vmem:[%s110 + $0xc0] sm:$0xff]
    %v136 = vld [vmem:[%s110 + $0xc8] sm:$0xff]
    %v137 = vld [vmem:[%s110 + $0xd0] sm:$0xff]
    %v138 = vld [vmem:[%s110 + $0xd8] sm:$0xff]
    %v139 = vld [vmem:[%s110 + $0xe0] sm:$0xff]
    %v140 = vld [vmem:[%s110 + $0xe8] sm:$0xff]
    %v141 = vld [vmem:[%s110 + $0xf0] sm:$0xff]
    %v142 = vld [vmem:[%s110 + $0xf8] sm:$0xff]
    %v143 = vld [vmem:[%s110 + $0x100] sm:$0xff]
    %v144 = vld [vmem:[%s110 + $0x108] sm:$0xff]
    %v145 = vld [vmem:[%s110 + $0x110] sm:$0xff]
    %v146 = vld [vmem:[%s110 + $0x118] sm:$0xff]
    %v147 = vld [vmem:[%s110 + $0x120] sm:$0xff]
    %v148 = vld [vmem:[%s110 + $0x128] sm:$0xff]
    %v149 = vld [vmem:[%s110 + $0x130] sm:$0xff]
    %v150 = vld [vmem:[%s110 + $0x138] sm:$0xff]
    %v151 = vld [vmem:[%s110 + $0x140] sm:$0xff]
    %v152 = vld [vmem:[%s110 + $0x148] sm:$0xff]
    %v153 = vld [vmem:[%s110 + $0x150] sm:$0xff]
    %v154 = vld [vmem:[%s110 + $0x158] sm:$0xff]
    %v155 = vld [vmem:[%s110 + $0x160] sm:$0xff]
    %v156 = vld [vmem:[%s110 + $0x168] sm:$0xff]
    %v157 = vld [vmem:[%s110 + $0x170] sm:$0xff]
    %v158 = vld [vmem:[%s110 + $0x178] sm:$0xff]
    %v159 = vld [vmem:[%s110 + $0x180] sm:$0xff]
    %v160 = vld [vmem:[%s110 + $0x188] sm:$0xff]
    %v161 = vld [vmem:[%s110 + $0x190] sm:$0xff]
    %v162 = vld [vmem:[%s110 + $0x198] sm:$0xff]
    %v163 = vld [vmem:[%s110 + $0x1a0] sm:$0xff]
    %v164 = vld [vmem:[%s110 + $0x1a8] sm:$0xff]
    %v165 = vld [vmem:[%s110 + $0x1b0] sm:$0xff]
    %v166 = vld [vmem:[%s110 + $0x1b8] sm:$0xff]
    %v167 = vld [vmem:[%s110 + $0x1c0] sm:$0xff]
    %v168 = vld [vmem:[%s110 + $0x1c8] sm:$0xff]
    %v169 = vld [vmem:[%s110 + $0x1d0] sm:$0xff]
    %v170 = vld [vmem:[%s110 + $0x1d8] sm:$0xff]
    %v171 = vld [vmem:[%s110 + $0x1e0] sm:$0xff]
    %v172 = vld [vmem:[%s110 + $0x1e8] sm:$0xff]
    %v173 = vld [vmem:[%s110 + $0x1f0] sm:$0xff]
    %v174 = vld [vmem:[%s110 + $0x1f8] sm:$0xff]
    %v175 = vld [vmem:[#allocation2] sm:$0xff]
    %v176 = vld [vmem:[#allocation2 + $0x8] sm:$0xff]
    %v177 = vld [vmem:[#allocation2 + $0x10] sm:$0xff]
    %v178 = vld [vmem:[#allocation2 + $0x18] sm:$0xff]
    %179 = vmatprep.subr.mxu0 %v47
    %180 = vmatpush1.msra.mxu0 %v46
    %181 = vmatprep.subr.mxu0 %v51
    %182 = vmatpush1.msra.mxu0 %v50
    %183 = vmatprep.subr.mxu0 %v55
    %184 = vmatpush1.msra.mxu0 %v54
    %185 = vmatprep.subr.mxu0 %v59
    %186 = vmatpush1.msra.mxu0 %v58
    %187 = vmatprep.subr.mxu0 %v63
    %188 = vmatpush1.msra.mxu0 %v62
    %189 = vmatprep.subr.mxu0 %v67
    %190 = vmatpush1.msra.mxu0 %v66
    %191 = vmatprep.subr.mxu0 %v71
    %192 = vmatpush1.msra.mxu0 %v70
    %193 = vmatprep.subr.mxu0 %v75
    %194 = vmatpush1.msra.mxu0 %v74
    %195 = vmatprep.subr.mxu0 %v79
    %196 = vmatpush1.msra.mxu0 %v78
    %197 = vmatprep.subr.mxu0 %v83
    %198 = vmatpush1.msra.mxu0 %v82
    %199 = vmatprep.subr.mxu0 %v87
    %200 = vmatpush1.msra.mxu0 %v86
    %201 = vmatprep.subr.mxu0 %v91
    %202 = vmatpush1.msra.mxu0 %v90
    %203 = vmatprep.subr.mxu0 %v95
    %204 = vmatpush1.msra.mxu0 %v94
    %205 = vmatprep.subr.mxu0 %v99
    %206 = vmatpush1.msra.mxu0 %v98
    %207 = vmatprep.subr.mxu0 %v103
    %208 = vmatpush1.msra.mxu0 %v102
    %209 = vmatprep.subr.mxu0 %v107
    %210 = vmatpush1.msra.mxu0 %v106
    %211 = vmatprep.subr.mxu0 0.0
    %212 = vmatpush1.msra.mxu0 0.0
    %213 = vmatprep.subr.mxu0 0.0
    %214 = vmatpush1.msra.mxu0 0.0
    %215 = vmatprep.subr.mxu0 0.0
    %216 = vmatpush1.msra.mxu0 0.0
    %217 = vmatprep.subr.mxu0 0.0
    %218 = vmatpush1.msra.mxu0 0.0
    %219 = vmatprep.subr.mxu0 0.0
    %220 = vmatpush1.msra.mxu0 0.0
    %221 = vmatprep.subr.mxu0 0.0
    %222 = vmatpush1.msra.mxu0 0.0
    %223 = vmatprep.subr.mxu0 0.0
    %224 = vmatpush1.msra.mxu0 0.0
    %225 = vmatprep.subr.mxu0 0.0
    %226 = vmatpush1.msra.mxu0 0.0
    %227 = vmatprep.subr.mxu0 0.0
    %228 = vmatpush1.msra.mxu0 0.0
    %229 = vmatprep.subr.mxu0 0.0
    %230 = vmatpush1.msra.mxu0 0.0
    %231 = vmatprep.subr.mxu0 0.0
    %232 = vmatpush1.msra.mxu0 0.0
    %233 = vmatprep.subr.mxu0 0.0
    %234 = vmatpush1.msra.mxu0 0.0
    %235 = vmatprep.subr.mxu0 0.0
    %236 = vmatpush1.msra.mxu0 0.0
    %237 = vmatprep.subr.mxu0 0.0
    %238 = vmatpush1.msra.mxu0 0.0
    %239 = vmatprep.subr.mxu0 0.0
    %240 = vmatpush1.msra.mxu0 0.0
    %241 = vmatprep.subr.mxu0 0.0
    %242 = vmatpush1.msra.mxu0 0.0
    %243 = vmatprep.mubr.f32.mxu0 0.0
    %244 = vmatmul.mubr.f32.gmra.mrb[0].mxu0 0.0
    %v245 = vpop.f32.mrb[0].mxu0
    %v246 = vadd.f32 0.0, %v245
    %v247 = vpop.f32.mrb[0].mxu0
    %v248 = vadd.f32 0.0, %v247
    %249 = vdwg.mxu0
    %250 = vmatprep.subr.mxu0 %v49
    %251 = vmatpush1.msra.mxu0 %v48
    %252 = vmatprep.subr.mxu0 %v53
    %253 = vmatpush1.msra.mxu0 %v52
    %254 = vmatprep.subr.mxu0 %v57
    %255 = vmatpush1.msra.mxu0 %v56
    %256 = vmatprep.subr.mxu0 %v61
    %257 = vmatpush1.msra.mxu0 %v60
    %258 = vmatprep.subr.mxu0 %v65
    %259 = vmatpush1.msra.mxu0 %v64
    %260 = vmatprep.subr.mxu0 %v69
    %261 = vmatpush1.msra.mxu0 %v68
    %262 = vmatprep.subr.mxu0 %v73
    %263 = vmatpush1.msra.mxu0 %v72
    %264 = vmatprep.subr.mxu0 %v77
    %265 = vmatpush1.msra.mxu0 %v76
    %266 = vmatprep.subr.mxu0 %v81
    %267 = vmatpush1.msra.mxu0 %v80
    %268 = vmatprep.subr.mxu0 %v85
    %269 = vmatpush1.msra.mxu0 %v84
    %270 = vmatprep.subr.mxu0 %v89
    %271 = vmatpush1.msra.mxu0 %v88
    %272 = vmatprep.subr.mxu0 %v93
    %273 = vmatpush1.msra.mxu0 %v92
    %274 = vmatprep.subr.mxu0 %v97
    %275 = vmatpush1.msra.mxu0 %v96
    %276 = vmatprep.subr.mxu0 %v101
    %277 = vmatpush1.msra.mxu0 %v100
    %278 = vmatprep.subr.mxu0 %v105
    %279 = vmatpush1.msra.mxu0 %v104
    %280 = vmatprep.subr.mxu0 %v109
    %281 = vmatpush1.msra.mxu0 %v108
    %282 = vmatprep.subr.mxu0 0.0
    %283 = vmatpush1.msra.mxu0 0.0
    %284 = vmatprep.subr.mxu0 0.0
    %285 = vmatpush1.msra.mxu0 0.0
    %286 = vmatprep.subr.mxu0 0.0
    %287 = vmatpush1.msra.mxu0 0.0
    %288 = vmatprep.subr.mxu0 0.0
    %289 = vmatpush1.msra.mxu0 0.0
    %290 = vmatprep.subr.mxu0 0.0
    %291 = vmatpush1.msra.mxu0 0.0
    %292 = vmatprep.subr.mxu0 0.0
    %293 = vmatpush1.msra.mxu0 0.0
    %294 = vmatprep.subr.mxu0 0.0
    %295 = vmatpush1.msra.mxu0 0.0
    %296 = vmatprep.subr.mxu0 0.0
    %297 = vmatpush1.msra.mxu0 0.0
    %298 = vmatprep.subr.mxu0 0.0
    %299 = vmatpush1.msra.mxu0 0.0
    %300 = vmatprep.subr.mxu0 0.0
    %301 = vmatpush1.msra.mxu0 0.0
    %302 = vmatprep.subr.mxu0 0.0
    %303 = vmatpush1.msra.mxu0 0.0
    %304 = vmatprep.subr.mxu0 0.0
    %305 = vmatpush1.msra.mxu0 0.0
    %306 = vmatprep.subr.mxu0 0.0
    %307 = vmatpush1.msra.mxu0 0.0
    %308 = vmatprep.subr.mxu0 0.0
    %309 = vmatpush1.msra.mxu0 0.0
    %310 = vmatprep.subr.mxu0 0.0
    %311 = vmatpush1.msra.mxu0 0.0
    %312 = vmatprep.subr.mxu0 0.0
    %313 = vmatpush1.msra.mxu0 0.0
    %314 = vmatprep.mubr.f32.mxu0 0.0
    %315 = vmatmul.mubr.f32.gmra.mrb[0].mxu0 0.0
    %v316 = vpop.f32.mrb[0].mxu0
    %v317 = vadd.f32 0.0, %v316
    %v318 = vpop.f32.mrb[0].mxu0
    %v319 = vadd.f32 0.0, %v318
    %320 = vdwg.mxu0
    %v321 = vadd.f32 %v175, %v246
    %v322 = vadd.f32 %v176, %v248
    %v323 = vadd.f32 %v177, %v317
    %v324 = vadd.f32 %v178, %v319
    %s325 = scalar_lea.vmem [#allocation2], 256
    %v326 = vld [vmem:[%s325] sm:$0xff]
    %v327 = vld [vmem:[%s325 + $0x8] sm:$0xff]
    %v328 = vld [vmem:[%s325 + $0x10] sm:$0xff]
    %v329 = vld [vmem:[%s325 + $0x18] sm:$0xff]
    %330 = vmatprep.subr.mxu0 %v112
    %331 = vmatpush1.msra.mxu0 %v111
    %332 = vmatprep.subr.mxu0 %v116
    %333 = vmatpush1.msra.mxu0 %v115
    %334 = vmatprep.subr.mxu0 %v120
    %335 = vmatpush1.msra.mxu0 %v119
    %336 = vmatprep.subr.mxu0 %v124
    %337 = vmatpush1.msra.mxu0 %v123
    %338 = vmatprep.subr.mxu0 %v128
    %339 = vmatpush1.msra.mxu0 %v127
    %340 = vmatprep.subr.mxu0 %v132
    %341 = vmatpush1.msra.mxu0 %v131
    %342 = vmatprep.subr.mxu0 %v136
    %343 = vmatpush1.msra.mxu0 %v135
    %344 = vmatprep.subr.mxu0 %v140
    %345 = vmatpush1.msra.mxu0 %v139
    %346 = vmatprep.subr.mxu0 %v144
    %347 = vmatpush1.msra.mxu0 %v143
    %348 = vmatprep.subr.mxu0 %v148
    %349 = vmatpush1.msra.mxu0 %v147
    %350 = vmatprep.subr.mxu0 %v152
    %351 = vmatpush1.msra.mxu0 %v151
    %352 = vmatprep.subr.mxu0 %v156
    %353 = vmatpush1.msra.mxu0 %v155
    %354 = vmatprep.subr.mxu0 %v160
    %355 = vmatpush1.msra.mxu0 %v159
    %356 = vmatprep.subr.mxu0 %v164
    %357 = vmatpush1.msra.mxu0 %v163
    %358 = vmatprep.subr.mxu0 %v168
    %359 = vmatpush1.msra.mxu0 %v167
    %360 = vmatprep.subr.mxu0 %v172
    %361 = vmatpush1.msra.mxu0 %v171
    %362 = vmatprep.subr.mxu0 0.0
    %363 = vmatpush1.msra.mxu0 0.0
    %364 = vmatprep.subr.mxu0 0.0
    %365 = vmatpush1.msra.mxu0 0.0
    %366 = vmatprep.subr.mxu0 0.0
    %367 = vmatpush1.msra.mxu0 0.0
    %368 = vmatprep.subr.mxu0 0.0
    %369 = vmatpush1.msra.mxu0 0.0
    %370 = vmatprep.subr.mxu0 0.0
    %371 = vmatpush1.msra.mxu0 0.0
    %372 = vmatprep.subr.mxu0 0.0
    %373 = vmatpush1.msra.mxu0 0.0
    %374 = vmatprep.subr.mxu0 0.0
    %375 = vmatpush1.msra.mxu0 0.0
    %376 = vmatprep.subr.mxu0 0.0
    %377 = vmatpush1.msra.mxu0 0.0
    %378 = vmatprep.subr.mxu0 0.0
    %379 = vmatpush1.msra.mxu0 0.0
    %380 = vmatprep.subr.mxu0 0.0
    %381 = vmatpush1.msra.mxu0 0.0
    %382 = vmatprep.subr.mxu0 0.0
    %383 = vmatpush1.msra.mxu0 0.0
    %384 = vmatprep.subr.mxu0 0.0
    %385 = vmatpush1.msra.mxu0 0.0
    %386 = vmatprep.subr.mxu0 0.0
    %387 = vmatpush1.msra.mxu0 0.0
    %388 = vmatprep.subr.mxu0 0.0
    %389 = vmatpush1.msra.mxu0 0.0
    %390 = vmatprep.subr.mxu0 0.0
    %391 = vmatpush1.msra.mxu0 0.0
    %392 = vmatprep.subr.mxu0 0.0
    %393 = vmatpush1.msra.mxu0 0.0
    %394 = vmatprep.mubr.f32.mxu0 0.0
    %395 = vmatmul.mubr.f32.gmra.mrb[0].mxu0 0.0
    %v396 = vpop.f32.mrb[0].mxu0
    %v397 = vadd.f32 0.0, %v396
    %v398 = vpop.f32.mrb[0].mxu0
    %v399 = vadd.f32 0.0, %v398
    %400 = vdwg.mxu0
    %401 = vmatprep.subr.mxu0 %v114
    %402 = vmatpush1.msra.mxu0 %v113
    %403 = vmatprep.subr.mxu0 %v118
    %404 = vmatpush1.msra.mxu0 %v117
    %405 = vmatprep.subr.mxu0 %v122
    %406 = vmatpush1.msra.mxu0 %v121
    %407 = vmatprep.subr.mxu0 %v126
    %408 = vmatpush1.msra.mxu0 %v125
    %409 = vmatprep.subr.mxu0 %v130
    %410 = vmatpush1.msra.mxu0 %v129
    %411 = vmatprep.subr.mxu0 %v134
    %412 = vmatpush1.msra.mxu0 %v133
    %413 = vmatprep.subr.mxu0 %v138
    %414 = vmatpush1.msra.mxu0 %v137
    %415 = vmatprep.subr.mxu0 %v142
    %416 = vmatpush1.msra.mxu0 %v141
    %417 = vmatprep.subr.mxu0 %v146
    %418 = vmatpush1.msra.mxu0 %v145
    %419 = vmatprep.subr.mxu0 %v150
    %420 = vmatpush1.msra.mxu0 %v149
    %421 = vmatprep.subr.mxu0 %v154
    %422 = vmatpush1.msra.mxu0 %v153
    %423 = vmatprep.subr.mxu0 %v158
    %424 = vmatpush1.msra.mxu0 %v157
    %425 = vmatprep.subr.mxu0 %v162
    %426 = vmatpush1.msra.mxu0 %v161
    %427 = vmatprep.subr.mxu0 %v166
    %428 = vmatpush1.msra.mxu0 %v165
    %429 = vmatprep.subr.mxu0 %v170
    %430 = vmatpush1.msra.mxu0 %v169
    %431 = vmatprep.subr.mxu0 %v174
    %432 = vmatpush1.msra.mxu0 %v173
    %433 = vmatprep.subr.mxu0 0.0
    %434 = vmatpush1.msra.mxu0 0.0
    %435 = vmatprep.subr.mxu0 0.0
    %436 = vmatpush1.msra.mxu0 0.0
    %437 = vmatprep.subr.mxu0 0.0
    %438 = vmatpush1.msra.mxu0 0.0
    %439 = vmatprep.subr.mxu0 0.0
    %440 = vmatpush1.msra.mxu0 0.0
    %441 = vmatprep.subr.mxu0 0.0
    %442 = vmatpush1.msra.mxu0 0.0
    %443 = vmatprep.subr.mxu0 0.0
    %444 = vmatpush1.msra.mxu0 0.0
    %445 = vmatprep.subr.mxu0 0.0
    %446 = vmatpush1.msra.mxu0 0.0
    %447 = vmatprep.subr.mxu0 0.0
    %448 = vmatpush1.msra.mxu0 0.0
    %449 = vmatprep.subr.mxu0 0.0
    %450 = vmatpush1.msra.mxu0 0.0
    %451 = vmatprep.subr.mxu0 0.0
    %452 = vmatpush1.msra.mxu0 0.0
    %453 = vmatprep.subr.mxu0 0.0
    %454 = vmatpush1.msra.mxu0 0.0
    %455 = vmatprep.subr.mxu0 0.0
    %456 = vmatpush1.msra.mxu0 0.0
    %457 = vmatprep.subr.mxu0 0.0
    %458 = vmatpush1.msra.mxu0 0.0
    %459 = vmatprep.subr.mxu0 0.0
    %460 = vmatpush1.msra.mxu0 0.0
    %461 = vmatprep.subr.mxu0 0.0
    %462 = vmatpush1.msra.mxu0 0.0
    %463 = vmatprep.subr.mxu0 0.0
    %464 = vmatpush1.msra.mxu0 0.0
    %465 = vmatprep.mubr.f32.mxu0 0.0
    %466 = vmatmul.mubr.f32.gmra.mrb[0].mxu0 0.0
    %v467 = vpop.f32.mrb[0].mxu0
    %v468 = vadd.f32 0.0, %v467
    %v469 = vpop.f32.mrb[0].mxu0
    %v470 = vadd.f32 0.0, %v469
    %471 = vdwg.mxu0
    %v472 = vadd.f32 %v326, %v397
    %v473 = vadd.f32 %v327, %v399
    %v474 = vadd.f32 %v328, %v468
    %v475 = vadd.f32 %v329, %v470
    %v476 = vld [vmem:[%s2] sm:$0xff]
    %s477 = scalar_lea.vmem %s2, 64
    %v478 = vld [vmem:[%s477] sm:$0xff]
    %v479 = vxor.u32 %v321, 2147483648
    %v480 = vmul.f32 %v479, 1.442695
    %v481 = vpow.pop %v480
    %v482 = vadd.f32 %v481, 1.0
    %v483 = vrcp.pop %v482
    %v484 = vmul.f32 1.0, %v483
    %v485 = vxor.u32 %v322, 2147483648
    %v486 = vmul.f32 %v485, 1.442695
    %v487 = vpow.pop %v486
    %v488 = vadd.f32 %v487, 1.0
    %v489 = vrcp.pop %v488
    %v490 = vmul.f32 1.0, %v489
    %v491 = vtanh.pop %v323
    %v492 = vxor.u32 %v324, 2147483648
    %v493 = vmul.f32 %v492, 1.442695
    %v494 = vpow.pop %v493
    %v495 = vadd.f32 %v494, 1.0
    %v496 = vrcp.pop %v495
    %v497 = vmul.f32 1.0, %v496
    %v498 = vmul.f32 %v490, 0.0
    %v499 = vmul.f32 %v484, %v491
    %v500 = vadd.f32 %v498, %v499
    %v501 = vtanh.pop %v500
    %v502 = vmul.f32 %v497, %v501
    %v503 = vxor.u32 %v472, 2147483648
    %v504 = vmul.f32 %v503, 1.442695
    %v505 = vpow.pop %v504
    %v506 = vadd.f32 %v505, 1.0
    %v507 = vrcp.pop %v506
    %v508 = vmul.f32 1.0, %v507
    %v509 = vxor.u32 %v473, 2147483648
    %v510 = vmul.f32 %v509, 1.442695
    %v511 = vpow.pop %v510
    %v512 = vadd.f32 %v511, 1.0
    %v513 = vrcp.pop %v512
    %v514 = vmul.f32 1.0, %v513
    %v515 = vtanh.pop %v474
    %v516 = vxor.u32 %v475, 2147483648
    %v517 = vmul.f32 %v516, 1.442695
    %v518 = vpow.pop %v517
    %v519 = vadd.f32 %v518, 1.0
    %v520 = vrcp.pop %v519
    %v521 = vmul.f32 1.0, %v520
    %v522 = vmul.f32 %v514, 0.0
    %v523 = vmul.f32 %v508, %v515
    %v524 = vadd.f32 %v522, %v523
    %v525 = vtanh.pop %v524
    %v526 = vmul.f32 %v521, %v525
    %528 = vset.pattern.permute.xlu0 0
    %529 = vperm.xlu0 %528, %v476
    %v530 = vpop.permute.xlu0 %529
    %v532 = vmul.f32 %v502, %v530
    %533 = vst [vmem:[#allocation7] sm:$0xff] %v532
    %535 = vset.pattern.permute.xlu0 0
    %536 = vperm.xlu0 %535, %v478
    %v537 = vpop.permute.xlu0 %536
    %v539 = vmul.f32 %v526, %v537
    %s540 = scalar_lea.vmem [#allocation7], 112
    %541 = vst [vmem:[%s540 + $0x8] sm:$0xff] %v539
    %v542 = vadd.f32 %v532, 0.0
    %v543 = vmul.f32 %v530, %v500
    %v544 = vadd.f32 %v543, 0.0
    %v545 = vadd.f32 %v539, 0.0
    %v546 = vmul.f32 %v537, %v524
    %v547 = vadd.f32 %v546, 0.0
    %s548 = scalar_lea.vmem [#allocation2], 32
    %v549 = vld [vmem:[%s548] sm:$0xff]
    %v550 = vld [vmem:[%s548 + $0x8] sm:$0xff]
    %v551 = vld [vmem:[%s548 + $0x10] sm:$0xff]
    %v552 = vld [vmem:[%s548 + $0x18] sm:$0xff]
    %553 = vmatprep.subr.mxu0 %v47
    %554 = vmatpush1.msra.mxu0 %v46
    %555 = vmatprep.subr.mxu0 %v51
    %556 = vmatpush1.msra.mxu0 %v50
    %557 = vmatprep.subr.mxu0 %v55
    %558 = vmatpush1.msra.mxu0 %v54
    %559 = vmatprep.subr.mxu0 %v59
    %560 = vmatpush1.msra.mxu0 %v58
    %561 = vmatprep.subr.mxu0 %v63
    %562 = vmatpush1.msra.mxu0 %v62
    %563 = vmatprep.subr.mxu0 %v67
    %564 = vmatpush1.msra.mxu0 %v66
    %565 = vmatprep.subr.mxu0 %v71
    %566 = vmatpush1.msra.mxu0 %v70
    %567 = vmatprep.subr.mxu0 %v75
    %568 = vmatpush1.msra.mxu0 %v74
    %569 = vmatprep.subr.mxu0 %v79
    %570 = vmatpush1.msra.mxu0 %v78
    %571 = vmatprep.subr.mxu0 %v83
    %572 = vmatpush1.msra.mxu0 %v82
    %573 = vmatprep.subr.mxu0 %v87
    %574 = vmatpush1.msra.mxu0 %v86
    %575 = vmatprep.subr.mxu0 %v91
    %576 = vmatpush1.msra.mxu0 %v90
    %577 = vmatprep.subr.mxu0 %v95
    %578 = vmatpush1.msra.mxu0 %v94
    %579 = vmatprep.subr.mxu0 %v99
    %580 = vmatpush1.msra.mxu0 %v98
    %581 = vmatprep.subr.mxu0 %v103
    %582 = vmatpush1.msra.mxu0 %v102
    %583 = vmatprep.subr.mxu0 %v107
    %584 = vmatpush1.msra.mxu0 %v106
    %585 = vmatprep.subr.mxu0 0.0
    %586 = vmatpush1.msra.mxu0 0.0
    %587 = vmatprep.subr.mxu0 0.0
    %588 = vmatpush1.msra.mxu0 0.0
    %589 = vmatprep.subr.mxu0 0.0
    %590 = vmatpush1.msra.mxu0 0.0
    %591 = vmatprep.subr.mxu0 0.0
    %592 = vmatpush1.msra.mxu0 0.0
    %593 = vmatprep.subr.mxu0 0.0
    %594 = vmatpush1.msra.mxu0 0.0
    %595 = vmatprep.subr.mxu0 0.0
    %596 = vmatpush1.msra.mxu0 0.0
    %597 = vmatprep.subr.mxu0 0.0
    %598 = vmatpush1.msra.mxu0 0.0
    %599 = vmatprep.subr.mxu0 0.0
    %600 = vmatpush1.msra.mxu0 0.0
    %601 = vmatprep.subr.mxu0 0.0
    %602 = vmatpush1.msra.mxu0 0.0
    %603 = vmatprep.subr.mxu0 0.0
    %604 = vmatpush1.msra.mxu0 0.0
    %605 = vmatprep.subr.mxu0 0.0
    %606 = vmatpush1.msra.mxu0 0.0
    %607 = vmatprep.subr.mxu0 0.0
    %608 = vmatpush1.msra.mxu0 0.0
    %609 = vmatprep.subr.mxu0 0.0
    %610 = vmatpush1.msra.mxu0 0.0
    %611 = vmatprep.subr.mxu0 0.0
    %612 = vmatpush1.msra.mxu0 0.0
    %613 = vmatprep.subr.mxu0 0.0
    %614 = vmatpush1.msra.mxu0 0.0
    %615 = vmatprep.subr.mxu0 0.0
    %616 = vmatpush1.msra.mxu0 0.0
    %617 = vmatprep.mubr.f32.mxu0 0.0
    %618 = vmatmul.mubr.f32.gmra.mrb[0].mxu0 %v542
    %v619 = vpop.f32.mrb[0].mxu0
    %v620 = vadd.f32 0.0, %v619
    %v621 = vpop.f32.mrb[0].mxu0
    %v622 = vadd.f32 0.0, %v621
    %623 = vdwg.mxu0
    %624 = vmatprep.subr.mxu0 %v49
    %625 = vmatpush1.msra.mxu0 %v48
    %626 = vmatprep.subr.mxu0 %v53
    %627 = vmatpush1.msra.mxu0 %v52
    %628 = vmatprep.subr.mxu0 %v57
    %629 = vmatpush1.msra.mxu0 %v56
    %630 = vmatprep.subr.mxu0 %v61
    %631 = vmatpush1.msra.mxu0 %v60
    %632 = vmatprep.subr.mxu0 %v65
    %633 = vmatpush1.msra.mxu0 %v64
    %634 = vmatprep.subr.mxu0 %v69
    %635 = vmatpush1.msra.mxu0 %v68
    %636 = vmatprep.subr.mxu0 %v73
    %637 = vmatpush1.msra.mxu0 %v72
    %638 = vmatprep.subr.mxu0 %v77
    %639 = vmatpush1.msra.mxu0 %v76
    %640 = vmatprep.subr.mxu0 %v81
    %641 = vmatpush1.msra.mxu0 %v80
    %642 = vmatprep.subr.mxu0 %v85
    %643 = vmatpush1.msra.mxu0 %v84
    %644 = vmatprep.subr.mxu0 %v89
    %645 = vmatpush1.msra.mxu0 %v88
    %646 = vmatprep.subr.mxu0 %v93
    %647 = vmatpush1.msra.mxu0 %v92
    %648 = vmatprep.subr.mxu0 %v97
    %649 = vmatpush1.msra.mxu0 %v96
    %650 = vmatprep.subr.mxu0 %v101
    %651 = vmatpush1.msra.mxu0 %v100
    %652 = vmatprep.subr.mxu0 %v105
    %653 = vmatpush1.msra.mxu0 %v104
    %654 = vmatprep.subr.mxu0 %v109
    %655 = vmatpush1.msra.mxu0 %v108
    %656 = vmatprep.subr.mxu0 0.0
    %657 = vmatpush1.msra.mxu0 0.0
    %658 = vmatprep.subr.mxu0 0.0
    %659 = vmatpush1.msra.mxu0 0.0
    %660 = vmatprep.subr.mxu0 0.0
    %661 = vmatpush1.msra.mxu0 0.0
    %662 = vmatprep.subr.mxu0 0.0
    %663 = vmatpush1.msra.mxu0 0.0
    %664 = vmatprep.subr.mxu0 0.0
    %665 = vmatpush1.msra.mxu0 0.0
    %666 = vmatprep.subr.mxu0 0.0
    %667 = vmatpush1.msra.mxu0 0.0
    %668 = vmatprep.subr.mxu0 0.0
    %669 = vmatpush1.msra.mxu0 0.0
    %670 = vmatprep.subr.mxu0 0.0
    %671 = vmatpush1.msra.mxu0 0.0
    %672 = vmatprep.subr.mxu0 0.0
    %673 = vmatpush1.msra.mxu0 0.0
    %674 = vmatprep.subr.mxu0 0.0
    %675 = vmatpush1.msra.mxu0 0.0
    %676 = vmatprep.subr.mxu0 0.0
    %677 = vmatpush1.msra.mxu0 0.0
    %678 = vmatprep.subr.mxu0 0.0
    %679 = vmatpush1.msra.mxu0 0.0
    %680 = vmatprep.subr.mxu0 0.0
    %681 = vmatpush1.msra.mxu0 0.0
    %682 = vmatprep.subr.mxu0 0.0
    %683 = vmatpush1.msra.mxu0 0.0
    %684 = vmatprep.subr.mxu0 0.0
    %685 = vmatpush1.msra.mxu0 0.0
    %686 = vmatprep.subr.mxu0 0.0
    %687 = vmatpush1.msra.mxu0 0.0
    %688 = vmatprep.mubr.f32.mxu0 0.0
    %689 = vmatmul.mubr.f32.gmra.mrb[0].mxu0 %v542
    %v690 = vpop.f32.mrb[0].mxu0
    %v691 = vadd.f32 0.0, %v690
    %v692 = vpop.f32.mrb[0].mxu0
    %v693 = vadd.f32 0.0, %v692
    %694 = vdwg.mxu0
    %v695 = vadd.f32 %v549, %v620
    %v696 = vadd.f32 %v550, %v622
    %v697 = vadd.f32 %v551, %v691
    %v698 = vadd.f32 %v552, %v693
    %s699 = scalar_lea.vmem [#allocation2], 288
    %v700 = vld [vmem:[%s699] sm:$0xff]
    %v701 = vld [vmem:[%s699 + $0x8] sm:$0xff]
    %v702 = vld [vmem:[%s699 + $0x10] sm:$0xff]
    %v703 = vld [vmem:[%s699 + $0x18] sm:$0xff]
    %704 = vmatprep.subr.mxu0 %v112
    %705 = vmatpush1.msra.mxu0 %v111
    %706 = vmatprep.subr.mxu0 %v116
    %707 = vmatpush1.msra.mxu0 %v115
    %708 = vmatprep.subr.mxu0 %v120
    %709 = vmatpush1.msra.mxu0 %v119
    %710 = vmatprep.subr.mxu0 %v124
    %711 = vmatpush1.msra.mxu0 %v123
    %712 = vmatprep.subr.mxu0 %v128
    %713 = vmatpush1.msra.mxu0 %v127
    %714 = vmatprep.subr.mxu0 %v132
    %715 = vmatpush1.msra.mxu0 %v131
    %716 = vmatprep.subr.mxu0 %v136
    %717 = vmatpush1.msra.mxu0 %v135
    %718 = vmatprep.subr.mxu0 %v140
    %719 = vmatpush1.msra.mxu0 %v139
    %720 = vmatprep.subr.mxu0 %v144
    %721 = vmatpush1.msra.mxu0 %v143
    %722 = vmatprep.subr.mxu0 %v148
    %723 = vmatpush1.msra.mxu0 %v147
    %724 = vmatprep.subr.mxu0 %v152
    %725 = vmatpush1.msra.mxu0 %v151
    %726 = vmatprep.subr.mxu0 %v156
    %727 = vmatpush1.msra.mxu0 %v155
    %728 = vmatprep.subr.mxu0 %v160
    %729 = vmatpush1.msra.mxu0 %v159
    %730 = vmatprep.subr.mxu0 %v164
    %731 = vmatpush1.msra.mxu0 %v163
    %732 = vmatprep.subr.mxu0 %v168
    %733 = vmatpush1.msra.mxu0 %v167
    %734 = vmatprep.subr.mxu0 %v172
    %735 = vmatpush1.msra.mxu0 %v171
    %736 = vmatprep.subr.mxu0 0.0
    %737 = vmatpush1.msra.mxu0 0.0
    %738 = vmatprep.subr.mxu0 0.0
    %739 = vmatpush1.msra.mxu0 0.0
    %740 = vmatprep.subr.mxu0 0.0
    %741 = vmatpush1.msra.mxu0 0.0
    %742 = vmatprep.subr.mxu0 0.0
    %743 = vmatpush1.msra.mxu0 0.0
    %744 = vmatprep.subr.mxu0 0.0
    %745 = vmatpush1.msra.mxu0 0.0
    %746 = vmatprep.subr.mxu0 0.0
    %747 = vmatpush1.msra.mxu0 0.0
    %748 = vmatprep.subr.mxu0 0.0
    %749 = vmatpush1.msra.mxu0 0.0
    %750 = vmatprep.subr.mxu0 0.0
    %751 = vmatpush1.msra.mxu0 0.0
    %752 = vmatprep.subr.mxu0 0.0
    %753 = vmatpush1.msra.mxu0 0.0
    %754 = vmatprep.subr.mxu0 0.0
    %755 = vmatpush1.msra.mxu0 0.0
    %756 = vmatprep.subr.mxu0 0.0
    %757 = vmatpush1.msra.mxu0 0.0
    %758 = vmatprep.subr.mxu0 0.0
    %759 = vmatpush1.msra.mxu0 0.0
    %760 = vmatprep.subr.mxu0 0.0
    %761 = vmatpush1.msra.mxu0 0.0
    %762 = vmatprep.subr.mxu0 0.0
    %763 = vmatpush1.msra.mxu0 0.0
    %764 = vmatprep.subr.mxu0 0.0
    %765 = vmatpush1.msra.mxu0 0.0
    %766 = vmatprep.subr.mxu0 0.0
    %767 = vmatpush1.msra.mxu0 0.0
    %768 = vmatprep.mubr.f32.mxu0 0.0
    %769 = vmatmul.mubr.f32.gmra.mrb[0].mxu0 %v545
    %v770 = vpop.f32.mrb[0].mxu0
    %v771 = vadd.f32 0.0, %v770
    %v772 = vpop.f32.mrb[0].mxu0
    %v773 = vadd.f32 0.0, %v772
    %774 = vdwg.mxu0
    %775 = vmatprep.subr.mxu0 %v114
    %776 = vmatpush1.msra.mxu0 %v113
    %777 = vmatprep.subr.mxu0 %v118
    %778 = vmatpush1.msra.mxu0 %v117
    %779 = vmatprep.subr.mxu0 %v122
    %780 = vmatpush1.msra.mxu0 %v121
    %781 = vmatprep.subr.mxu0 %v126
    %782 = vmatpush1.msra.mxu0 %v125
    %783 = vmatprep.subr.mxu0 %v130
    %784 = vmatpush1.msra.mxu0 %v129
    %785 = vmatprep.subr.mxu0 %v134
    %786 = vmatpush1.msra.mxu0 %v133
    %787 = vmatprep.subr.mxu0 %v138
    %788 = vmatpush1.msra.mxu0 %v137
    %789 = vmatprep.subr.mxu0 %v142
    %790 = vmatpush1.msra.mxu0 %v141
    %791 = vmatprep.subr.mxu0 %v146
    %792 = vmatpush1.msra.mxu0 %v145
    %793 = vmatprep.subr.mxu0 %v150
    %794 = vmatpush1.msra.mxu0 %v149
    %795 = vmatprep.subr.mxu0 %v154
    %796 = vmatpush1.msra.mxu0 %v153
    %797 = vmatprep.subr.mxu0 %v158
    %798 = vmatpush1.msra.mxu0 %v157
    %799 = vmatprep.subr.mxu0 %v162
    %800 = vmatpush1.msra.mxu0 %v161
    %801 = vmatprep.subr.mxu0 %v166
    %802 = vmatpush1.msra.mxu0 %v165
    %803 = vmatprep.subr.mxu0 %v170
    %804 = vmatpush1.msra.mxu0 %v169
    %805 = vmatprep.subr.mxu0 %v174
    %806 = vmatpush1.msra.mxu0 %v173
    %807 = vmatprep.subr.mxu0 0.0
    %808 = vmatpush1.msra.mxu0 0.0
    %809 = vmatprep.subr.mxu0 0.0
    %810 = vmatpush1.msra.mxu0 0.0
    %811 = vmatprep.subr.mxu0 0.0
    %812 = vmatpush1.msra.mxu0 0.0
    %813 = vmatprep.subr.mxu0 0.0
    %814 = vmatpush1.msra.mxu0 0.0
    %815 = vmatprep.subr.mxu0 0.0
    %816 = vmatpush1.msra.mxu0 0.0
    %817 = vmatprep.subr.mxu0 0.0
    %818 = vmatpush1.msra.mxu0 0.0
    %819 = vmatprep.subr.mxu0 0.0
    %820 = vmatpush1.msra.mxu0 0.0
    %821 = vmatprep.subr.mxu0 0.0
    %822 = vmatpush1.msra.mxu0 0.0
    %823 = vmatprep.subr.mxu0 0.0
    %824 = vmatpush1.msra.mxu0 0.0
    %825 = vmatprep.subr.mxu0 0.0
    %826 = vmatpush1.msra.mxu0 0.0
    %827 = vmatprep.subr.mxu0 0.0
    %828 = vmatpush1.msra.mxu0 0.0
    %829 = vmatprep.subr.mxu0 0.0
    %830 = vmatpush1.msra.mxu0 0.0
    %831 = vmatprep.subr.mxu0 0.0
    %832 = vmatpush1.msra.mxu0 0.0
    %833 = vmatprep.subr.mxu0 0.0
    %834 = vmatpush1.msra.mxu0 0.0
    %835 = vmatprep.subr.mxu0 0.0
    %836 = vmatpush1.msra.mxu0 0.0
    %837 = vmatprep.subr.mxu0 0.0
    %838 = vmatpush1.msra.mxu0 0.0
    %839 = vmatprep.mubr.f32.mxu0 0.0
    %840 = vmatmul.mubr.f32.gmra.mrb[0].mxu0 %v545
    %v841 = vpop.f32.mrb[0].mxu0
    %v842 = vadd.f32 0.0, %v841
    %v843 = vpop.f32.mrb[0].mxu0
    %v844 = vadd.f32 0.0, %v843
    %845 = vdwg.mxu0
    %v846 = vadd.f32 %v700, %v771
    %v847 = vadd.f32 %v701, %v773
    %v848 = vadd.f32 %v702, %v842
    %v849 = vadd.f32 %v703, %v844
    %s850 = scalar_lea.vmem %s2, 8
    %v851 = vld [vmem:[%s850] sm:$0xff]
    %s852 = scalar_lea.vmem %s2, 72
    %v853 = vld [vmem:[%s852] sm:$0xff]
    %v854 = vxor.u32 %v695, 2147483648
    %v855 = vmul.f32 %v854, 1.442695
    %v856 = vpow.pop %v855
    %v857 = vadd.f32 %v856, 1.0
    %v858 = vrcp.pop %v857
    %v859 = vmul.f32 1.0, %v858
    %v860 = vxor.u32 %v696, 2147483648
    %v861 = vmul.f32 %v860, 1.442695
    %v862 = vpow.pop %v861
    %v863 = vadd.f32 %v862, 1.0
    %v864 = vrcp.pop %v863
    %v865 = vmul.f32 1.0, %v864
    %v866 = vtanh.pop %v697
    %v867 = vxor.u32 %v698, 2147483648
    %v868 = vmul.f32 %v867, 1.442695
    %v869 = vpow.pop %v868
    %v870 = vadd.f32 %v869, 1.0
    %v871 = vrcp.pop %v870
    %v872 = vmul.f32 1.0, %v871
    %v873 = vmul.f32 %v865, %v544
    %v874 = vmul.f32 %v859, %v866
    %v875 = vadd.f32 %v873, %v874
    %v876 = vtanh.pop %v875
    %v877 = vmul.f32 %v872, %v876
    %v878 = vxor.u32 %v846, 2147483648
    %v879 = vmul.f32 %v878, 1.442695
    %v880 = vpow.pop %v879
    %v881 = vadd.f32 %v880, 1.0
    %v882 = vrcp.pop %v881
    %v883 = vmul.f32 1.0, %v882
    %v884 = vxor.u32 %v847, 2147483648
    %v885 = vmul.f32 %v884, 1.442695
    %v886 = vpow.pop %v885
    %v887 = vadd.f32 %v886, 1.0
    %v888 = vrcp.pop %v887
    %v889 = vmul.f32 1.0, %v888
    %v890 = vtanh.pop %v848
    %v891 = vxor.u32 %v849, 2147483648
    %v892 = vmul.f32 %v891, 1.442695
    %v893 = vpow.pop %v892
    %v894 = vadd.f32 %v893, 1.0
    %v895 = vrcp.pop %v894
    %v896 = vmul.f32 1.0, %v895
    %v897 = vmul.f32 %v889, %v547
    %v898 = vmul.f32 %v883, %v890
    %v899 = vadd.f32 %v897, %v898
    %v900 = vtanh.pop %v899
    %v901 = vmul.f32 %v896, %v900
    %903 = vset.pattern.permute.xlu0 0
    %904 = vperm.xlu0 %903, %v851
    %v905 = vpop.permute.xlu0 %904
    %v907 = vmul.f32 %v877, %v905
    %s908 = scalar_lea.vmem [#allocation7], 16
    %909 = vst [vmem:[%s908] sm:$0xff] %v907
    %911 = vset.pattern.permute.xlu0 0
    %912 = vperm.xlu0 %911, %v853
    %v913 = vpop.permute.xlu0 %912
    %v915 = vmul.f32 %v901, %v913
    %s916 = scalar_lea.vmem [#allocation7], 96
    %917 = vst [vmem:[%s916 + $0x8] sm:$0xff] %v915
    %v918 = vsub.f32 %v877, %v542
    %v919 = vmul.f32 %v905, %v918
    %v920 = vadd.f32 %v542, %v919
    %v921 = vsub.f32 %v875, %v544
    %v922 = vmul.f32 %v905, %v921
    %v923 = vadd.f32 %v544, %v922
    %v924 = vsub.f32 %v901, %v545
    %v925 = vmul.f32 %v913, %v924
    %v926 = vadd.f32 %v545, %v925
    %v927 = vsub.f32 %v899, %v547
    %v928 = vmul.f32 %v913, %v927
    %v929 = vadd.f32 %v547, %v928
    %s930 = scalar_lea.vmem [#allocation2], 64
    %v931 = vld [vmem:[%s930] sm:$0xff]
    %v932 = vld [vmem:[%s930 + $0x8] sm:$0xff]
    %v933 = vld [vmem:[%s930 + $0x10] sm:$0xff]
    %v934 = vld [vmem:[%s930 + $0x18] sm:$0xff]
    %935 = vmatprep.subr.mxu0 %v47
    %936 = vmatpush1.msra.mxu0 %v46
    %937 = vmatprep.subr.mxu0 %v51
    %938 = vmatpush1.msra.mxu0 %v50
    %939 = vmatprep.subr.mxu0 %v55
    %940 = vmatpush1.msra.mxu0 %v54
    %941 = vmatprep.subr.mxu0 %v59
    %942 = vmatpush1.msra.mxu0 %v58
    %943 = vmatprep.subr.mxu0 %v63
    %944 = vmatpush1.msra.mxu0 %v62
    %945 = vmatprep.subr.mxu0 %v67
    %946 = vmatpush1.msra.mxu0 %v66
    %947 = vmatprep.subr.mxu0 %v71
    %948 = vmatpush1.msra.mxu0 %v70
    %949 = vmatprep.subr.mxu0 %v75
    %950 = vmatpush1.msra.mxu0 %v74
    %951 = vmatprep.subr.mxu0 %v79
    %952 = vmatpush1.msra.mxu0 %v78
    %953 = vmatprep.subr.mxu0 %v83
    %954 = vmatpush1.msra.mxu0 %v82
    %955 = vmatprep.subr.mxu0 %v87
    %956 = vmatpush1.msra.mxu0 %v86
    %957 = vmatprep.subr.mxu0 %v91
    %958 = vmatpush1.msra.mxu0 %v90
    %959 = vmatprep.subr.mxu0 %v95
    %960 = vmatpush1.msra.mxu0 %v94
    %961 = vmatprep.subr.mxu0 %v99
    %962 = vmatpush1.msra.mxu0 %v98
    %963 = vmatprep.subr.mxu0 %v103
    %964 = vmatpush1.msra.mxu0 %v102
    %965 = vmatprep.subr.mxu0 %v107
    %966 = vmatpush1.msra.mxu0 %v106
    %967 = vmatprep.subr.mxu0 0.0
    %968 = vmatpush1.msra.mxu0 0.0
    %969 = vmatprep.subr.mxu0 0.0
    %970 = vmatpush1.msra.mxu0 0.0
    %971 = vmatprep.subr.mxu0 0.0
    %972 = vmatpush1.msra.mxu0 0.0
    %973 = vmatprep.subr.mxu0 0.0
    %974 = vmatpush1.msra.mxu0 0.0
    %975 = vmatprep.subr.mxu0 0.0
    %976 = vmatpush1.msra.mxu0 0.0
    %977 = vmatprep.subr.mxu0 0.0
    %978 = vmatpush1.msra.mxu0 0.0
    %979 = vmatprep.subr.mxu0 0.0
    %980 = vmatpush1.msra.mxu0 0.0
    %981 = vmatprep.subr.mxu0 0.0
    %982 = vmatpush1.msra.mxu0 0.0
    %983 = vmatprep.subr.mxu0 0.0
    %984 = vmatpush1.msra.mxu0 0.0
    %985 = vmatprep.subr.mxu0 0.0
    %986 = vmatpush1.msra.mxu0 0.0
    %987 = vmatprep.subr.mxu0 0.0
    %988 = vmatpush1.msra.mxu0 0.0
    %989 = vmatprep.subr.mxu0 0.0
    %990 = vmatpush1.msra.mxu0 0.0
    %991 = vmatprep.subr.mxu0 0.0
    %992 = vmatpush1.msra.mxu0 0.0
    %993 = vmatprep.subr.mxu0 0.0
    %994 = vmatpush1.msra.mxu0 0.0
    %995 = vmatprep.subr.mxu0 0.0
    %996 = vmatpush1.msra.mxu0 0.0
    %997 = vmatprep.subr.mxu0 0.0
    %998 = vmatpush1.msra.mxu0 0.0
    %999 = vmatprep.mubr.f32.mxu0 0.0
    %1000 = vmatmul.mubr.f32.gmra.mrb[0].mxu0 %v920
    %v1001 = vpop.f32.mrb[0].mxu0
    %v1002 = vadd.f32 0.0, %v1001
    %v1003 = vpop.f32.mrb[0].mxu0
    %v1004 = vadd.f32 0.0, %v1003
    %1005 = vdwg.mxu0
    %1006 = vmatprep.subr.mxu0 %v49
    %1007 = vmatpush1.msra.mxu0 %v48
    %1008 = vmatprep.subr.mxu0 %v53
    %1009 = vmatpush1.msra.mxu0 %v52
    %1010 = vmatprep.subr.mxu0 %v57
    %1011 = vmatpush1.msra.mxu0 %v56
    %1012 = vmatprep.subr.mxu0 %v61
    %1013 = vmatpush1.msra.mxu0 %v60
    %1014 = vmatprep.subr.mxu0 %v65
    %1015 = vmatpush1.msra.mxu0 %v64
    %1016 = vmatprep.subr.mxu0 %v69
    %1017 = vmatpush1.msra.mxu0 %v68
    %1018 = vmatprep.subr.mxu0 %v73
    %1019 = vmatpush1.msra.mxu0 %v72
    %1020 = vmatprep.subr.mxu0 %v77
    %1021 = vmatpush1.msra.mxu0 %v76
    %1022 = vmatprep.subr.mxu0 %v81
    %1023 = vmatpush1.msra.mxu0 %v80
    %1024 = vmatprep.subr.mxu0 %v85
    %1025 = vmatpush1.msra.mxu0 %v84
    %1026 = vmatprep.subr.mxu0 %v89
    %1027 = vmatpush1.msra.mxu0 %v88
    %1028 = vmatprep.subr.mxu0 %v93
    %1029 = vmatpush1.msra.mxu0 %v92
    %1030 = vmatprep.subr.mxu0 %v97
    %1031 = vmatpush1.msra.mxu0 %v96
    %1032 = vmatprep.subr.mxu0 %v101
    %1033 = vmatpush1.msra.mxu0 %v100
    %1034 = vmatprep.subr.mxu0 %v105
    %1035 = vmatpush1.msra.mxu0 %v104
    %1036 = vmatprep.subr.mxu0 %v109
    %1037 = vmatpush1.msra.mxu0 %v108
    %1038 = vmatprep.subr.mxu0 0.0
    %1039 = vmatpush1.msra.mxu0 0.0
    %1040 = vmatprep.subr.mxu0 0.0
    %1041 = vmatpush1.msra.mxu0 0.0
    %1042 = vmatprep.subr.mxu0 0.0
    %1043 = vmatpush1.msra.mxu0 0.0
    %1044 = vmatprep.subr.mxu0 0.0
    %1045 = vmatpush1.msra.mxu0 0.0
    %1046 = vmatprep.subr.mxu0 0.0
    %1047 = vmatpush1.msra.mxu0 0.0
    %1048 = vmatprep.subr.mxu0 0.0
    %1049 = vmatpush1.msra.mxu0 0.0
    %1050 = vmatprep.subr.mxu0 0.0
    %1051 = vmatpush1.msra.mxu0 0.0
    %1052 = vmatprep.subr.mxu0 0.0
    %1053 = vmatpush1.msra.mxu0 0.0
    %1054 = vmatprep.subr.mxu0 0.0
    %1055 = vmatpush1.msra.mxu0 0.0
    %1056 = vmatprep.subr.mxu0 0.0
    %1057 = vmatpush1.msra.mxu0 0.0
    %1058 = vmatprep.subr.mxu0 0.0
    %1059 = vmatpush1.msra.mxu0 0.0
    %1060 = vmatprep.subr.mxu0 0.0
    %1061 = vmatpush1.msra.mxu0 0.0
    %1062 = vmatprep.subr.mxu0 0.0
    %1063 = vmatpush1.msra.mxu0 0.0
    %1064 = vmatprep.subr.mxu0 0.0
    %1065 = vmatpush1.msra.mxu0 0.0
    %1066 = vmatprep.subr.mxu0 0.0
    %1067 = vmatpush1.msra.mxu0 0.0
    %1068 = vmatprep.subr.mxu0 0.0
    %1069 = vmatpush1.msra.mxu0 0.0
    %1070 = vmatprep.mubr.f32.mxu0 0.0
    %1071 = vmatmul.mubr.f32.gmra.mrb[0].mxu0 %v920
    %v1072 = vpop.f32.mrb[0].mxu0
    %v1073 = vadd.f32 0.0, %v1072
    %v1074 = vpop.f32.mrb[0].mxu0
    %v1075 = vadd.f32 0.0, %v1074
    %1076 = vdwg.mxu0
    %v1077 = vadd.f32 %v931, %v1002
    %v1078 = vadd.f32 %v932, %v1004
    %v1079 = vadd.f32 %v933, %v1073
    %v1080 = vadd.f32 %v934, %v1075
    %s1081 = scalar_lea.vmem [#allocation2], 320
    %v1082 = vld [vmem:[%s1081] sm:$0xff]
    %v1083 = vld [vmem:[%s1081 + $0x8] sm:$0xff]
    %v1084 = vld [vmem:[%s1081 + $0x10] sm:$0xff]
    %v1085 = vld [vmem:[%s1081 + $0x18] sm:$0xff]
    %1086 = vmatprep.subr.mxu0 %v112
    %1087 = vmatpush1.msra.mxu0 %v111
    %1088 = vmatprep.subr.mxu0 %v116
    %1089 = vmatpush1.msra.mxu0 %v115
    %1090 = vmatprep.subr.mxu0 %v120
    %1091 = vmatpush1.msra.mxu0 %v119
    %1092 = vmatprep.subr.mxu0 %v124
    %1093 = vmatpush1.msra.mxu0 %v123
    %1094 = vmatprep.subr.mxu0 %v128
    %1095 = vmatpush1.msra.mxu0 %v127
    %1096 = vmatprep.subr.mxu0 %v132
    %1097 = vmatpush1.msra.mxu0 %v131
    %1098 = vmatprep.subr.mxu0 %v136
    %1099 = vmatpush1.msra.mxu0 %v135
    %1100 = vmatprep.subr.mxu0 %v140
    %1101 = vmatpush1.msra.mxu0 %v139
    %1102 = vmatprep.subr.mxu0 %v144
    %1103 = vmatpush1.msra.mxu0 %v143
    %1104 = vmatprep.subr.mxu0 %v148
    %1105 = vmatpush1.msra.mxu0 %v147
    %1106 = vmatprep.subr.mxu0 %v152
    %1107 = vmatpush1.msra.mxu0 %v151
    %1108 = vmatprep.subr.mxu0 %v156
    %1109 = vmatpush1.msra.mxu0 %v155
    %1110 = vmatprep.subr.mxu0 %v160
    %1111 = vmatpush1.msra.mxu0 %v159
    %1112 = vmatprep.subr.mxu0 %v164
    %1113 = vmatpush1.msra.mxu0 %v163
    %1114 = vmatprep.subr.mxu0 %v168
    %1115 = vmatpush1.msra.mxu0 %v167
    %1116 = vmatprep.subr.mxu0 %v172
    %1117 = vmatpush1.msra.mxu0 %v171
    %1118 = vmatprep.subr.mxu0 0.0
    %1119 = vmatpush1.msra.mxu0 0.0
    %1120 = vmatprep.subr.mxu0 0.0
    %1121 = vmatpush1.msra.mxu0 0.0
    %1122 = vmatprep.subr.mxu0 0.0
    %1123 = vmatpush1.msra.mxu0 0.0
    %1124 = vmatprep.subr.mxu0 0.0
    %1125 = vmatpush1.msra.mxu0 0.0
    %1126 = vmatprep.subr.mxu0 0.0
    %1127 = vmatpush1.msra.mxu0 0.0
    %1128 = vmatprep.subr.mxu0 0.0
    %1129 = vmatpush1.msra.mxu0 0.0
    %1130 = vmatprep.subr.mxu0 0.0
    %1131 = vmatpush1.msra.mxu0 0.0
    %1132 = vmatprep.subr.mxu0 0.0
    %1133 = vmatpush1.msra.mxu0 0.0
    %1134 = vmatprep.subr.mxu0 0.0
    %1135 = vmatpush1.msra.mxu0 0.0
    %1136 = vmatprep.subr.mxu0 0.0
    %1137 = vmatpush1.msra.mxu0 0.0
    %1138 = vmatprep.subr.mxu0 0.0
    %1139 = vmatpush1.msra.mxu0 0.0
    %1140 = vmatprep.subr.mxu0 0.0
    %1141 = vmatpush1.msra.mxu0 0.0
    %1142 = vmatprep.subr.mxu0 0.0
    %1143 = vmatpush1.msra.mxu0 0.0
    %1144 = vmatprep.subr.mxu0 0.0
    %1145 = vmatpush1.msra.mxu0 0.0
    %1146 = vmatprep.subr.mxu0 0.0
    %1147 = vmatpush1.msra.mxu0 0.0
    %1148 = vmatprep.subr.mxu0 0.0
    %1149 = vmatpush1.msra.mxu0 0.0
    %1150 = vmatprep.mubr.f32.mxu0 0.0
    %1151 = vmatmul.mubr.f32.gmra.mrb[0].mxu0 %v926
    %v1152 = vpop.f32.mrb[0].mxu0
    %v1153 = vadd.f32 0.0, %v1152
    %v1154 = vpop.f32.mrb[0].mxu0
    %v1155 = vadd.f32 0.0, %v1154
    %1156 = vdwg.mxu0
    %1157 = vmatprep.subr.mxu0 %v114
    %1158 = vmatpush1.msra.mxu0 %v113
    %1159 = vmatprep.subr.mxu0 %v118
    %1160 = vmatpush1.msra.mxu0 %v117
    %1161 = vmatprep.subr.mxu0 %v122
    %1162 = vmatpush1.msra.mxu0 %v121
    %1163 = vmatprep.subr.mxu0 %v126
    %1164 = vmatpush1.msra.mxu0 %v125
    %1165 = vmatprep.subr.mxu0 %v130
    %1166 = vmatpush1.msra.mxu0 %v129
    %1167 = vmatprep.subr.mxu0 %v134
    %1168 = vmatpush1.msra.mxu0 %v133
    %1169 = vmatprep.subr.mxu0 %v138
    %1170 = vmatpush1.msra.mxu0 %v137
    %1171 = vmatprep.subr.mxu0 %v142
    %1172 = vmatpush1.msra.mxu0 %v141
    %1173 = vmatprep.subr.mxu0 %v146
    %1174 = vmatpush1.msra.mxu0 %v145
    %1175 = vmatprep.subr.mxu0 %v150
    %1176 = vmatpush1.msra.mxu0 %v149
    %1177 = vmatprep.subr.mxu0 %v154
    %1178 = vmatpush1.msra.mxu0 %v153
    %1179 = vmatprep.subr.mxu0 %v158
    %1180 = vmatpush1.msra.mxu0 %v157
    %1181 = vmatprep.subr.mxu0 %v162
    %1182 = vmatpush1.msra.mxu0 %v161
    %1183 = vmatprep.subr.mxu0 %v166
    %1184 = vmatpush1.msra.mxu0 %v165
    %1185 = vmatprep.subr.mxu0 %v170
    %1186 = vmatpush1.msra.mxu0 %v169
    %1187 = vmatprep.subr.mxu0 %v174
    %1188 = vmatpush1.msra.mxu0 %v173
    %1189 = vmatprep.subr.mxu0 0.0
    %1190 = vmatpush1.msra.mxu0 0.0
    %1191 = vmatprep.subr.mxu0 0.0
    %1192 = vmatpush1.msra.mxu0 0.0
    %1193 = vmatprep.subr.mxu0 0.0
    %1194 = vmatpush1.msra.mxu0 0.0
    %1195 = vmatprep.subr.mxu0 0.0
    %1196 = vmatpush1.msra.mxu0 0.0
    %1197 = vmatprep.subr.mxu0 0.0
    %1198 = vmatpush1.msra.mxu0 0.0
    %1199 = vmatprep.subr.mxu0 0.0
    %1200 = vmatpush1.msra.mxu0 0.0
    %1201 = vmatprep.subr.mxu0 0.0
    %1202 = vmatpush1.msra.mxu0 0.0
    %1203 = vmatprep.subr.mxu0 0.0
    %1204 = vmatpush1.msra.mxu0 0.0
    %1205 = vmatprep.subr.mxu0 0.0
    %1206 = vmatpush1.msra.mxu0 0.0
    %1207 = vmatprep.subr.mxu0 0.0
    %1208 = vmatpush1.msra.mxu0 0.0
    %1209 = vmatprep.subr.mxu0 0.0
    %1210 = vmatpush1.msra.mxu0 0.0
    %1211 = vmatprep.subr.mxu0 0.0
    %1212 = vmatpush1.msra.mxu0 0.0
    %1213 = vmatprep.subr.mxu0 0.0
    %1214 = vmatpush1.msra.mxu0 0.0
    %1215 = vmatprep.subr.mxu0 0.0
    %1216 = vmatpush1.msra.mxu0 0.0
    %1217 = vmatprep.subr.mxu0 0.0
    %1218 = vmatpush1.msra.mxu0 0.0
    %1219 = vmatprep.subr.mxu0 0.0
    %1220 = vmatpush1.msra.mxu0 0.0
    %1221 = vmatprep.mubr.f32.mxu0 0.0
    %1222 = vmatmul.mubr.f32.gmra.mrb[0].mxu0 %v926
    %v1223 = vpop.f32.mrb[0].mxu0
    %v1224 = vadd.f32 0.0, %v1223
    %v1225 = vpop.f32.mrb[0].mxu0
    %v1226 = vadd.f32 0.0, %v1225
    %1227 = vdwg.mxu0
    %v1228 = vadd.f32 %v1082, %v1153
    %v1229 = vadd.f32 %v1083, %v1155
    %v1230 = vadd.f32 %v1084, %v1224
    %v1231 = vadd.f32 %v1085, %v1226
    %s1232 = scalar_lea.vmem %s2, 16
    %v1233 = vld [vmem:[%s1232] sm:$0xff]
    %s1234 = scalar_lea.vmem %s2, 80
    %v1235 = vld [vmem:[%s1234] sm:$0xff]
    %v1236 = vxor.u32 %v1077, 2147483648
    %v1237 = vmul.f32 %v1236, 1.442695
    %v1238 = vpow.pop %v1237
    %v1239 = vadd.f32 %v1238, 1.0
    %v1240 = vrcp.pop %v1239
    %v1241 = vmul.f32 1.0, %v1240
    %v1242 = vxor.u32 %v1078, 2147483648
    %v1243 = vmul.f32 %v1242, 1.442695
    %v1244 = vpow.pop %v1243
    %v1245 = vadd.f32 %v1244, 1.0
    %v1246 = vrcp.pop %v1245
    %v1247 = vmul.f32 1.0, %v1246
    %v1248 = vtanh.pop %v1079
    %v1249 = vxor.u32 %v1080, 2147483648
    %v1250 = vmul.f32 %v1249, 1.442695
    %v1251 = vpow.pop %v1250
    %v1252 = vadd.f32 %v1251, 1.0
    %v1253 = vrcp.pop %v1252
    %v1254 = vmul.f32 1.0, %v1253
    %v1255 = vmul.f32 %v1247, %v923
    %v1256 = vmul.f32 %v1241, %v1248
    %v1257 = vadd.f32 %v1255, %v1256
    %v1258 = vtanh.pop %v1257
    %v1259 = vmul.f32 %v1254, %v1258
    %v1260 = vxor.u32 %v1228, 2147483648
    %v1261 = vmul.f32 %v1260, 1.442695
    %v1262 = vpow.pop %v1261
    %v1263 = vadd.f32 %v1262, 1.0
    %v1264 = vrcp.pop %v1263
    %v1265 = vmul.f32 1.0, %v1264
    %v1266 = vxor.u32 %v1229, 2147483648
    %v1267 = vmul.f32 %v1266, 1.442695
    %v1268 = vpow.pop %v1267
    %v1269 = vadd.f32 %v1268, 1.0
    %v1270 = vrcp.pop %v1269
    %v1271 = vmul.f32 1.0, %v1270
    %v1272 = vtanh.pop %v1230
    %v1273 = vxor.u32 %v1231, 2147483648
    %v1274 = vmul.f32 %v1273, 1.442695
    %v1275 = vpow.pop %v1274
    %v1276 = vadd.f32 %v1275, 1.0
    %v1277 = vrcp.pop %v1276
    %v1278 = vmul.f32 1.0, %v1277
    %v1279 = vmul.f32 %v1271, %v929
    %v1280 = vmul.f32 %v1265, %v1272
    %v1281 = vadd.f32 %v1279, %v1280
    %v1282 = vtanh.pop %v1281
    %v1283 = vmul.f32 %v1278, %v1282
    %1285 = vset.pattern.permute.xlu0 0
    %1286 = vperm.xlu0 %1285, %v1233
    %v1287 = vpop.permute.xlu0 %1286
    %v1289 = vmul.f32 %v1259, %v1287
    %s1290 = scalar_lea.vmem [#allocation7], 32
    %1291 = vst [vmem:[%s1290] sm:$0xff] %v1289
    %1293 = vset.pattern.permute.xlu0 0
    %1294 = vperm.xlu0 %1293, %v1235
    %v1295 = vpop.permute.xlu0 %1294
    %v1297 = vmul.f32 %v1283, %v1295
    %s1298 = scalar_lea.vmem [#allocation7], 80
    %1299 = vst [vmem:[%s1298 + $0x8] sm:$0xff] %v1297
    %v1300 = vsub.f32 %v1259, %v920
    %v1301 = vmul.f32 %v1287, %v1300
    %v1302 = vadd.f32 %v920, %v1301
    %v1303 = vsub.f32 %v1257, %v923
    %v1304 = vmul.f32 %v1287, %v1303
    %v1305 = vadd.f32 %v923, %v1304
    %v1306 = vsub.f32 %v1283, %v926
    %v1307 = vmul.f32 %v1295, %v1306
    %v1308 = vadd.f32 %v926, %v1307
    %v1309 = vsub.f32 %v1281, %v929
    %v1310 = vmul.f32 %v1295, %v1309
    %v1311 = vadd.f32 %v929, %v1310
    %s1312 = scalar_lea.vmem [#allocation2], 96
    %v1313 = vld [vmem:[%s1312] sm:$0xff]
    %v1314 = vld [vmem:[%s1312 + $0x8] sm:$0xff]
    %v1315 = vld [vmem:[%s1312 + $0x10] sm:$0xff]
    %v1316 = vld [vmem:[%s1312 + $0x18] sm:$0xff]
    %1317 = vmatprep.subr.mxu0 %v47
    %1318 = vmatpush1.msra.mxu0 %v46
    %1319 = vmatprep.subr.mxu0 %v51
    %1320 = vmatpush1.msra.mxu0 %v50
    %1321 = vmatprep.subr.mxu0 %v55
    %1322 = vmatpush1.msra.mxu0 %v54
    %1323 = vmatprep.subr.mxu0 %v59
    %1324 = vmatpush1.msra.mxu0 %v58
    %1325 = vmatprep.subr.mxu0 %v63
    %1326 = vmatpush1.msra.mxu0 %v62
    %1327 = vmatprep.subr.mxu0 %v67
    %1328 = vmatpush1.msra.mxu0 %v66
    %1329 = vmatprep.subr.mxu0 %v71
    %1330 = vmatpush1.msra.mxu0 %v70
    %1331 = vmatprep.subr.mxu0 %v75
    %1332 = vmatpush1.msra.mxu0 %v74
    %1333 = vmatprep.subr.mxu0 %v79
    %1334 = vmatpush1.msra.mxu0 %v78
    %1335 = vmatprep.subr.mxu0 %v83
    %1336 = vmatpush1.msra.mxu0 %v82
    %1337 = vmatprep.subr.mxu0 %v87
    %1338 = vmatpush1.msra.mxu0 %v86
    %1339 = vmatprep.subr.mxu0 %v91
    %1340 = vmatpush1.msra.mxu0 %v90
    %1341 = vmatprep.subr.mxu0 %v95
    %1342 = vmatpush1.msra.mxu0 %v94
    %1343 = vmatprep.subr.mxu0 %v99
    %1344 = vmatpush1.msra.mxu0 %v98
    %1345 = vmatprep.subr.mxu0 %v103
    %1346 = vmatpush1.msra.mxu0 %v102
    %1347 = vmatprep.subr.mxu0 %v107
    %1348 = vmatpush1.msra.mxu0 %v106
    %1349 = vmatprep.subr.mxu0 0.0
    %1350 = vmatpush1.msra.mxu0 0.0
    %1351 = vmatprep.subr.mxu0 0.0
    %1352 = vmatpush1.msra.mxu0 0.0
    %1353 = vmatprep.subr.mxu0 0.0
    %1354 = vmatpush1.msra.mxu0 0.0
    %1355 = vmatprep.subr.mxu0 0.0
    %1356 = vmatpush1.msra.mxu0 0.0
    %1357 = vmatprep.subr.mxu0 0.0
    %1358 = vmatpush1.msra.mxu0 0.0
    %1359 = vmatprep.subr.mxu0 0.0
    %1360 = vmatpush1.msra.mxu0 0.0
    %1361 = vmatprep.subr.mxu0 0.0
    %1362 = vmatpush1.msra.mxu0 0.0
    %1363 = vmatprep.subr.mxu0 0.0
    %1364 = vmatpush1.msra.mxu0 0.0
    %1365 = vmatprep.subr.mxu0 0.0
    %1366 = vmatpush1.msra.mxu0 0.0
    %1367 = vmatprep.subr.mxu0 0.0
    %1368 = vmatpush1.msra.mxu0 0.0
    %1369 = vmatprep.subr.mxu0 0.0
    %1370 = vmatpush1.msra.mxu0 0.0
    %1371 = vmatprep.subr.mxu0 0.0
    %1372 = vmatpush1.msra.mxu0 0.0
    %1373 = vmatprep.subr.mxu0 0.0
    %1374 = vmatpush1.msra.mxu0 0.0
    %1375 = vmatprep.subr.mxu0 0.0
    %1376 = vmatpush1.msra.mxu0 0.0
    %1377 = vmatprep.subr.mxu0 0.0
    %1378 = vmatpush1.msra.mxu0 0.0
    %1379 = vmatprep.subr.mxu0 0.0
    %1380 = vmatpush1.msra.mxu0 0.0
    %1381 = vmatprep.mubr.f32.mxu0 0.0
    %1382 = vmatmul.mubr.f32.gmra.mrb[0].mxu0 %v1302
    %v1383 = vpop.f32.mrb[0].mxu0
    %v1384 = vadd.f32 0.0, %v1383
    %v1385 = vpop.f32.mrb[0].mxu0
    %v1386 = vadd.f32 0.0, %v1385
    %1387 = vdwg.mxu0
    %1388 = vmatprep.subr.mxu0 %v49
    %1389 = vmatpush1.msra.mxu0 %v48
    %1390 = vmatprep.subr.mxu0 %v53
    %1391 = vmatpush1.msra.mxu0 %v52
    %1392 = vmatprep.subr.mxu0 %v57
    %1393 = vmatpush1.msra.mxu0 %v56
    %1394 = vmatprep.subr.mxu0 %v61
    %1395 = vmatpush1.msra.mxu0 %v60
    %1396 = vmatprep.subr.mxu0 %v65
    %1397 = vmatpush1.msra.mxu0 %v64
    %1398 = vmatprep.subr.mxu0 %v69
    %1399 = vmatpush1.msra.mxu0 %v68
    %1400 = vmatprep.subr.mxu0 %v73
    %1401 = vmatpush1.msra.mxu0 %v72
    %1402 = vmatprep.subr.mxu0 %v77
    %1403 = vmatpush1.msra.mxu0 %v76
    %1404 = vmatprep.subr.mxu0 %v81
    %1405 = vmatpush1.msra.mxu0 %v80
    %1406 = vmatprep.subr.mxu0 %v85
    %1407 = vmatpush1.msra.mxu0 %v84
    %1408 = vmatprep.subr.mxu0 %v89
    %1409 = vmatpush1.msra.mxu0 %v88
    %1410 = vmatprep.subr.mxu0 %v93
    %1411 = vmatpush1.msra.mxu0 %v92
    %1412 = vmatprep.subr.mxu0 %v97
    %1413 = vmatpush1.msra.mxu0 %v96
    %1414 = vmatprep.subr.mxu0 %v101
    %1415 = vmatpush1.msra.mxu0 %v100
    %1416 = vmatprep.subr.mxu0 %v105
    %1417 = vmatpush1.msra.mxu0 %v104
    %1418 = vmatprep.subr.mxu0 %v109
    %1419 = vmatpush1.msra.mxu0 %v108
    %1420 = vmatprep.subr.mxu0 0.0
    %1421 = vmatpush1.msra.mxu0 0.0
    %1422 = vmatprep.subr.mxu0 0.0
    %1423 = vmatpush1.msra.mxu0 0.0
    %1424 = vmatprep.subr.mxu0 0.0
    %1425 = vmatpush1.msra.mxu0 0.0
    %1426 = vmatprep.subr.mxu0 0.0
    %1427 = vmatpush1.msra.mxu0 0.0
    %1428 = vmatprep.subr.mxu0 0.0
    %1429 = vmatpush1.msra.mxu0 0.0
    %1430 = vmatprep.subr.mxu0 0.0
    %1431 = vmatpush1.msra.mxu0 0.0
    %1432 = vmatprep.subr.mxu0 0.0
    %1433 = vmatpush1.msra.mxu0 0.0
    %1434 = vmatprep.subr.mxu0 0.0
    %1435 = vmatpush1.msra.mxu0 0.0
    %1436 = vmatprep.subr.mxu0 0.0
    %1437 = vmatpush1.msra.mxu0 0.0
    %1438 = vmatprep.subr.mxu0 0.0
    %1439 = vmatpush1.msra.mxu0 0.0
    %1440 = vmatprep.subr.mxu0 0.0
    %1441 = vmatpush1.msra.mxu0 0.0
    %1442 = vmatprep.subr.mxu0 0.0
    %1443 = vmatpush1.msra.mxu0 0.0
    %1444 = vmatprep.subr.mxu0 0.0
    %1445 = vmatpush1.msra.mxu0 0.0
    %1446 = vmatprep.subr.mxu0 0.0
    %1447 = vmatpush1.msra.mxu0 0.0
    %1448 = vmatprep.subr.mxu0 0.0
    %1449 = vmatpush1.msra.mxu0 0.0
    %1450 = vmatprep.subr.mxu0 0.0
    %1451 = vmatpush1.msra.mxu0 0.0
    %1452 = vmatprep.mubr.f32.mxu0 0.0
    %1453 = vmatmul.mubr.f32.gmra.mrb[0].mxu0 %v1302
    %v1454 = vpop.f32.mrb[0].mxu0
    %v1455 = vadd.f32 0.0, %v1454
    %v1456 = vpop.f32.mrb[0].mxu0
    %v1457 = vadd.f32 0.0, %v1456
    %1458 = vdwg.mxu0
    %v1459 = vadd.f32 %v1313, %v1384
    %v1460 = vadd.f32 %v1314, %v1386
    %v1461 = vadd.f32 %v1315, %v1455
    %v1462 = vadd.f32 %v1316, %v1457
    %s1463 = scalar_lea.vmem [#allocation2], 352
    %v1464 = vld [vmem:[%s1463] sm:$0xff]
    %v1465 = vld [vmem:[%s1463 + $0x8] sm:$0xff]
    %v1466 = vld [vmem:[%s1463 + $0x10] sm:$0xff]
    %v1467 = vld [vmem:[%s1463 + $0x18] sm:$0xff]
    %1468 = vmatprep.subr.mxu0 %v112
    %1469 = vmatpush1.msra.mxu0 %v111
    %1470 = vmatprep.subr.mxu0 %v116
    %1471 = vmatpush1.msra.mxu0 %v115
    %1472 = vmatprep.subr.mxu0 %v120
    %1473 = vmatpush1.msra.mxu0 %v119
    %1474 = vmatprep.subr.mxu0 %v124
    %1475 = vmatpush1.msra.mxu0 %v123
    %1476 = vmatprep.subr.mxu0 %v128
    %1477 = vmatpush1.msra.mxu0 %v127
    %1478 = vmatprep.subr.mxu0 %v132
    %1479 = vmatpush1.msra.mxu0 %v131
    %1480 = vmatprep.subr.mxu0 %v136
    %1481 = vmatpush1.msra.mxu0 %v135
    %1482 = vmatprep.subr.mxu0 %v140
    %1483 = vmatpush1.msra.mxu0 %v139
    %1484 = vmatprep.subr.mxu0 %v144
    %1485 = vmatpush1.msra.mxu0 %v143
    %1486 = vmatprep.subr.mxu0 %v148
    %1487 = vmatpush1.msra.mxu0 %v147
    %1488 = vmatprep.subr.mxu0 %v152
    %1489 = vmatpush1.msra.mxu0 %v151
    %1490 = vmatprep.subr.mxu0 %v156
    %1491 = vmatpush1.msra.mxu0 %v155
    %1492 = vmatprep.subr.mxu0 %v160
    %1493 = vmatpush1.msra.mxu0 %v159
    %1494 = vmatprep.subr.mxu0 %v164
    %1495 = vmatpush1.msra.mxu0 %v163
    %1496 = vmatprep.subr.mxu0 %v168
    %1497 = vmatpush1.msra.mxu0 %v167
    %1498 = vmatprep.subr.mxu0 %v172
    %1499 = vmatpush1.msra.mxu0 %v171
    %1500 = vmatprep.subr.mxu0 0.0
    %1501 = vmatpush1.msra.mxu0 0.0
    %1502 = vmatprep.subr.mxu0 0.0
    %1503 = vmatpush1.msra.mxu0 0.0
    %1504 = vmatprep.subr.mxu0 0.0
    %1505 = vmatpush1.msra.mxu0 0.0
    %1506 = vmatprep.subr.mxu0 0.0
    %1507 = vmatpush1.msra.mxu0 0.0
    %1508 = vmatprep.subr.mxu0 0.0
    %1509 = vmatpush1.msra.mxu0 0.0
    %1510 = vmatprep.subr.mxu0 0.0
    %1511 = vmatpush1.msra.mxu0 0.0
    %1512 = vmatprep.subr.mxu0 0.0
    %1513 = vmatpush1.msra.mxu0 0.0
    %1514 = vmatprep.subr.mxu0 0.0
    %1515 = vmatpush1.msra.mxu0 0.0
    %1516 = vmatprep.subr.mxu0 0.0
    %1517 = vmatpush1.msra.mxu0 0.0
    %1518 = vmatprep.subr.mxu0 0.0
    %1519 = vmatpush1.msra.mxu0 0.0
    %1520 = vmatprep.subr.mxu0 0.0
    %1521 = vmatpush1.msra.mxu0 0.0
    %1522 = vmatprep.subr.mxu0 0.0
    %1523 = vmatpush1.msra.mxu0 0.0
    %1524 = vmatprep.subr.mxu0 0.0
    %1525 = vmatpush1.msra.mxu0 0.0
    %1526 = vmatprep.subr.mxu0 0.0
    %1527 = vmatpush1.msra.mxu0 0.0
    %1528 = vmatprep.subr.mxu0 0.0
    %1529 = vmatpush1.msra.mxu0 0.0
    %1530 = vmatprep.subr.mxu0 0.0
    %1531 = vmatpush1.msra.mxu0 0.0
    %1532 = vmatprep.mubr.f32.mxu0 0.0
    %1533 = vmatmul.mubr.f32.gmra.mrb[0].mxu0 %v1308
    %v1534 = vpop.f32.mrb[0].mxu0
    %v1535 = vadd.f32 0.0, %v1534
    %v1536 = vpop.f32.mrb[0].mxu0
    %v1537 = vadd.f32 0.0, %v1536
    %1538 = vdwg.mxu0
    %1539 = vmatprep.subr.mxu0 %v114
    %1540 = vmatpush1.msra.mxu0 %v113
    %1541 = vmatprep.subr.mxu0 %v118
    %1542 = vmatpush1.msra.mxu0 %v117
    %1543 = vmatprep.subr.mxu0 %v122
    %1544 = vmatpush1.msra.mxu0 %v121
    %1545 = vmatprep.subr.mxu0 %v126
    %1546 = vmatpush1.msra.mxu0 %v125
    %1547 = vmatprep.subr.mxu0 %v130
    %1548 = vmatpush1.msra.mxu0 %v129
    %1549 = vmatprep.subr.mxu0 %v134
    %1550 = vmatpush1.msra.mxu0 %v133
    %1551 = vmatprep.subr.mxu0 %v138
    %1552 = vmatpush1.msra.mxu0 %v137
    %1553 = vmatprep.subr.mxu0 %v142
    %1554 = vmatpush1.msra.mxu0 %v141
    %1555 = vmatprep.subr.mxu0 %v146
    %1556 = vmatpush1.msra.mxu0 %v145
    %1557 = vmatprep.subr.mxu0 %v150
    %1558 = vmatpush1.msra.mxu0 %v149
    %1559 = vmatprep.subr.mxu0 %v154
    %1560 = vmatpush1.msra.mxu0 %v153
    %1561 = vmatprep.subr.mxu0 %v158
    %1562 = vmatpush1.msra.mxu0 %v157
    %1563 = vmatprep.subr.mxu0 %v162
    %1564 = vmatpush1.msra.mxu0 %v161
    %1565 = vmatprep.subr.mxu0 %v166
    %1566 = vmatpush1.msra.mxu0 %v165
    %1567 = vmatprep.subr.mxu0 %v170
    %1568 = vmatpush1.msra.mxu0 %v169
    %1569 = vmatprep.subr.mxu0 %v174
    %1570 = vmatpush1.msra.mxu0 %v173
    %1571 = vmatprep.subr.mxu0 0.0
    %1572 = vmatpush1.msra.mxu0 0.0
    %1573 = vmatprep.subr.mxu0 0.0
    %1574 = vmatpush1.msra.mxu0 0.0
    %1575 = vmatprep.subr.mxu0 0.0
    %1576 = vmatpush1.msra.mxu0 0.0
    %1577 = vmatprep.subr.mxu0 0.0
    %1578 = vmatpush1.msra.mxu0 0.0
    %1579 = vmatprep.subr.mxu0 0.0
    %1580 = vmatpush1.msra.mxu0 0.0
    %1581 = vmatprep.subr.mxu0 0.0
    %1582 = vmatpush1.msra.mxu0 0.0
    %1583 = vmatprep.subr.mxu0 0.0
    %1584 = vmatpush1.msra.mxu0 0.0
    %1585 = vmatprep.subr.mxu0 0.0
    %1586 = vmatpush1.msra.mxu0 0.0
    %1587 = vmatprep.subr.mxu0 0.0
    %1588 = vmatpush1.msra.mxu0 0.0
    %1589 = vmatprep.subr.mxu0 0.0
    %1590 = vmatpush1.msra.mxu0 0.0
    %1591 = vmatprep.subr.mxu0 0.0
    %1592 = vmatpush1.msra.mxu0 0.0
    %1593 = vmatprep.subr.mxu0 0.0
    %1594 = vmatpush1.msra.mxu0 0.0
    %1595 = vmatprep.subr.mxu0 0.0
    %1596 = vmatpush1.msra.mxu0 0.0
    %1597 = vmatprep.subr.mxu0 0.0
    %1598 = vmatpush1.msra.mxu0 0.0
    %1599 = vmatprep.subr.mxu0 0.0
    %1600 = vmatpush1.msra.mxu0 0.0
    %1601 = vmatprep.subr.mxu0 0.0
    %1602 = vmatpush1.msra.mxu0 0.0
    %1603 = vmatprep.mubr.f32.mxu0 0.0
    %1604 = vmatmul.mubr.f32.gmra.mrb[0].mxu0 %v1308
    %v1605 = vpop.f32.mrb[0].mxu0
    %v1606 = vadd.f32 0.0, %v1605
    %v1607 = vpop.f32.mrb[0].mxu0
    %v1608 = vadd.f32 0.0, %v1607
    %1609 = vdwg.mxu0
    %v1610 = vadd.f32 %v1464, %v1535
    %v1611 = vadd.f32 %v1465, %v1537
    %v1612 = vadd.f32 %v1466, %v1606
    %v1613 = vadd.f32 %v1467, %v1608
    %s1614 = scalar_lea.vmem %s2, 24
    %v1615 = vld [vmem:[%s1614] sm:$0xff]
    %s1616 = scalar_lea.vmem %s2, 88
    %v1617 = vld [vmem:[%s1616] sm:$0xff]
    %v1618 = vxor.u32 %v1459, 2147483648
    %v1619 = vmul.f32 %v1618, 1.442695
    %v1620 = vpow.pop %v1619
    %v1621 = vadd.f32 %v1620, 1.0
    %v1622 = vrcp.pop %v1621
    %v1623 = vmul.f32 1.0, %v1622
    %v1624 = vxor.u32 %v1460, 2147483648
    %v1625 = vmul.f32 %v1624, 1.442695
    %v1626 = vpow.pop %v1625
    %v1627 = vadd.f32 %v1626, 1.0
    %v1628 = vrcp.pop %v1627
    %v1629 = vmul.f32 1.0, %v1628
    %v1630 = vtanh.pop %v1461
    %v1631 = vxor.u32 %v1462, 2147483648
    %v1632 = vmul.f32 %v1631, 1.442695
    %v1633 = vpow.pop %v1632
    %v1634 = vadd.f32 %v1633, 1.0
    %v1635 = vrcp.pop %v1634
    %v1636 = vmul.f32 1.0, %v1635
    %v1637 = vmul.f32 %v1629, %v1305
    %v1638 = vmul.f32 %v1623, %v1630
    %v1639 = vadd.f32 %v1637, %v1638
    %v1640 = vtanh.pop %v1639
    %v1641 = vmul.f32 %v1636, %v1640
    %v1642 = vxor.u32 %v1610, 2147483648
    %v1643 = vmul.f32 %v1642, 1.442695
    %v1644 = vpow.pop %v1643
    %v1645 = vadd.f32 %v1644, 1.0
    %v1646 = vrcp.pop %v1645
    %v1647 = vmul.f32 1.0, %v1646
    %v1648 = vxor.u32 %v1611, 2147483648
    %v1649 = vmul.f32 %v1648, 1.442695
    %v1650 = vpow.pop %v1649
    %v1651 = vadd.f32 %v1650, 1.0
    %v1652 = vrcp.pop %v1651
    %v1653 = vmul.f32 1.0, %v1652
    %v1654 = vtanh.pop %v1612
    %v1655 = vxor.u32 %v1613, 2147483648
    %v1656 = vmul.f32 %v1655, 1.442695
    %v1657 = vpow.pop %v1656
    %v1658 = vadd.f32 %v1657, 1.0
    %v1659 = vrcp.pop %v1658
    %v1660 = vmul.f32 1.0, %v1659
    %v1661 = vmul.f32 %v1653, %v1311
    %v1662 = vmul.f32 %v1647, %v1654
    %v1663 = vadd.f32 %v1661, %v1662
    %v1664 = vtanh.pop %v1663
    %v1665 = vmul.f32 %v1660, %v1664
    %1667 = vset.pattern.permute.xlu0 0
    %1668 = vperm.xlu0 %1667, %v1615
    %v1669 = vpop.permute.xlu0 %1668
    %v1671 = vmul.f32 %v1641, %v1669
    %s1672 = scalar_lea.vmem [#allocation7], 48
    %1673 = vst [vmem:[%s1672] sm:$0xff] %v1671
    %1675 = vset.pattern.permute.xlu0 0
    %1676 = vperm.xlu0 %1675, %v1617
    %v1677 = vpop.permute.xlu0 %1676
    %v1679 = vmul.f32 %v1665, %v1677
    %s1680 = scalar_lea.vmem [#allocation7], 64
    %1681 = vst [vmem:[%s1680 + $0x8] sm:$0xff] %v1679
    %v1682 = vsub.f32 %v1641, %v1302
    %v1683 = vmul.f32 %v1669, %v1682
    %v1684 = vadd.f32 %v1302, %v1683
    %v1685 = vsub.f32 %v1639, %v1305
    %v1686 = vmul.f32 %v1669, %v1685
    %v1687 = vadd.f32 %v1305, %v1686
    %v1688 = vsub.f32 %v1665, %v1308
    %v1689 = vmul.f32 %v1677, %v1688
    %v1690 = vadd.f32 %v1308, %v1689
    %v1691 = vsub.f32 %v1663, %v1311
    %v1692 = vmul.f32 %v1677, %v1691
    %v1693 = vadd.f32 %v1311, %v1692
    %s1694 = scalar_lea.vmem [#allocation2], 128
    %v1695 = vld [vmem:[%s1694] sm:$0xff]
    %v1696 = vld [vmem:[%s1694 + $0x8] sm:$0xff]
    %v1697 = vld [vmem:[%s1694 + $0x10] sm:$0xff]
    %v1698 = vld [vmem:[%s1694 + $0x18] sm:$0xff]
    %1699 = vmatprep.subr.mxu0 %v47
    %1700 = vmatpush1.msra.mxu0 %v46
    %1701 = vmatprep.subr.mxu0 %v51
    %1702 = vmatpush1.msra.mxu0 %v50
    %1703 = vmatprep.subr.mxu0 %v55
    %1704 = vmatpush1.msra.mxu0 %v54
    %1705 = vmatprep.subr.mxu0 %v59
    %1706 = vmatpush1.msra.mxu0 %v58
    %1707 = vmatprep.subr.mxu0 %v63
    %1708 = vmatpush1.msra.mxu0 %v62
    %1709 = vmatprep.subr.mxu0 %v67
    %1710 = vmatpush1.msra.mxu0 %v66
    %1711 = vmatprep.subr.mxu0 %v71
    %1712 = vmatpush1.msra.mxu0 %v70
    %1713 = vmatprep.subr.mxu0 %v75
    %1714 = vmatpush1.msra.mxu0 %v74
    %1715 = vmatprep.subr.mxu0 %v79
    %1716 = vmatpush1.msra.mxu0 %v78
    %1717 = vmatprep.subr.mxu0 %v83
    %1718 = vmatpush1.msra.mxu0 %v82
    %1719 = vmatprep.subr.mxu0 %v87
    %1720 = vmatpush1.msra.mxu0 %v86
    %1721 = vmatprep.subr.mxu0 %v91
    %1722 = vmatpush1.msra.mxu0 %v90
    %1723 = vmatprep.subr.mxu0 %v95
    %1724 = vmatpush1.msra.mxu0 %v94
    %1725 = vmatprep.subr.mxu0 %v99
    %1726 = vmatpush1.msra.mxu0 %v98
    %1727 = vmatprep.subr.mxu0 %v103
    %1728 = vmatpush1.msra.mxu0 %v102
    %1729 = vmatprep.subr.mxu0 %v107
    %1730 = vmatpush1.msra.mxu0 %v106
    %1731 = vmatprep.subr.mxu0 0.0
    %1732 = vmatpush1.msra.mxu0 0.0
    %1733 = vmatprep.subr.mxu0 0.0
    %1734 = vmatpush1.msra.mxu0 0.0
    %1735 = vmatprep.subr.mxu0 0.0
    %1736 = vmatpush1.msra.mxu0 0.0
    %1737 = vmatprep.subr.mxu0 0.0
    %1738 = vmatpush1.msra.mxu0 0.0
    %1739 = vmatprep.subr.mxu0 0.0
    %1740 = vmatpush1.msra.mxu0 0.0
    %1741 = vmatprep.subr.mxu0 0.0
    %1742 = vmatpush1.msra.mxu0 0.0
    %1743 = vmatprep.subr.mxu0 0.0
    %1744 = vmatpush1.msra.mxu0 0.0
    %1745 = vmatprep.subr.mxu0 0.0
    %1746 = vmatpush1.msra.mxu0 0.0
    %1747 = vmatprep.subr.mxu0 0.0
    %1748 = vmatpush1.msra.mxu0 0.0
    %1749 = vmatprep.subr.mxu0 0.0
    %1750 = vmatpush1.msra.mxu0 0.0
    %1751 = vmatprep.subr.mxu0 0.0
    %1752 = vmatpush1.msra.mxu0 0.0
    %1753 = vmatprep.subr.mxu0 0.0
    %1754 = vmatpush1.msra.mxu0 0.0
    %1755 = vmatprep.subr.mxu0 0.0
    %1756 = vmatpush1.msra.mxu0 0.0
    %1757 = vmatprep.subr.mxu0 0.0
    %1758 = vmatpush1.msra.mxu0 0.0
    %1759 = vmatprep.subr.mxu0 0.0
    %1760 = vmatpush1.msra.mxu0 0.0
    %1761 = vmatprep.subr.mxu0 0.0
    %1762 = vmatpush1.msra.mxu0 0.0
    %1763 = vmatprep.mubr.f32.mxu0 0.0
    %1764 = vmatmul.mubr.f32.gmra.mrb[0].mxu0 %v1684
    %v1765 = vpop.f32.mrb[0].mxu0
    %v1766 = vadd.f32 0.0, %v1765
    %v1767 = vpop.f32.mrb[0].mxu0
    %v1768 = vadd.f32 0.0, %v1767
    %1769 = vdwg.mxu0
    %1770 = vmatprep.subr.mxu0 %v49
    %1771 = vmatpush1.msra.mxu0 %v48
    %1772 = vmatprep.subr.mxu0 %v53
    %1773 = vmatpush1.msra.mxu0 %v52
    %1774 = vmatprep.subr.mxu0 %v57
    %1775 = vmatpush1.msra.mxu0 %v56
    %1776 = vmatprep.subr.mxu0 %v61
    %1777 = vmatpush1.msra.mxu0 %v60
    %1778 = vmatprep.subr.mxu0 %v65
    %1779 = vmatpush1.msra.mxu0 %v64
    %1780 = vmatprep.subr.mxu0 %v69
    %1781 = vmatpush1.msra.mxu0 %v68
    %1782 = vmatprep.subr.mxu0 %v73
    %1783 = vmatpush1.msra.mxu0 %v72
    %1784 = vmatprep.subr.mxu0 %v77
    %1785 = vmatpush1.msra.mxu0 %v76
    %1786 = vmatprep.subr.mxu0 %v81
    %1787 = vmatpush1.msra.mxu0 %v80
    %1788 = vmatprep.subr.mxu0 %v85
    %1789 = vmatpush1.msra.mxu0 %v84
    %1790 = vmatprep.subr.mxu0 %v89
    %1791 = vmatpush1.msra.mxu0 %v88
    %1792 = vmatprep.subr.mxu0 %v93
    %1793 = vmatpush1.msra.mxu0 %v92
    %1794 = vmatprep.subr.mxu0 %v97
    %1795 = vmatpush1.msra.mxu0 %v96
    %1796 = vmatprep.subr.mxu0 %v101
    %1797 = vmatpush1.msra.mxu0 %v100
    %1798 = vmatprep.subr.mxu0 %v105
    %1799 = vmatpush1.msra.mxu0 %v104
    %1800 = vmatprep.subr.mxu0 %v109
    %1801 = vmatpush1.msra.mxu0 %v108
    %1802 = vmatprep.subr.mxu0 0.0
    %1803 = vmatpush1.msra.mxu0 0.0
    %1804 = vmatprep.subr.mxu0 0.0
    %1805 = vmatpush1.msra.mxu0 0.0
    %1806 = vmatprep.subr.mxu0 0.0
    %1807 = vmatpush1.msra.mxu0 0.0
    %1808 = vmatprep.subr.mxu0 0.0
    %1809 = vmatpush1.msra.mxu0 0.0
    %1810 = vmatprep.subr.mxu0 0.0
    %1811 = vmatpush1.msra.mxu0 0.0
    %1812 = vmatprep.subr.mxu0 0.0
    %1813 = vmatpush1.msra.mxu0 0.0
    %1814 = vmatprep.subr.mxu0 0.0
    %1815 = vmatpush1.msra.mxu0 0.0
    %1816 = vmatprep.subr.mxu0 0.0
    %1817 = vmatpush1.msra.mxu0 0.0
    %1818 = vmatprep.subr.mxu0 0.0
    %1819 = vmatpush1.msra.mxu0 0.0
    %1820 = vmatprep.subr.mxu0 0.0
    %1821 = vmatpush1.msra.mxu0 0.0
    %1822 = vmatprep.subr.mxu0 0.0
    %1823 = vmatpush1.msra.mxu0 0.0
    %1824 = vmatprep.subr.mxu0 0.0
    %1825 = vmatpush1.msra.mxu0 0.0
    %1826 = vmatprep.subr.mxu0 0.0
    %1827 = vmatpush1.msra.mxu0 0.0
    %1828 = vmatprep.subr.mxu0 0.0
    %1829 = vmatpush1.msra.mxu0 0.0
    %1830 = vmatprep.subr.mxu0 0.0
    %1831 = vmatpush1.msra.mxu0 0.0
    %1832 = vmatprep.subr.mxu0 0.0
    %1833 = vmatpush1.msra.mxu0 0.0
    %1834 = vmatprep.mubr.f32.mxu0 0.0
    %1835 = vmatmul.mubr.f32.gmra.mrb[0].mxu0 %v1684
    %v1836 = vpop.f32.mrb[0].mxu0
    %v1837 = vadd.f32 0.0, %v1836
    %v1838 = vpop.f32.mrb[0].mxu0
    %v1839 = vadd.f32 0.0, %v1838
    %1840 = vdwg.mxu0
    %v1841 = vadd.f32 %v1695, %v1766
    %v1842 = vadd.f32 %v1696, %v1768
    %v1843 = vadd.f32 %v1697, %v1837
    %v1844 = vadd.f32 %v1698, %v1839
    %s1845 = scalar_lea.vmem [#allocation2], 384
    %v1846 = vld [vmem:[%s1845] sm:$0xff]
    %v1847 = vld [vmem:[%s1845 + $0x8] sm:$0xff]
    %v1848 = vld [vmem:[%s1845 + $0x10] sm:$0xff]
    %v1849 = vld [vmem:[%s1845 + $0x18] sm:$0xff]
    %1850 = vmatprep.subr.mxu0 %v112
    %1851 = vmatpush1.msra.mxu0 %v111
    %1852 = vmatprep.subr.mxu0 %v116
    %1853 = vmatpush1.msra.mxu0 %v115
    %1854 = vmatprep.subr.mxu0 %v120
    %1855 = vmatpush1.msra.mxu0 %v119
    %1856 = vmatprep.subr.mxu0 %v124
    %1857 = vmatpush1.msra.mxu0 %v123
    %1858 = vmatprep.subr.mxu0 %v128
    %1859 = vmatpush1.msra.mxu0 %v127
    %1860 = vmatprep.subr.mxu0 %v132
    %1861 = vmatpush1.msra.mxu0 %v131
    %1862 = vmatprep.subr.mxu0 %v136
    %1863 = vmatpush1.msra.mxu0 %v135
    %1864 = vmatprep.subr.mxu0 %v140
    %1865 = vmatpush1.msra.mxu0 %v139
    %1866 = vmatprep.subr.mxu0 %v144
    %1867 = vmatpush1.msra.mxu0 %v143
    %1868 = vmatprep.subr.mxu0 %v148
    %1869 = vmatpush1.msra.mxu0 %v147
    %1870 = vmatprep.subr.mxu0 %v152
    %1871 = vmatpush1.msra.mxu0 %v151
    %1872 = vmatprep.subr.mxu0 %v156
    %1873 = vmatpush1.msra.mxu0 %v155
    %1874 = vmatprep.subr.mxu0 %v160
    %1875 = vmatpush1.msra.mxu0 %v159
    %1876 = vmatprep.subr.mxu0 %v164
    %1877 = vmatpush1.msra.mxu0 %v163
    %1878 = vmatprep.subr.mxu0 %v168
    %1879 = vmatpush1.msra.mxu0 %v167
    %1880 = vmatprep.subr.mxu0 %v172
    %1881 = vmatpush1.msra.mxu0 %v171
    %1882 = vmatprep.subr.mxu0 0.0
    %1883 = vmatpush1.msra.mxu0 0.0
    %1884 = vmatprep.subr.mxu0 0.0
    %1885 = vmatpush1.msra.mxu0 0.0
    %1886 = vmatprep.subr.mxu0 0.0
    %1887 = vmatpush1.msra.mxu0 0.0
    %1888 = vmatprep.subr.mxu0 0.0
    %1889 = vmatpush1.msra.mxu0 0.0
    %1890 = vmatprep.subr.mxu0 0.0
    %1891 = vmatpush1.msra.mxu0 0.0
    %1892 = vmatprep.subr.mxu0 0.0
    %1893 = vmatpush1.msra.mxu0 0.0
    %1894 = vmatprep.subr.mxu0 0.0
    %1895 = vmatpush1.msra.mxu0 0.0
    %1896 = vmatprep.subr.mxu0 0.0
    %1897 = vmatpush1.msra.mxu0 0.0
    %1898 = vmatprep.subr.mxu0 0.0
    %1899 = vmatpush1.msra.mxu0 0.0
    %1900 = vmatprep.subr.mxu0 0.0
    %1901 = vmatpush1.msra.mxu0 0.0
    %1902 = vmatprep.subr.mxu0 0.0
    %1903 = vmatpush1.msra.mxu0 0.0
    %1904 = vmatprep.subr.mxu0 0.0
    %1905 = vmatpush1.msra.mxu0 0.0
    %1906 = vmatprep.subr.mxu0 0.0
    %1907 = vmatpush1.msra.mxu0 0.0
    %1908 = vmatprep.subr.mxu0 0.0
    %1909 = vmatpush1.msra.mxu0 0.0
    %1910 = vmatprep.subr.mxu0 0.0
    %1911 = vmatpush1.msra.mxu0 0.0
    %1912 = vmatprep.subr.mxu0 0.0
    %1913 = vmatpush1.msra.mxu0 0.0
    %1914 = vmatprep.mubr.f32.mxu0 0.0
    %1915 = vmatmul.mubr.f32.gmra.mrb[0].mxu0 %v1690
    %v1916 = vpop.f32.mrb[0].mxu0
    %v1917 = vadd.f32 0.0, %v1916
    %v1918 = vpop.f32.mrb[0].mxu0
    %v1919 = vadd.f32 0.0, %v1918
    %1920 = vdwg.mxu0
    %1921 = vmatprep.subr.mxu0 %v114
    %1922 = vmatpush1.msra.mxu0 %v113
    %1923 = vmatprep.subr.mxu0 %v118
    %1924 = vmatpush1.msra.mxu0 %v117
    %1925 = vmatprep.subr.mxu0 %v122
    %1926 = vmatpush1.msra.mxu0 %v121
    %1927 = vmatprep.subr.mxu0 %v126
    %1928 = vmatpush1.msra.mxu0 %v125
    %1929 = vmatprep.subr.mxu0 %v130
    %1930 = vmatpush1.msra.mxu0 %v129
    %1931 = vmatprep.subr.mxu0 %v134
    %1932 = vmatpush1.msra.mxu0 %v133
    %1933 = vmatprep.subr.mxu0 %v138
    %1934 = vmatpush1.msra.mxu0 %v137
    %1935 = vmatprep.subr.mxu0 %v142
    %1936 = vmatpush1.msra.mxu0 %v141
    %1937 = vmatprep.subr.mxu0 %v146
    %1938 = vmatpush1.msra.mxu0 %v145
    %1939 = vmatprep.subr.mxu0 %v150
    %1940 = vmatpush1.msra.mxu0 %v149
    %1941 = vmatprep.subr.mxu0 %v154
    %1942 = vmatpush1.msra.mxu0 %v153
    %1943 = vmatprep.subr.mxu0 %v158
    %1944 = vmatpush1.msra.mxu0 %v157
    %1945 = vmatprep.subr.mxu0 %v162
    %1946 = vmatpush1.msra.mxu0 %v161
    %1947 = vmatprep.subr.mxu0 %v166
    %1948 = vmatpush1.msra.mxu0 %v165
    %1949 = vmatprep.subr.mxu0 %v170
    %1950 = vmatpush1.msra.mxu0 %v169
    %1951 = vmatprep.subr.mxu0 %v174
    %1952 = vmatpush1.msra.mxu0 %v173
    %1953 = vmatprep.subr.mxu0 0.0
    %1954 = vmatpush1.msra.mxu0 0.0
    %1955 = vmatprep.subr.mxu0 0.0
    %1956 = vmatpush1.msra.mxu0 0.0
    %1957 = vmatprep.subr.mxu0 0.0
    %1958 = vmatpush1.msra.mxu0 0.0
    %1959 = vmatprep.subr.mxu0 0.0
    %1960 = vmatpush1.msra.mxu0 0.0
    %1961 = vmatprep.subr.mxu0 0.0
    %1962 = vmatpush1.msra.mxu0 0.0
    %1963 = vmatprep.subr.mxu0 0.0
    %1964 = vmatpush1.msra.mxu0 0.0
    %1965 = vmatprep.subr.mxu0 0.0
    %1966 = vmatpush1.msra.mxu0 0.0
    %1967 = vmatprep.subr.mxu0 0.0
    %1968 = vmatpush1.msra.mxu0 0.0
    %1969 = vmatprep.subr.mxu0 0.0
    %1970 = vmatpush1.msra.mxu0 0.0
    %1971 = vmatprep.subr.mxu0 0.0
    %1972 = vmatpush1.msra.mxu0 0.0
    %1973 = vmatprep.subr.mxu0 0.0
    %1974 = vmatpush1.msra.mxu0 0.0
    %1975 = vmatprep.subr.mxu0 0.0
    %1976 = vmatpush1.msra.mxu0 0.0
    %1977 = vmatprep.subr.mxu0 0.0
    %1978 = vmatpush1.msra.mxu0 0.0
    %1979 = vmatprep.subr.mxu0 0.0
    %1980 = vmatpush1.msra.mxu0 0.0
    %1981 = vmatprep.subr.mxu0 0.0
    %1982 = vmatpush1.msra.mxu0 0.0
    %1983 = vmatprep.subr.mxu0 0.0
    %1984 = vmatpush1.msra.mxu0 0.0
    %1985 = vmatprep.mubr.f32.mxu0 0.0
    %1986 = vmatmul.mubr.f32.gmra.mrb[0].mxu0 %v1690
    %v1987 = vpop.f32.mrb[0].mxu0
    %v1988 = vadd.f32 0.0, %v1987
    %v1989 = vpop.f32.mrb[0].mxu0
    %v1990 = vadd.f32 0.0, %v1989
    %1991 = vdwg.mxu0
    %v1992 = vadd.f32 %v1846, %v1917
    %v1993 = vadd.f32 %v1847, %v1919
    %v1994 = vadd.f32 %v1848, %v1988
    %v1995 = vadd.f32 %v1849, %v1990
    %s1996 = scalar_lea.vmem %s2, 32
    %v1997 = vld [vmem:[%s1996] sm:$0xff]
    %s1998 = scalar_lea.vmem %s2, 96
    %v1999 = vld [vmem:[%s1998] sm:$0xff]
    %v2000 = vxor.u32 %v1841, 2147483648
    %v2001 = vmul.f32 %v2000, 1.442695
    %v2002 = vpow.pop %v2001
    %v2003 = vadd.f32 %v2002, 1.0
    %v2004 = vrcp.pop %v2003
    %v2005 = vmul.f32 1.0, %v2004
    %v2006 = vxor.u32 %v1842, 2147483648
    %v2007 = vmul.f32 %v2006, 1.442695
    %v2008 = vpow.pop %v2007
    %v2009 = vadd.f32 %v2008, 1.0
    %v2010 = vrcp.pop %v2009
    %v2011 = vmul.f32 1.0, %v2010
    %v2012 = vtanh.pop %v1843
    %v2013 = vxor.u32 %v1844, 2147483648
    %v2014 = vmul.f32 %v2013, 1.442695
    %v2015 = vpow.pop %v2014
    %v2016 = vadd.f32 %v2015, 1.0
    %v2017 = vrcp.pop %v2016
    %v2018 = vmul.f32 1.0, %v2017
    %v2019 = vmul.f32 %v2011, %v1687
    %v2020 = vmul.f32 %v2005, %v2012
    %v2021 = vadd.f32 %v2019, %v2020
    %v2022 = vtanh.pop %v2021
    %v2023 = vmul.f32 %v2018, %v2022
    %v2024 = vxor.u32 %v1992, 2147483648
    %v2025 = vmul.f32 %v2024, 1.442695
    %v2026 = vpow.pop %v2025
    %v2027 = vadd.f32 %v2026, 1.0
    %v2028 = vrcp.pop %v2027
    %v2029 = vmul.f32 1.0, %v2028
    %v2030 = vxor.u32 %v1993, 2147483648
    %v2031 = vmul.f32 %v2030, 1.442695
    %v2032 = vpow.pop %v2031
    %v2033 = vadd.f32 %v2032, 1.0
    %v2034 = vrcp.pop %v2033
    %v2035 = vmul.f32 1.0, %v2034
    %v2036 = vtanh.pop %v1994
    %v2037 = vxor.u32 %v1995, 2147483648
    %v2038 = vmul.f32 %v2037, 1.442695
    %v2039 = vpow.pop %v2038
    %v2040 = vadd.f32 %v2039, 1.0
    %v2041 = vrcp.pop %v2040
    %v2042 = vmul.f32 1.0, %v2041
    %v2043 = vmul.f32 %v2035, %v1693
    %v2044 = vmul.f32 %v2029, %v2036
    %v2045 = vadd.f32 %v2043, %v2044
    %v2046 = vtanh.pop %v2045
    %v2047 = vmul.f32 %v2042, %v2046
    %2049 = vset.pattern.permute.xlu0 0
    %2050 = vperm.xlu0 %2049, %v1997
    %v2051 = vpop.permute.xlu0 %2050
    %v2053 = vmul.f32 %v2023, %v2051
    %2054 = vst [vmem:[%s1680] sm:$0xff] %v2053
    %2056 = vset.pattern.permute.xlu0 0
    %2057 = vperm.xlu0 %2056, %v1999
    %v2058 = vpop.permute.xlu0 %2057
    %v2060 = vmul.f32 %v2047, %v2058
    %2061 = vst [vmem:[%s1672 + $0x8] sm:$0xff] %v2060
    %v2062 = vsub.f32 %v2023, %v1684
    %v2063 = vmul.f32 %v2051, %v2062
    %v2064 = vadd.f32 %v1684, %v2063
    %v2065 = vsub.f32 %v2021, %v1687
    %v2066 = vmul.f32 %v2051, %v2065
    %v2067 = vadd.f32 %v1687, %v2066
    %v2068 = vsub.f32 %v2047, %v1690
    %v2069 = vmul.f32 %v2058, %v2068
    %v2070 = vadd.f32 %v1690, %v2069
    %v2071 = vsub.f32 %v2045, %v1693
    %v2072 = vmul.f32 %v2058, %v2071
    %v2073 = vadd.f32 %v1693, %v2072
    %s2074 = scalar_lea.vmem [#allocation2], 160
    %v2075 = vld [vmem:[%s2074] sm:$0xff]
    %v2076 = vld [vmem:[%s2074 + $0x8] sm:$0xff]
    %v2077 = vld [vmem:[%s2074 + $0x10] sm:$0xff]
    %v2078 = vld [vmem:[%s2074 + $0x18] sm:$0xff]
    %2079 = vmatprep.subr.mxu0 %v47
    %2080 = vmatpush1.msra.mxu0 %v46
    %2081 = vmatprep.subr.mxu0 %v51
    %2082 = vmatpush1.msra.mxu0 %v50
    %2083 = vmatprep.subr.mxu0 %v55
    %2084 = vmatpush1.msra.mxu0 %v54
    %2085 = vmatprep.subr.mxu0 %v59
    %2086 = vmatpush1.msra.mxu0 %v58
    %2087 = vmatprep.subr.mxu0 %v63
    %2088 = vmatpush1.msra.mxu0 %v62
    %2089 = vmatprep.subr.mxu0 %v67
    %2090 = vmatpush1.msra.mxu0 %v66
    %2091 = vmatprep.subr.mxu0 %v71
    %2092 = vmatpush1.msra.mxu0 %v70
    %2093 = vmatprep.subr.mxu0 %v75
    %2094 = vmatpush1.msra.mxu0 %v74
    %2095 = vmatprep.subr.mxu0 %v79
    %2096 = vmatpush1.msra.mxu0 %v78
    %2097 = vmatprep.subr.mxu0 %v83
    %2098 = vmatpush1.msra.mxu0 %v82
    %2099 = vmatprep.subr.mxu0 %v87
    %2100 = vmatpush1.msra.mxu0 %v86
    %2101 = vmatprep.subr.mxu0 %v91
    %2102 = vmatpush1.msra.mxu0 %v90
    %2103 = vmatprep.subr.mxu0 %v95
    %2104 = vmatpush1.msra.mxu0 %v94
    %2105 = vmatprep.subr.mxu0 %v99
    %2106 = vmatpush1.msra.mxu0 %v98
    %2107 = vmatprep.subr.mxu0 %v103
    %2108 = vmatpush1.msra.mxu0 %v102
    %2109 = vmatprep.subr.mxu0 %v107
    %2110 = vmatpush1.msra.mxu0 %v106
    %2111 = vmatprep.subr.mxu0 0.0
    %2112 = vmatpush1.msra.mxu0 0.0
    %2113 = vmatprep.subr.mxu0 0.0
    %2114 = vmatpush1.msra.mxu0 0.0
    %2115 = vmatprep.subr.mxu0 0.0
    %2116 = vmatpush1.msra.mxu0 0.0
    %2117 = vmatprep.subr.mxu0 0.0
    %2118 = vmatpush1.msra.mxu0 0.0
    %2119 = vmatprep.subr.mxu0 0.0
    %2120 = vmatpush1.msra.mxu0 0.0
    %2121 = vmatprep.subr.mxu0 0.0
    %2122 = vmatpush1.msra.mxu0 0.0
    %2123 = vmatprep.subr.mxu0 0.0
    %2124 = vmatpush1.msra.mxu0 0.0
    %2125 = vmatprep.subr.mxu0 0.0
    %2126 = vmatpush1.msra.mxu0 0.0
    %2127 = vmatprep.subr.mxu0 0.0
    %2128 = vmatpush1.msra.mxu0 0.0
    %2129 = vmatprep.subr.mxu0 0.0
    %2130 = vmatpush1.msra.mxu0 0.0
    %2131 = vmatprep.subr.mxu0 0.0
    %2132 = vmatpush1.msra.mxu0 0.0
    %2133 = vmatprep.subr.mxu0 0.0
    %2134 = vmatpush1.msra.mxu0 0.0
    %2135 = vmatprep.subr.mxu0 0.0
    %2136 = vmatpush1.msra.mxu0 0.0
    %2137 = vmatprep.subr.mxu0 0.0
    %2138 = vmatpush1.msra.mxu0 0.0
    %2139 = vmatprep.subr.mxu0 0.0
    %2140 = vmatpush1.msra.mxu0 0.0
    %2141 = vmatprep.subr.mxu0 0.0
    %2142 = vmatpush1.msra.mxu0 0.0
    %2143 = vmatprep.mubr.f32.mxu0 0.0
    %2144 = vmatmul.mubr.f32.gmra.mrb[0].mxu0 %v2064
    %v2145 = vpop.f32.mrb[0].mxu0
    %v2146 = vadd.f32 0.0, %v2145
    %v2147 = vpop.f32.mrb[0].mxu0
    %v2148 = vadd.f32 0.0, %v2147
    %2149 = vdwg.mxu0
    %2150 = vmatprep.subr.mxu0 %v49
    %2151 = vmatpush1.msra.mxu0 %v48
    %2152 = vmatprep.subr.mxu0 %v53
    %2153 = vmatpush1.msra.mxu0 %v52
    %2154 = vmatprep.subr.mxu0 %v57
    %2155 = vmatpush1.msra.mxu0 %v56
    %2156 = vmatprep.subr.mxu0 %v61
    %2157 = vmatpush1.msra.mxu0 %v60
    %2158 = vmatprep.subr.mxu0 %v65
    %2159 = vmatpush1.msra.mxu0 %v64
    %2160 = vmatprep.subr.mxu0 %v69
    %2161 = vmatpush1.msra.mxu0 %v68
    %2162 = vmatprep.subr.mxu0 %v73
    %2163 = vmatpush1.msra.mxu0 %v72
    %2164 = vmatprep.subr.mxu0 %v77
    %2165 = vmatpush1.msra.mxu0 %v76
    %2166 = vmatprep.subr.mxu0 %v81
    %2167 = vmatpush1.msra.mxu0 %v80
    %2168 = vmatprep.subr.mxu0 %v85
    %2169 = vmatpush1.msra.mxu0 %v84
    %2170 = vmatprep.subr.mxu0 %v89
    %2171 = vmatpush1.msra.mxu0 %v88
    %2172 = vmatprep.subr.mxu0 %v93
    %2173 = vmatpush1.msra.mxu0 %v92
    %2174 = vmatprep.subr.mxu0 %v97
    %2175 = vmatpush1.msra.mxu0 %v96
    %2176 = vmatprep.subr.mxu0 %v101
    %2177 = vmatpush1.msra.mxu0 %v100
    %2178 = vmatprep.subr.mxu0 %v105
    %2179 = vmatpush1.msra.mxu0 %v104
    %2180 = vmatprep.subr.mxu0 %v109
    %2181 = vmatpush1.msra.mxu0 %v108
    %2182 = vmatprep.subr.mxu0 0.0
    %2183 = vmatpush1.msra.mxu0 0.0
    %2184 = vmatprep.subr.mxu0 0.0
    %2185 = vmatpush1.msra.mxu0 0.0
    %2186 = vmatprep.subr.mxu0 0.0
    %2187 = vmatpush1.msra.mxu0 0.0
    %2188 = vmatprep.subr.mxu0 0.0
    %2189 = vmatpush1.msra.mxu0 0.0
    %2190 = vmatprep.subr.mxu0 0.0
    %2191 = vmatpush1.msra.mxu0 0.0
    %2192 = vmatprep.subr.mxu0 0.0
    %2193 = vmatpush1.msra.mxu0 0.0
    %2194 = vmatprep.subr.mxu0 0.0
    %2195 = vmatpush1.msra.mxu0 0.0
    %2196 = vmatprep.subr.mxu0 0.0
    %2197 = vmatpush1.msra.mxu0 0.0
    %2198 = vmatprep.subr.mxu0 0.0
    %2199 = vmatpush1.msra.mxu0 0.0
    %2200 = vmatprep.subr.mxu0 0.0
    %2201 = vmatpush1.msra.mxu0 0.0
    %2202 = vmatprep.subr.mxu0 0.0
    %2203 = vmatpush1.msra.mxu0 0.0
    %2204 = vmatprep.subr.mxu0 0.0
    %2205 = vmatpush1.msra.mxu0 0.0
    %2206 = vmatprep.subr.mxu0 0.0
    %2207 = vmatpush1.msra.mxu0 0.0
    %2208 = vmatprep.subr.mxu0 0.0
    %2209 = vmatpush1.msra.mxu0 0.0
    %2210 = vmatprep.subr.mxu0 0.0
    %2211 = vmatpush1.msra.mxu0 0.0
    %2212 = vmatprep.subr.mxu0 0.0
    %2213 = vmatpush1.msra.mxu0 0.0
    %2214 = vmatprep.mubr.f32.mxu0 0.0
    %2215 = vmatmul.mubr.f32.gmra.mrb[0].mxu0 %v2064
    %v2216 = vpop.f32.mrb[0].mxu0
    %v2217 = vadd.f32 0.0, %v2216
    %v2218 = vpop.f32.mrb[0].mxu0
    %v2219 = vadd.f32 0.0, %v2218
    %2220 = vdwg.mxu0
    %v2221 = vadd.f32 %v2075, %v2146
    %v2222 = vadd.f32 %v2076, %v2148
    %v2223 = vadd.f32 %v2077, %v2217
    %v2224 = vadd.f32 %v2078, %v2219
    %s2225 = scalar_lea.vmem [#allocation2], 416
    %v2226 = vld [vmem:[%s2225] sm:$0xff]
    %v2227 = vld [vmem:[%s2225 + $0x8] sm:$0xff]
    %v2228 = vld [vmem:[%s2225 + $0x10] sm:$0xff]
    %v2229 = vld [vmem:[%s2225 + $0x18] sm:$0xff]
    %2230 = vmatprep.subr.mxu0 %v112
    %2231 = vmatpush1.msra.mxu0 %v111
    %2232 = vmatprep.subr.mxu0 %v116
    %2233 = vmatpush1.msra.mxu0 %v115
    %2234 = vmatprep.subr.mxu0 %v120
    %2235 = vmatpush1.msra.mxu0 %v119
    %2236 = vmatprep.subr.mxu0 %v124
    %2237 = vmatpush1.msra.mxu0 %v123
    %2238 = vmatprep.subr.mxu0 %v128
    %2239 = vmatpush1.msra.mxu0 %v127
    %2240 = vmatprep.subr.mxu0 %v132
    %2241 = vmatpush1.msra.mxu0 %v131
    %2242 = vmatprep.subr.mxu0 %v136
    %2243 = vmatpush1.msra.mxu0 %v135
    %2244 = vmatprep.subr.mxu0 %v140
    %2245 = vmatpush1.msra.mxu0 %v139
    %2246 = vmatprep.subr.mxu0 %v144
    %2247 = vmatpush1.msra.mxu0 %v143
    %2248 = vmatprep.subr.mxu0 %v148
    %2249 = vmatpush1.msra.mxu0 %v147
    %2250 = vmatprep.subr.mxu0 %v152
    %2251 = vmatpush1.msra.mxu0 %v151
    %2252 = vmatprep.subr.mxu0 %v156
    %2253 = vmatpush1.msra.mxu0 %v155
    %2254 = vmatprep.subr.mxu0 %v160
    %2255 = vmatpush1.msra.mxu0 %v159
    %2256 = vmatprep.subr.mxu0 %v164
    %2257 = vmatpush1.msra.mxu0 %v163
    %2258 = vmatprep.subr.mxu0 %v168
    %2259 = vmatpush1.msra.mxu0 %v167
    %2260 = vmatprep.subr.mxu0 %v172
    %2261 = vmatpush1.msra.mxu0 %v171
    %2262 = vmatprep.subr.mxu0 0.0
    %2263 = vmatpush1.msra.mxu0 0.0
    %2264 = vmatprep.subr.mxu0 0.0
    %2265 = vmatpush1.msra.mxu0 0.0
    %2266 = vmatprep.subr.mxu0 0.0
    %2267 = vmatpush1.msra.mxu0 0.0
    %2268 = vmatprep.subr.mxu0 0.0
    %2269 = vmatpush1.msra.mxu0 0.0
    %2270 = vmatprep.subr.mxu0 0.0
    %2271 = vmatpush1.msra.mxu0 0.0
    %2272 = vmatprep.subr.mxu0 0.0
    %2273 = vmatpush1.msra.mxu0 0.0
    %2274 = vmatprep.subr.mxu0 0.0
    %2275 = vmatpush1.msra.mxu0 0.0
    %2276 = vmatprep.subr.mxu0 0.0
    %2277 = vmatpush1.msra.mxu0 0.0
    %2278 = vmatprep.subr.mxu0 0.0
    %2279 = vmatpush1.msra.mxu0 0.0
    %2280 = vmatprep.subr.mxu0 0.0
    %2281 = vmatpush1.msra.mxu0 0.0
    %2282 = vmatprep.subr.mxu0 0.0
    %2283 = vmatpush1.msra.mxu0 0.0
    %2284 = vmatprep.subr.mxu0 0.0
    %2285 = vmatpush1.msra.mxu0 0.0
    %2286 = vmatprep.subr.mxu0 0.0
    %2287 = vmatpush1.msra.mxu0 0.0
    %2288 = vmatprep.subr.mxu0 0.0
    %2289 = vmatpush1.msra.mxu0 0.0
    %2290 = vmatprep.subr.mxu0 0.0
    %2291 = vmatpush1.msra.mxu0 0.0
    %2292 = vmatprep.subr.mxu0 0.0
    %2293 = vmatpush1.msra.mxu0 0.0
    %2294 = vmatprep.mubr.f32.mxu0 0.0
    %2295 = vmatmul.mubr.f32.gmra.mrb[0].mxu0 %v2070
    %v2296 = vpop.f32.mrb[0].mxu0
    %v2297 = vadd.f32 0.0, %v2296
    %v2298 = vpop.f32.mrb[0].mxu0
    %v2299 = vadd.f32 0.0, %v2298
    %2300 = vdwg.mxu0
    %2301 = vmatprep.subr.mxu0 %v114
    %2302 = vmatpush1.msra.mxu0 %v113
    %2303 = vmatprep.subr.mxu0 %v118
    %2304 = vmatpush1.msra.mxu0 %v117
    %2305 = vmatprep.subr.mxu0 %v122
    %2306 = vmatpush1.msra.mxu0 %v121
    %2307 = vmatprep.subr.mxu0 %v126
    %2308 = vmatpush1.msra.mxu0 %v125
    %2309 = vmatprep.subr.mxu0 %v130
    %2310 = vmatpush1.msra.mxu0 %v129
    %2311 = vmatprep.subr.mxu0 %v134
    %2312 = vmatpush1.msra.mxu0 %v133
    %2313 = vmatprep.subr.mxu0 %v138
    %2314 = vmatpush1.msra.mxu0 %v137
    %2315 = vmatprep.subr.mxu0 %v142
    %2316 = vmatpush1.msra.mxu0 %v141
    %2317 = vmatprep.subr.mxu0 %v146
    %2318 = vmatpush1.msra.mxu0 %v145
    %2319 = vmatprep.subr.mxu0 %v150
    %2320 = vmatpush1.msra.mxu0 %v149
    %2321 = vmatprep.subr.mxu0 %v154
    %2322 = vmatpush1.msra.mxu0 %v153
    %2323 = vmatprep.subr.mxu0 %v158
    %2324 = vmatpush1.msra.mxu0 %v157
    %2325 = vmatprep.subr.mxu0 %v162
    %2326 = vmatpush1.msra.mxu0 %v161
    %2327 = vmatprep.subr.mxu0 %v166
    %2328 = vmatpush1.msra.mxu0 %v165
    %2329 = vmatprep.subr.mxu0 %v170
    %2330 = vmatpush1.msra.mxu0 %v169
    %2331 = vmatprep.subr.mxu0 %v174
    %2332 = vmatpush1.msra.mxu0 %v173
    %2333 = vmatprep.subr.mxu0 0.0
    %2334 = vmatpush1.msra.mxu0 0.0
    %2335 = vmatprep.subr.mxu0 0.0
    %2336 = vmatpush1.msra.mxu0 0.0
    %2337 = vmatprep.subr.mxu0 0.0
    %2338 = vmatpush1.msra.mxu0 0.0
    %2339 = vmatprep.subr.mxu0 0.0
    %2340 = vmatpush1.msra.mxu0 0.0
    %2341 = vmatprep.subr.mxu0 0.0
    %2342 = vmatpush1.msra.mxu0 0.0
    %2343 = vmatprep.subr.mxu0 0.0
    %2344 = vmatpush1.msra.mxu0 0.0
    %2345 = vmatprep.subr.mxu0 0.0
    %2346 = vmatpush1.msra.mxu0 0.0
    %2347 = vmatprep.subr.mxu0 0.0
    %2348 = vmatpush1.msra.mxu0 0.0
    %2349 = vmatprep.subr.mxu0 0.0
    %2350 = vmatpush1.msra.mxu0 0.0
    %2351 = vmatprep.subr.mxu0 0.0
    %2352 = vmatpush1.msra.mxu0 0.0
    %2353 = vmatprep.subr.mxu0 0.0
    %2354 = vmatpush1.msra.mxu0 0.0
    %2355 = vmatprep.subr.mxu0 0.0
    %2356 = vmatpush1.msra.mxu0 0.0
    %2357 = vmatprep.subr.mxu0 0.0
    %2358 = vmatpush1.msra.mxu0 0.0
    %2359 = vmatprep.subr.mxu0 0.0
    %2360 = vmatpush1.msra.mxu0 0.0
    %2361 = vmatprep.subr.mxu0 0.0
    %2362 = vmatpush1.msra.mxu0 0.0
    %2363 = vmatprep.subr.mxu0 0.0
    %2364 = vmatpush1.msra.mxu0 0.0
    %2365 = vmatprep.mubr.f32.mxu0 0.0
    %2366 = vmatmul.mubr.f32.gmra.mrb[0].mxu0 %v2070
    %v2367 = vpop.f32.mrb[0].mxu0
    %v2368 = vadd.f32 0.0, %v2367
    %v2369 = vpop.f32.mrb[0].mxu0
    %v2370 = vadd.f32 0.0, %v2369
    %2371 = vdwg.mxu0
    %v2372 = vadd.f32 %v2226, %v2297
    %v2373 = vadd.f32 %v2227, %v2299
    %v2374 = vadd.f32 %v2228, %v2368
    %v2375 = vadd.f32 %v2229, %v2370
    %s2376 = scalar_lea.vmem %s2, 40
    %v2377 = vld [vmem:[%s2376] sm:$0xff]
    %s2378 = scalar_lea.vmem %s2, 104
    %v2379 = vld [vmem:[%s2378] sm:$0xff]
    %v2380 = vxor.u32 %v2221, 2147483648
    %v2381 = vmul.f32 %v2380, 1.442695
    %v2382 = vpow.pop %v2381
    %v2383 = vadd.f32 %v2382, 1.0
    %v2384 = vrcp.pop %v2383
    %v2385 = vmul.f32 1.0, %v2384
    %v2386 = vxor.u32 %v2222, 2147483648
    %v2387 = vmul.f32 %v2386, 1.442695
    %v2388 = vpow.pop %v2387
    %v2389 = vadd.f32 %v2388, 1.0
    %v2390 = vrcp.pop %v2389
    %v2391 = vmul.f32 1.0, %v2390
    %v2392 = vtanh.pop %v2223
    %v2393 = vxor.u32 %v2224, 2147483648
    %v2394 = vmul.f32 %v2393, 1.442695
    %v2395 = vpow.pop %v2394
    %v2396 = vadd.f32 %v2395, 1.0
    %v2397 = vrcp.pop %v2396
    %v2398 = vmul.f32 1.0, %v2397
    %v2399 = vmul.f32 %v2391, %v2067
    %v2400 = vmul.f32 %v2385, %v2392
    %v2401 = vadd.f32 %v2399, %v2400
    %v2402 = vtanh.pop %v2401
    %v2403 = vmul.f32 %v2398, %v2402
    %v2404 = vxor.u32 %v2372, 2147483648
    %v2405 = vmul.f32 %v2404, 1.442695
    %v2406 = vpow.pop %v2405
    %v2407 = vadd.f32 %v2406, 1.0
    %v2408 = vrcp.pop %v2407
    %v2409 = vmul.f32 1.0, %v2408
    %v2410 = vxor.u32 %v2373, 2147483648
    %v2411 = vmul.f32 %v2410, 1.442695
    %v2412 = vpow.pop %v2411
    %v2413 = vadd.f32 %v2412, 1.0
    %v2414 = vrcp.pop %v2413
    %v2415 = vmul.f32 1.0, %v2414
    %v2416 = vtanh.pop %v2374
    %v2417 = vxor.u32 %v2375, 2147483648
    %v2418 = vmul.f32 %v2417, 1.442695
    %v2419 = vpow.pop %v2418
    %v2420 = vadd.f32 %v2419, 1.0
    %v2421 = vrcp.pop %v2420
    %v2422 = vmul.f32 1.0, %v2421
    %v2423 = vmul.f32 %v2415, %v2073
    %v2424 = vmul.f32 %v2409, %v2416
    %v2425 = vadd.f32 %v2423, %v2424
    %v2426 = vtanh.pop %v2425
    %v2427 = vmul.f32 %v2422, %v2426
    %2429 = vset.pattern.permute.xlu0 0
    %2430 = vperm.xlu0 %2429, %v2377
    %v2431 = vpop.permute.xlu0 %2430
    %v2433 = vmul.f32 %v2403, %v2431
    %2434 = vst [vmem:[%s1298] sm:$0xff] %v2433
    %2436 = vset.pattern.permute.xlu0 0
    %2437 = vperm.xlu0 %2436, %v2379
    %v2438 = vpop.permute.xlu0 %2437
    %v2440 = vmul.f32 %v2427, %v2438
    %2441 = vst [vmem:[%s1290 + $0x8] sm:$0xff] %v2440
    %v2442 = vsub.f32 %v2403, %v2064
    %v2443 = vmul.f32 %v2431, %v2442
    %v2444 = vadd.f32 %v2064, %v2443
    %v2445 = vsub.f32 %v2401, %v2067
    %v2446 = vmul.f32 %v2431, %v2445
    %v2447 = vadd.f32 %v2067, %v2446
    %v2448 = vsub.f32 %v2427, %v2070
    %v2449 = vmul.f32 %v2438, %v2448
    %v2450 = vadd.f32 %v2070, %v2449
    %v2451 = vsub.f32 %v2425, %v2073
    %v2452 = vmul.f32 %v2438, %v2451
    %v2453 = vadd.f32 %v2073, %v2452
    %s2454 = scalar_lea.vmem [#allocation2], 192
    %v2455 = vld [vmem:[%s2454] sm:$0xff]
    %v2456 = vld [vmem:[%s2454 + $0x8] sm:$0xff]
    %v2457 = vld [vmem:[%s2454 + $0x10] sm:$0xff]
    %v2458 = vld [vmem:[%s2454 + $0x18] sm:$0xff]
    %2459 = vmatprep.subr.mxu0 %v47
    %2460 = vmatpush1.msra.mxu0 %v46
    %2461 = vmatprep.subr.mxu0 %v51
    %2462 = vmatpush1.msra.mxu0 %v50
    %2463 = vmatprep.subr.mxu0 %v55
    %2464 = vmatpush1.msra.mxu0 %v54
    %2465 = vmatprep.subr.mxu0 %v59
    %2466 = vmatpush1.msra.mxu0 %v58
    %2467 = vmatprep.subr.mxu0 %v63
    %2468 = vmatpush1.msra.mxu0 %v62
    %2469 = vmatprep.subr.mxu0 %v67
    %2470 = vmatpush1.msra.mxu0 %v66
    %2471 = vmatprep.subr.mxu0 %v71
    %2472 = vmatpush1.msra.mxu0 %v70
    %2473 = vmatprep.subr.mxu0 %v75
    %2474 = vmatpush1.msra.mxu0 %v74
    %2475 = vmatprep.subr.mxu0 %v79
    %2476 = vmatpush1.msra.mxu0 %v78
    %2477 = vmatprep.subr.mxu0 %v83
    %2478 = vmatpush1.msra.mxu0 %v82
    %2479 = vmatprep.subr.mxu0 %v87
    %2480 = vmatpush1.msra.mxu0 %v86
    %2481 = vmatprep.subr.mxu0 %v91
    %2482 = vmatpush1.msra.mxu0 %v90
    %2483 = vmatprep.subr.mxu0 %v95
    %2484 = vmatpush1.msra.mxu0 %v94
    %2485 = vmatprep.subr.mxu0 %v99
    %2486 = vmatpush1.msra.mxu0 %v98
    %2487 = vmatprep.subr.mxu0 %v103
    %2488 = vmatpush1.msra.mxu0 %v102
    %2489 = vmatprep.subr.mxu0 %v107
    %2490 = vmatpush1.msra.mxu0 %v106
    %2491 = vmatprep.subr.mxu0 0.0
    %2492 = vmatpush1.msra.mxu0 0.0
    %2493 = vmatprep.subr.mxu0 0.0
    %2494 = vmatpush1.msra.mxu0 0.0
    %2495 = vmatprep.subr.mxu0 0.0
    %2496 = vmatpush1.msra.mxu0 0.0
    %2497 = vmatprep.subr.mxu0 0.0
    %2498 = vmatpush1.msra.mxu0 0.0
    %2499 = vmatprep.subr.mxu0 0.0
    %2500 = vmatpush1.msra.mxu0 0.0
    %2501 = vmatprep.subr.mxu0 0.0
    %2502 = vmatpush1.msra.mxu0 0.0
    %2503 = vmatprep.subr.mxu0 0.0
    %2504 = vmatpush1.msra.mxu0 0.0
    %2505 = vmatprep.subr.mxu0 0.0
    %2506 = vmatpush1.msra.mxu0 0.0
    %2507 = vmatprep.subr.mxu0 0.0
    %2508 = vmatpush1.msra.mxu0 0.0
    %2509 = vmatprep.subr.mxu0 0.0
    %2510 = vmatpush1.msra.mxu0 0.0
    %2511 = vmatprep.subr.mxu0 0.0
    %2512 = vmatpush1.msra.mxu0 0.0
    %2513 = vmatprep.subr.mxu0 0.0
    %2514 = vmatpush1.msra.mxu0 0.0
    %2515 = vmatprep.subr.mxu0 0.0
    %2516 = vmatpush1.msra.mxu0 0.0
    %2517 = vmatprep.subr.mxu0 0.0
    %2518 = vmatpush1.msra.mxu0 0.0
    %2519 = vmatprep.subr.mxu0 0.0
    %2520 = vmatpush1.msra.mxu0 0.0
    %2521 = vmatprep.subr.mxu0 0.0
    %2522 = vmatpush1.msra.mxu0 0.0
    %2523 = vmatprep.mubr.f32.mxu0 0.0
    %2524 = vmatmul.mubr.f32.gmra.mrb[0].mxu0 %v2444
    %v2525 = vpop.f32.mrb[0].mxu0
    %v2526 = vadd.f32 0.0, %v2525
    %v2527 = vpop.f32.mrb[0].mxu0
    %v2528 = vadd.f32 0.0, %v2527
    %2529 = vdwg.mxu0
    %2530 = vmatprep.subr.mxu0 %v49
    %2531 = vmatpush1.msra.mxu0 %v48
    %2532 = vmatprep.subr.mxu0 %v53
    %2533 = vmatpush1.msra.mxu0 %v52
    %2534 = vmatprep.subr.mxu0 %v57
    %2535 = vmatpush1.msra.mxu0 %v56
    %2536 = vmatprep.subr.mxu0 %v61
    %2537 = vmatpush1.msra.mxu0 %v60
    %2538 = vmatprep.subr.mxu0 %v65
    %2539 = vmatpush1.msra.mxu0 %v64
    %2540 = vmatprep.subr.mxu0 %v69
    %2541 = vmatpush1.msra.mxu0 %v68
    %2542 = vmatprep.subr.mxu0 %v73
    %2543 = vmatpush1.msra.mxu0 %v72
    %2544 = vmatprep.subr.mxu0 %v77
    %2545 = vmatpush1.msra.mxu0 %v76
    %2546 = vmatprep.subr.mxu0 %v81
    %2547 = vmatpush1.msra.mxu0 %v80
    %2548 = vmatprep.subr.mxu0 %v85
    %2549 = vmatpush1.msra.mxu0 %v84
    %2550 = vmatprep.subr.mxu0 %v89
    %2551 = vmatpush1.msra.mxu0 %v88
    %2552 = vmatprep.subr.mxu0 %v93
    %2553 = vmatpush1.msra.mxu0 %v92
    %2554 = vmatprep.subr.mxu0 %v97
    %2555 = vmatpush1.msra.mxu0 %v96
    %2556 = vmatprep.subr.mxu0 %v101
    %2557 = vmatpush1.msra.mxu0 %v100
    %2558 = vmatprep.subr.mxu0 %v105
    %2559 = vmatpush1.msra.mxu0 %v104
    %2560 = vmatprep.subr.mxu0 %v109
    %2561 = vmatpush1.msra.mxu0 %v108
    %2562 = vmatprep.subr.mxu0 0.0
    %2563 = vmatpush1.msra.mxu0 0.0
    %2564 = vmatprep.subr.mxu0 0.0
    %2565 = vmatpush1.msra.mxu0 0.0
    %2566 = vmatprep.subr.mxu0 0.0
    %2567 = vmatpush1.msra.mxu0 0.0
    %2568 = vmatprep.subr.mxu0 0.0
    %2569 = vmatpush1.msra.mxu0 0.0
    %2570 = vmatprep.subr.mxu0 0.0
    %2571 = vmatpush1.msra.mxu0 0.0
    %2572 = vmatprep.subr.mxu0 0.0
    %2573 = vmatpush1.msra.mxu0 0.0
    %2574 = vmatprep.subr.mxu0 0.0
    %2575 = vmatpush1.msra.mxu0 0.0
    %2576 = vmatprep.subr.mxu0 0.0
    %2577 = vmatpush1.msra.mxu0 0.0
    %2578 = vmatprep.subr.mxu0 0.0
    %2579 = vmatpush1.msra.mxu0 0.0
    %2580 = vmatprep.subr.mxu0 0.0
    %2581 = vmatpush1.msra.mxu0 0.0
    %2582 = vmatprep.subr.mxu0 0.0
    %2583 = vmatpush1.msra.mxu0 0.0
    %2584 = vmatprep.subr.mxu0 0.0
    %2585 = vmatpush1.msra.mxu0 0.0
    %2586 = vmatprep.subr.mxu0 0.0
    %2587 = vmatpush1.msra.mxu0 0.0
    %2588 = vmatprep.subr.mxu0 0.0
    %2589 = vmatpush1.msra.mxu0 0.0
    %2590 = vmatprep.subr.mxu0 0.0
    %2591 = vmatpush1.msra.mxu0 0.0
    %2592 = vmatprep.subr.mxu0 0.0
    %2593 = vmatpush1.msra.mxu0 0.0
    %2594 = vmatprep.mubr.f32.mxu0 0.0
    %2595 = vmatmul.mubr.f32.gmra.mrb[0].mxu0 %v2444
    %v2596 = vpop.f32.mrb[0].mxu0
    %v2597 = vadd.f32 0.0, %v2596
    %v2598 = vpop.f32.mrb[0].mxu0
    %v2599 = vadd.f32 0.0, %v2598
    %2600 = vdwg.mxu0
    %v2601 = vadd.f32 %v2455, %v2526
    %v2602 = vadd.f32 %v2456, %v2528
    %v2603 = vadd.f32 %v2457, %v2597
    %v2604 = vadd.f32 %v2458, %v2599
    %s2605 = scalar_lea.vmem [#allocation2], 448
    %v2606 = vld [vmem:[%s2605] sm:$0xff]
    %v2607 = vld [vmem:[%s2605 + $0x8] sm:$0xff]
    %v2608 = vld [vmem:[%s2605 + $0x10] sm:$0xff]
    %v2609 = vld [vmem:[%s2605 + $0x18] sm:$0xff]
    %2610 = vmatprep.subr.mxu0 %v112
    %2611 = vmatpush1.msra.mxu0 %v111
    %2612 = vmatprep.subr.mxu0 %v116
    %2613 = vmatpush1.msra.mxu0 %v115
    %2614 = vmatprep.subr.mxu0 %v120
    %2615 = vmatpush1.msra.mxu0 %v119
    %2616 = vmatprep.subr.mxu0 %v124
    %2617 = vmatpush1.msra.mxu0 %v123
    %2618 = vmatprep.subr.mxu0 %v128
    %2619 = vmatpush1.msra.mxu0 %v127
    %2620 = vmatprep.subr.mxu0 %v132
    %2621 = vmatpush1.msra.mxu0 %v131
    %2622 = vmatprep.subr.mxu0 %v136
    %2623 = vmatpush1.msra.mxu0 %v135
    %2624 = vmatprep.subr.mxu0 %v140
    %2625 = vmatpush1.msra.mxu0 %v139
    %2626 = vmatprep.subr.mxu0 %v144
    %2627 = vmatpush1.msra.mxu0 %v143
    %2628 = vmatprep.subr.mxu0 %v148
    %2629 = vmatpush1.msra.mxu0 %v147
    %2630 = vmatprep.subr.mxu0 %v152
    %2631 = vmatpush1.msra.mxu0 %v151
    %2632 = vmatprep.subr.mxu0 %v156
    %2633 = vmatpush1.msra.mxu0 %v155
    %2634 = vmatprep.subr.mxu0 %v160
    %2635 = vmatpush1.msra.mxu0 %v159
    %2636 = vmatprep.subr.mxu0 %v164
    %2637 = vmatpush1.msra.mxu0 %v163
    %2638 = vmatprep.subr.mxu0 %v168
    %2639 = vmatpush1.msra.mxu0 %v167
    %2640 = vmatprep.subr.mxu0 %v172
    %2641 = vmatpush1.msra.mxu0 %v171
    %2642 = vmatprep.subr.mxu0 0.0
    %2643 = vmatpush1.msra.mxu0 0.0
    %2644 = vmatprep.subr.mxu0 0.0
    %2645 = vmatpush1.msra.mxu0 0.0
    %2646 = vmatprep.subr.mxu0 0.0
    %2647 = vmatpush1.msra.mxu0 0.0
    %2648 = vmatprep.subr.mxu0 0.0
    %2649 = vmatpush1.msra.mxu0 0.0
    %2650 = vmatprep.subr.mxu0 0.0
    %2651 = vmatpush1.msra.mxu0 0.0
    %2652 = vmatprep.subr.mxu0 0.0
    %2653 = vmatpush1.msra.mxu0 0.0
    %2654 = vmatprep.subr.mxu0 0.0
    %2655 = vmatpush1.msra.mxu0 0.0
    %2656 = vmatprep.subr.mxu0 0.0
    %2657 = vmatpush1.msra.mxu0 0.0
    %2658 = vmatprep.subr.mxu0 0.0
    %2659 = vmatpush1.msra.mxu0 0.0
    %2660 = vmatprep.subr.mxu0 0.0
    %2661 = vmatpush1.msra.mxu0 0.0
    %2662 = vmatprep.subr.mxu0 0.0
    %2663 = vmatpush1.msra.mxu0 0.0
    %2664 = vmatprep.subr.mxu0 0.0
    %2665 = vmatpush1.msra.mxu0 0.0
    %2666 = vmatprep.subr.mxu0 0.0
    %2667 = vmatpush1.msra.mxu0 0.0
    %2668 = vmatprep.subr.mxu0 0.0
    %2669 = vmatpush1.msra.mxu0 0.0
    %2670 = vmatprep.subr.mxu0 0.0
    %2671 = vmatpush1.msra.mxu0 0.0
    %2672 = vmatprep.subr.mxu0 0.0
    %2673 = vmatpush1.msra.mxu0 0.0
    %2674 = vmatprep.mubr.f32.mxu0 0.0
    %2675 = vmatmul.mubr.f32.gmra.mrb[0].mxu0 %v2450
    %v2676 = vpop.f32.mrb[0].mxu0
    %v2677 = vadd.f32 0.0, %v2676
    %v2678 = vpop.f32.mrb[0].mxu0
    %v2679 = vadd.f32 0.0, %v2678
    %2680 = vdwg.mxu0
    %2681 = vmatprep.subr.mxu0 %v114
    %2682 = vmatpush1.msra.mxu0 %v113
    %2683 = vmatprep.subr.mxu0 %v118
    %2684 = vmatpush1.msra.mxu0 %v117
    %2685 = vmatprep.subr.mxu0 %v122
    %2686 = vmatpush1.msra.mxu0 %v121
    %2687 = vmatprep.subr.mxu0 %v126
    %2688 = vmatpush1.msra.mxu0 %v125
    %2689 = vmatprep.subr.mxu0 %v130
    %2690 = vmatpush1.msra.mxu0 %v129
    %2691 = vmatprep.subr.mxu0 %v134
    %2692 = vmatpush1.msra.mxu0 %v133
    %2693 = vmatprep.subr.mxu0 %v138
    %2694 = vmatpush1.msra.mxu0 %v137
    %2695 = vmatprep.subr.mxu0 %v142
    %2696 = vmatpush1.msra.mxu0 %v141
    %2697 = vmatprep.subr.mxu0 %v146
    %2698 = vmatpush1.msra.mxu0 %v145
    %2699 = vmatprep.subr.mxu0 %v150
    %2700 = vmatpush1.msra.mxu0 %v149
    %2701 = vmatprep.subr.mxu0 %v154
    %2702 = vmatpush1.msra.mxu0 %v153
    %2703 = vmatprep.subr.mxu0 %v158
    %2704 = vmatpush1.msra.mxu0 %v157
    %2705 = vmatprep.subr.mxu0 %v162
    %2706 = vmatpush1.msra.mxu0 %v161
    %2707 = vmatprep.subr.mxu0 %v166
    %2708 = vmatpush1.msra.mxu0 %v165
    %2709 = vmatprep.subr.mxu0 %v170
    %2710 = vmatpush1.msra.mxu0 %v169
    %2711 = vmatprep.subr.mxu0 %v174
    %2712 = vmatpush1.msra.mxu0 %v173
    %2713 = vmatprep.subr.mxu0 0.0
    %2714 = vmatpush1.msra.mxu0 0.0
    %2715 = vmatprep.subr.mxu0 0.0
    %2716 = vmatpush1.msra.mxu0 0.0
    %2717 = vmatprep.subr.mxu0 0.0
    %2718 = vmatpush1.msra.mxu0 0.0
    %2719 = vmatprep.subr.mxu0 0.0
    %2720 = vmatpush1.msra.mxu0 0.0
    %2721 = vmatprep.subr.mxu0 0.0
    %2722 = vmatpush1.msra.mxu0 0.0
    %2723 = vmatprep.subr.mxu0 0.0
    %2724 = vmatpush1.msra.mxu0 0.0
    %2725 = vmatprep.subr.mxu0 0.0
    %2726 = vmatpush1.msra.mxu0 0.0
    %2727 = vmatprep.subr.mxu0 0.0
    %2728 = vmatpush1.msra.mxu0 0.0
    %2729 = vmatprep.subr.mxu0 0.0
    %2730 = vmatpush1.msra.mxu0 0.0
    %2731 = vmatprep.subr.mxu0 0.0
    %2732 = vmatpush1.msra.mxu0 0.0
    %2733 = vmatprep.subr.mxu0 0.0
    %2734 = vmatpush1.msra.mxu0 0.0
    %2735 = vmatprep.subr.mxu0 0.0
    %2736 = vmatpush1.msra.mxu0 0.0
    %2737 = vmatprep.subr.mxu0 0.0
    %2738 = vmatpush1.msra.mxu0 0.0
    %2739 = vmatprep.subr.mxu0 0.0
    %2740 = vmatpush1.msra.mxu0 0.0
    %2741 = vmatprep.subr.mxu0 0.0
    %2742 = vmatpush1.msra.mxu0 0.0
    %2743 = vmatprep.subr.mxu0 0.0
    %2744 = vmatpush1.msra.mxu0 0.0
    %2745 = vmatprep.mubr.f32.mxu0 0.0
    %2746 = vmatmul.mubr.f32.gmra.mrb[0].mxu0 %v2450
    %v2747 = vpop.f32.mrb[0].mxu0
    %v2748 = vadd.f32 0.0, %v2747
    %v2749 = vpop.f32.mrb[0].mxu0
    %v2750 = vadd.f32 0.0, %v2749
    %2751 = vdwg.mxu0
    %v2752 = vadd.f32 %v2606, %v2677
    %v2753 = vadd.f32 %v2607, %v2679
    %v2754 = vadd.f32 %v2608, %v2748
    %v2755 = vadd.f32 %v2609, %v2750
    %s2756 = scalar_lea.vmem %s2, 48
    %v2757 = vld [vmem:[%s2756] sm:$0xff]
    %s2758 = scalar_lea.vmem %s2, 112
    %v2759 = vld [vmem:[%s2758] sm:$0xff]
    %v2760 = vxor.u32 %v2601, 2147483648
    %v2761 = vmul.f32 %v2760, 1.442695
    %v2762 = vpow.pop %v2761
    %v2763 = vadd.f32 %v2762, 1.0
    %v2764 = vrcp.pop %v2763
    %v2765 = vmul.f32 1.0, %v2764
    %v2766 = vxor.u32 %v2602, 2147483648
    %v2767 = vmul.f32 %v2766, 1.442695
    %v2768 = vpow.pop %v2767
    %v2769 = vadd.f32 %v2768, 1.0
    %v2770 = vrcp.pop %v2769
    %v2771 = vmul.f32 1.0, %v2770
    %v2772 = vtanh.pop %v2603
    %v2773 = vxor.u32 %v2604, 2147483648
    %v2774 = vmul.f32 %v2773, 1.442695
    %v2775 = vpow.pop %v2774
    %v2776 = vadd.f32 %v2775, 1.0
    %v2777 = vrcp.pop %v2776
    %v2778 = vmul.f32 1.0, %v2777
    %v2779 = vmul.f32 %v2771, %v2447
    %v2780 = vmul.f32 %v2765, %v2772
    %v2781 = vadd.f32 %v2779, %v2780
    %v2782 = vtanh.pop %v2781
    %v2783 = vmul.f32 %v2778, %v2782
    %v2784 = vxor.u32 %v2752, 2147483648
    %v2785 = vmul.f32 %v2784, 1.442695
    %v2786 = vpow.pop %v2785
    %v2787 = vadd.f32 %v2786, 1.0
    %v2788 = vrcp.pop %v2787
    %v2789 = vmul.f32 1.0, %v2788
    %v2790 = vxor.u32 %v2753, 2147483648
    %v2791 = vmul.f32 %v2790, 1.442695
    %v2792 = vpow.pop %v2791
    %v2793 = vadd.f32 %v2792, 1.0
    %v2794 = vrcp.pop %v2793
    %v2795 = vmul.f32 1.0, %v2794
    %v2796 = vtanh.pop %v2754
    %v2797 = vxor.u32 %v2755, 2147483648
    %v2798 = vmul.f32 %v2797, 1.442695
    %v2799 = vpow.pop %v2798
    %v2800 = vadd.f32 %v2799, 1.0
    %v2801 = vrcp.pop %v2800
    %v2802 = vmul.f32 1.0, %v2801
    %v2803 = vmul.f32 %v2795, %v2453
    %v2804 = vmul.f32 %v2789, %v2796
    %v2805 = vadd.f32 %v2803, %v2804
    %v2806 = vtanh.pop %v2805
    %v2807 = vmul.f32 %v2802, %v2806
    %2809 = vset.pattern.permute.xlu0 0
    %2810 = vperm.xlu0 %2809, %v2757
    %v2811 = vpop.permute.xlu0 %2810
    %v2813 = vmul.f32 %v2783, %v2811
    %2814 = vst [vmem:[%s916] sm:$0xff] %v2813
    %2816 = vset.pattern.permute.xlu0 0
    %2817 = vperm.xlu0 %2816, %v2759
    %v2818 = vpop.permute.xlu0 %2817
    %v2820 = vmul.f32 %v2807, %v2818
    %2821 = vst [vmem:[%s908 + $0x8] sm:$0xff] %v2820
    %v2822 = vsub.f32 %v2783, %v2444
    %v2823 = vmul.f32 %v2811, %v2822
    %v2824 = vadd.f32 %v2444, %v2823
    %v2825 = vsub.f32 %v2781, %v2447
    %v2826 = vmul.f32 %v2811, %v2825
    %v2827 = vadd.f32 %v2447, %v2826
    %v2828 = vsub.f32 %v2807, %v2450
    %v2829 = vmul.f32 %v2818, %v2828
    %v2830 = vadd.f32 %v2450, %v2829
    %v2831 = vsub.f32 %v2805, %v2453
    %v2832 = vmul.f32 %v2818, %v2831
    %v2833 = vadd.f32 %v2453, %v2832
    %s2834 = scalar_lea.vmem [#allocation2], 224
    %v2835 = vld [vmem:[%s2834] sm:$0xff]
    %v2836 = vld [vmem:[%s2834 + $0x8] sm:$0xff]
    %v2837 = vld [vmem:[%s2834 + $0x10] sm:$0xff]
    %v2838 = vld [vmem:[%s2834 + $0x18] sm:$0xff]
    %2839 = vmatprep.subr.mxu0 %v47
    %2840 = vmatpush1.msra.mxu0 %v46
    %2841 = vmatprep.subr.mxu0 %v51
    %2842 = vmatpush1.msra.mxu0 %v50
    %2843 = vmatprep.subr.mxu0 %v55
    %2844 = vmatpush1.msra.mxu0 %v54
    %2845 = vmatprep.subr.mxu0 %v59
    %2846 = vmatpush1.msra.mxu0 %v58
    %2847 = vmatprep.subr.mxu0 %v63
    %2848 = vmatpush1.msra.mxu0 %v62
    %2849 = vmatprep.subr.mxu0 %v67
    %2850 = vmatpush1.msra.mxu0 %v66
    %2851 = vmatprep.subr.mxu0 %v71
    %2852 = vmatpush1.msra.mxu0 %v70
    %2853 = vmatprep.subr.mxu0 %v75
    %2854 = vmatpush1.msra.mxu0 %v74
    %2855 = vmatprep.subr.mxu0 %v79
    %2856 = vmatpush1.msra.mxu0 %v78
    %2857 = vmatprep.subr.mxu0 %v83
    %2858 = vmatpush1.msra.mxu0 %v82
    %2859 = vmatprep.subr.mxu0 %v87
    %2860 = vmatpush1.msra.mxu0 %v86
    %2861 = vmatprep.subr.mxu0 %v91
    %2862 = vmatpush1.msra.mxu0 %v90
    %2863 = vmatprep.subr.mxu0 %v95
    %2864 = vmatpush1.msra.mxu0 %v94
    %2865 = vmatprep.subr.mxu0 %v99
    %2866 = vmatpush1.msra.mxu0 %v98
    %2867 = vmatprep.subr.mxu0 %v103
    %2868 = vmatpush1.msra.mxu0 %v102
    %2869 = vmatprep.subr.mxu0 %v107
    %2870 = vmatpush1.msra.mxu0 %v106
    %2871 = vmatprep.subr.mxu0 0.0
    %2872 = vmatpush1.msra.mxu0 0.0
    %2873 = vmatprep.subr.mxu0 0.0
    %2874 = vmatpush1.msra.mxu0 0.0
    %2875 = vmatprep.subr.mxu0 0.0
    %2876 = vmatpush1.msra.mxu0 0.0
    %2877 = vmatprep.subr.mxu0 0.0
    %2878 = vmatpush1.msra.mxu0 0.0
    %2879 = vmatprep.subr.mxu0 0.0
    %2880 = vmatpush1.msra.mxu0 0.0
    %2881 = vmatprep.subr.mxu0 0.0
    %2882 = vmatpush1.msra.mxu0 0.0
    %2883 = vmatprep.subr.mxu0 0.0
    %2884 = vmatpush1.msra.mxu0 0.0
    %2885 = vmatprep.subr.mxu0 0.0
    %2886 = vmatpush1.msra.mxu0 0.0
    %2887 = vmatprep.subr.mxu0 0.0
    %2888 = vmatpush1.msra.mxu0 0.0
    %2889 = vmatprep.subr.mxu0 0.0
    %2890 = vmatpush1.msra.mxu0 0.0
    %2891 = vmatprep.subr.mxu0 0.0
    %2892 = vmatpush1.msra.mxu0 0.0
    %2893 = vmatprep.subr.mxu0 0.0
    %2894 = vmatpush1.msra.mxu0 0.0
    %2895 = vmatprep.subr.mxu0 0.0
    %2896 = vmatpush1.msra.mxu0 0.0
    %2897 = vmatprep.subr.mxu0 0.0
    %2898 = vmatpush1.msra.mxu0 0.0
    %2899 = vmatprep.subr.mxu0 0.0
    %2900 = vmatpush1.msra.mxu0 0.0
    %2901 = vmatprep.subr.mxu0 0.0
    %2902 = vmatpush1.msra.mxu0 0.0
    %2903 = vmatprep.mubr.f32.mxu0 0.0
    %2904 = vmatmul.mubr.f32.gmra.mrb[0].mxu0 %v2824
    %v2905 = vpop.f32.mrb[0].mxu0
    %v2906 = vadd.f32 0.0, %v2905
    %v2907 = vpop.f32.mrb[0].mxu0
    %v2908 = vadd.f32 0.0, %v2907
    %2909 = vdwg.mxu0
    %2910 = vmatprep.subr.mxu0 %v49
    %2911 = vmatpush1.msra.mxu0 %v48
    %2912 = vmatprep.subr.mxu0 %v53
    %2913 = vmatpush1.msra.mxu0 %v52
    %2914 = vmatprep.subr.mxu0 %v57
    %2915 = vmatpush1.msra.mxu0 %v56
    %2916 = vmatprep.subr.mxu0 %v61
    %2917 = vmatpush1.msra.mxu0 %v60
    %2918 = vmatprep.subr.mxu0 %v65
    %2919 = vmatpush1.msra.mxu0 %v64
    %2920 = vmatprep.subr.mxu0 %v69
    %2921 = vmatpush1.msra.mxu0 %v68
    %2922 = vmatprep.subr.mxu0 %v73
    %2923 = vmatpush1.msra.mxu0 %v72
    %2924 = vmatprep.subr.mxu0 %v77
    %2925 = vmatpush1.msra.mxu0 %v76
    %2926 = vmatprep.subr.mxu0 %v81
    %2927 = vmatpush1.msra.mxu0 %v80
    %2928 = vmatprep.subr.mxu0 %v85
    %2929 = vmatpush1.msra.mxu0 %v84
    %2930 = vmatprep.subr.mxu0 %v89
    %2931 = vmatpush1.msra.mxu0 %v88
    %2932 = vmatprep.subr.mxu0 %v93
    %2933 = vmatpush1.msra.mxu0 %v92
    %2934 = vmatprep.subr.mxu0 %v97
    %2935 = vmatpush1.msra.mxu0 %v96
    %2936 = vmatprep.subr.mxu0 %v101
    %2937 = vmatpush1.msra.mxu0 %v100
    %2938 = vmatprep.subr.mxu0 %v105
    %2939 = vmatpush1.msra.mxu0 %v104
    %2940 = vmatprep.subr.mxu0 %v109
    %2941 = vmatpush1.msra.mxu0 %v108
    %2942 = vmatprep.subr.mxu0 0.0
    %2943 = vmatpush1.msra.mxu0 0.0
    %2944 = vmatprep.subr.mxu0 0.0
    %2945 = vmatpush1.msra.mxu0 0.0
    %2946 = vmatprep.subr.mxu0 0.0
    %2947 = vmatpush1.msra.mxu0 0.0
    %2948 = vmatprep.subr.mxu0 0.0
    %2949 = vmatpush1.msra.mxu0 0.0
    %2950 = vmatprep.subr.mxu0 0.0
    %2951 = vmatpush1.msra.mxu0 0.0
    %2952 = vmatprep.subr.mxu0 0.0
    %2953 = vmatpush1.msra.mxu0 0.0
    %2954 = vmatprep.subr.mxu0 0.0
    %2955 = vmatpush1.msra.mxu0 0.0
    %2956 = vmatprep.subr.mxu0 0.0
    %2957 = vmatpush1.msra.mxu0 0.0
    %2958 = vmatprep.subr.mxu0 0.0
    %2959 = vmatpush1.msra.mxu0 0.0
    %2960 = vmatprep.subr.mxu0 0.0
    %2961 = vmatpush1.msra.mxu0 0.0
    %2962 = vmatprep.subr.mxu0 0.0
    %2963 = vmatpush1.msra.mxu0 0.0
    %2964 = vmatprep.subr.mxu0 0.0
    %2965 = vmatpush1.msra.mxu0 0.0
    %2966 = vmatprep.subr.mxu0 0.0
    %2967 = vmatpush1.msra.mxu0 0.0
    %2968 = vmatprep.subr.mxu0 0.0
    %2969 = vmatpush1.msra.mxu0 0.0
    %2970 = vmatprep.subr.mxu0 0.0
    %2971 = vmatpush1.msra.mxu0 0.0
    %2972 = vmatprep.subr.mxu0 0.0
    %2973 = vmatpush1.msra.mxu0 0.0
    %2974 = vmatprep.mubr.f32.mxu0 0.0
    %2975 = vmatmul.mubr.f32.gmra.mrb[0].mxu0 %v2824
    %v2976 = vpop.f32.mrb[0].mxu0
    %v2977 = vadd.f32 0.0, %v2976
    %v2978 = vpop.f32.mrb[0].mxu0
    %v2979 = vadd.f32 0.0, %v2978
    %2980 = vdwg.mxu0
    %v2981 = vadd.f32 %v2835, %v2906
    %v2982 = vadd.f32 %v2836, %v2908
    %v2983 = vadd.f32 %v2837, %v2977
    %v2984 = vadd.f32 %v2838, %v2979
    %s2985 = scalar_lea.vmem [#allocation2], 480
    %v2986 = vld [vmem:[%s2985] sm:$0xff]
    %v2987 = vld [vmem:[%s2985 + $0x8] sm:$0xff]
    %v2988 = vld [vmem:[%s2985 + $0x10] sm:$0xff]
    %v2989 = vld [vmem:[%s2985 + $0x18] sm:$0xff]
    %2990 = vmatprep.subr.mxu0 %v112
    %2991 = vmatpush1.msra.mxu0 %v111
    %2992 = vmatprep.subr.mxu0 %v116
    %2993 = vmatpush1.msra.mxu0 %v115
    %2994 = vmatprep.subr.mxu0 %v120
    %2995 = vmatpush1.msra.mxu0 %v119
    %2996 = vmatprep.subr.mxu0 %v124
    %2997 = vmatpush1.msra.mxu0 %v123
    %2998 = vmatprep.subr.mxu0 %v128
    %2999 = vmatpush1.msra.mxu0 %v127
    %3000 = vmatprep.subr.mxu0 %v132
    %3001 = vmatpush1.msra.mxu0 %v131
    %3002 = vmatprep.subr.mxu0 %v136
    %3003 = vmatpush1.msra.mxu0 %v135
    %3004 = vmatprep.subr.mxu0 %v140
    %3005 = vmatpush1.msra.mxu0 %v139
    %3006 = vmatprep.subr.mxu0 %v144
    %3007 = vmatpush1.msra.mxu0 %v143
    %3008 = vmatprep.subr.mxu0 %v148
    %3009 = vmatpush1.msra.mxu0 %v147
    %3010 = vmatprep.subr.mxu0 %v152
    %3011 = vmatpush1.msra.mxu0 %v151
    %3012 = vmatprep.subr.mxu0 %v156
    %3013 = vmatpush1.msra.mxu0 %v155
    %3014 = vmatprep.subr.mxu0 %v160
    %3015 = vmatpush1.msra.mxu0 %v159
    %3016 = vmatprep.subr.mxu0 %v164
    %3017 = vmatpush1.msra.mxu0 %v163
    %3018 = vmatprep.subr.mxu0 %v168
    %3019 = vmatpush1.msra.mxu0 %v167
    %3020 = vmatprep.subr.mxu0 %v172
    %3021 = vmatpush1.msra.mxu0 %v171
    %3022 = vmatprep.subr.mxu0 0.0
    %3023 = vmatpush1.msra.mxu0 0.0
    %3024 = vmatprep.subr.mxu0 0.0
    %3025 = vmatpush1.msra.mxu0 0.0
    %3026 = vmatprep.subr.mxu0 0.0
    %3027 = vmatpush1.msra.mxu0 0.0
    %3028 = vmatprep.subr.mxu0 0.0
    %3029 = vmatpush1.msra.mxu0 0.0
    %3030 = vmatprep.subr.mxu0 0.0
    %3031 = vmatpush1.msra.mxu0 0.0
    %3032 = vmatprep.subr.mxu0 0.0
    %3033 = vmatpush1.msra.mxu0 0.0
    %3034 = vmatprep.subr.mxu0 0.0
    %3035 = vmatpush1.msra.mxu0 0.0
    %3036 = vmatprep.subr.mxu0 0.0
    %3037 = vmatpush1.msra.mxu0 0.0
    %3038 = vmatprep.subr.mxu0 0.0
    %3039 = vmatpush1.msra.mxu0 0.0
    %3040 = vmatprep.subr.mxu0 0.0
    %3041 = vmatpush1.msra.mxu0 0.0
    %3042 = vmatprep.subr.mxu0 0.0
    %3043 = vmatpush1.msra.mxu0 0.0
    %3044 = vmatprep.subr.mxu0 0.0
    %3045 = vmatpush1.msra.mxu0 0.0
    %3046 = vmatprep.subr.mxu0 0.0
    %3047 = vmatpush1.msra.mxu0 0.0
    %3048 = vmatprep.subr.mxu0 0.0
    %3049 = vmatpush1.msra.mxu0 0.0
    %3050 = vmatprep.subr.mxu0 0.0
    %3051 = vmatpush1.msra.mxu0 0.0
    %3052 = vmatprep.subr.mxu0 0.0
    %3053 = vmatpush1.msra.mxu0 0.0
    %3054 = vmatprep.mubr.f32.mxu0 0.0
    %3055 = vmatmul.mubr.f32.gmra.mrb[0].mxu0 %v2830
    %v3056 = vpop.f32.mrb[0].mxu0
    %v3057 = vadd.f32 0.0, %v3056
    %v3058 = vpop.f32.mrb[0].mxu0
    %v3059 = vadd.f32 0.0, %v3058
    %3060 = vdwg.mxu0
    %3061 = vmatprep.subr.mxu0 %v114
    %3062 = vmatpush1.msra.mxu0 %v113
    %3063 = vmatprep.subr.mxu0 %v118
    %3064 = vmatpush1.msra.mxu0 %v117
    %3065 = vmatprep.subr.mxu0 %v122
    %3066 = vmatpush1.msra.mxu0 %v121
    %3067 = vmatprep.subr.mxu0 %v126
    %3068 = vmatpush1.msra.mxu0 %v125
    %3069 = vmatprep.subr.mxu0 %v130
    %3070 = vmatpush1.msra.mxu0 %v129
    %3071 = vmatprep.subr.mxu0 %v134
    %3072 = vmatpush1.msra.mxu0 %v133
    %3073 = vmatprep.subr.mxu0 %v138
    %3074 = vmatpush1.msra.mxu0 %v137
    %3075 = vmatprep.subr.mxu0 %v142
    %3076 = vmatpush1.msra.mxu0 %v141
    %3077 = vmatprep.subr.mxu0 %v146
    %3078 = vmatpush1.msra.mxu0 %v145
    %3079 = vmatprep.subr.mxu0 %v150
    %3080 = vmatpush1.msra.mxu0 %v149
    %3081 = vmatprep.subr.mxu0 %v154
    %3082 = vmatpush1.msra.mxu0 %v153
    %3083 = vmatprep.subr.mxu0 %v158
    %3084 = vmatpush1.msra.mxu0 %v157
    %3085 = vmatprep.subr.mxu0 %v162
    %3086 = vmatpush1.msra.mxu0 %v161
    %3087 = vmatprep.subr.mxu0 %v166
    %3088 = vmatpush1.msra.mxu0 %v165
    %3089 = vmatprep.subr.mxu0 %v170
    %3090 = vmatpush1.msra.mxu0 %v169
    %3091 = vmatprep.subr.mxu0 %v174
    %3092 = vmatpush1.msra.mxu0 %v173
    %3093 = vmatprep.subr.mxu0 0.0
    %3094 = vmatpush1.msra.mxu0 0.0
    %3095 = vmatprep.subr.mxu0 0.0
    %3096 = vmatpush1.msra.mxu0 0.0
    %3097 = vmatprep.subr.mxu0 0.0
    %3098 = vmatpush1.msra.mxu0 0.0
    %3099 = vmatprep.subr.mxu0 0.0
    %3100 = vmatpush1.msra.mxu0 0.0
    %3101 = vmatprep.subr.mxu0 0.0
    %3102 = vmatpush1.msra.mxu0 0.0
    %3103 = vmatprep.subr.mxu0 0.0
    %3104 = vmatpush1.msra.mxu0 0.0
    %3105 = vmatprep.subr.mxu0 0.0
    %3106 = vmatpush1.msra.mxu0 0.0
    %3107 = vmatprep.subr.mxu0 0.0
    %3108 = vmatpush1.msra.mxu0 0.0
    %3109 = vmatprep.subr.mxu0 0.0
    %3110 = vmatpush1.msra.mxu0 0.0
    %3111 = vmatprep.subr.mxu0 0.0
    %3112 = vmatpush1.msra.mxu0 0.0
    %3113 = vmatprep.subr.mxu0 0.0
    %3114 = vmatpush1.msra.mxu0 0.0
    %3115 = vmatprep.subr.mxu0 0.0
    %3116 = vmatpush1.msra.mxu0 0.0
    %3117 = vmatprep.subr.mxu0 0.0
    %3118 = vmatpush1.msra.mxu0 0.0
    %3119 = vmatprep.subr.mxu0 0.0
    %3120 = vmatpush1.msra.mxu0 0.0
    %3121 = vmatprep.subr.mxu0 0.0
    %3122 = vmatpush1.msra.mxu0 0.0
    %3123 = vmatprep.subr.mxu0 0.0
    %3124 = vmatpush1.msra.mxu0 0.0
    %3125 = vmatprep.mubr.f32.mxu0 0.0
    %3126 = vmatmul.mubr.f32.gmra.mrb[0].mxu0 %v2830
    %v3127 = vpop.f32.mrb[0].mxu0
    %v3128 = vadd.f32 0.0, %v3127
    %v3129 = vpop.f32.mrb[0].mxu0
    %v3130 = vadd.f32 0.0, %v3129
    %3131 = vdwg.mxu0
    %v3132 = vadd.f32 %v2986, %v3057
    %v3133 = vadd.f32 %v2987, %v3059
    %v3134 = vadd.f32 %v2988, %v3128
    %v3135 = vadd.f32 %v2989, %v3130
    %s3136 = scalar_lea.vmem %s2, 56
    %v3137 = vld [vmem:[%s3136] sm:$0xff]
    %s3138 = scalar_lea.vmem %s2, 120
    %v3139 = vld [vmem:[%s3138] sm:$0xff]
    %v3140 = vxor.u32 %v2981, 2147483648
    %v3141 = vmul.f32 %v3140, 1.442695
    %v3142 = vpow.pop %v3141
    %v3143 = vadd.f32 %v3142, 1.0
    %v3144 = vrcp.pop %v3143
    %v3145 = vmul.f32 1.0, %v3144
    %v3146 = vxor.u32 %v2982, 2147483648
    %v3147 = vmul.f32 %v3146, 1.442695
    %v3148 = vpow.pop %v3147
    %v3149 = vadd.f32 %v3148, 1.0
    %v3150 = vrcp.pop %v3149
    %v3151 = vmul.f32 1.0, %v3150
    %v3152 = vtanh.pop %v2983
    %v3153 = vxor.u32 %v2984, 2147483648
    %v3154 = vmul.f32 %v3153, 1.442695
    %v3155 = vpow.pop %v3154
    %v3156 = vadd.f32 %v3155, 1.0
    %v3157 = vrcp.pop %v3156
    %v3158 = vmul.f32 1.0, %v3157
    %v3159 = vmul.f32 %v3151, %v2827
    %v3160 = vmul.f32 %v3145, %v3152
    %v3161 = vadd.f32 %v3159, %v3160
    %v3162 = vtanh.pop %v3161
    %v3163 = vmul.f32 %v3158, %v3162
    %v3164 = vxor.u32 %v3132, 2147483648
    %v3165 = vmul.f32 %v3164, 1.442695
    %v3166 = vpow.pop %v3165
    %v3167 = vadd.f32 %v3166, 1.0
    %v3168 = vrcp.pop %v3167
    %v3169 = vmul.f32 1.0, %v3168
    %v3170 = vxor.u32 %v3133, 2147483648
    %v3171 = vmul.f32 %v3170, 1.442695
    %v3172 = vpow.pop %v3171
    %v3173 = vadd.f32 %v3172, 1.0
    %v3174 = vrcp.pop %v3173
    %v3175 = vmul.f32 1.0, %v3174
    %v3176 = vtanh.pop %v3134
    %v3177 = vxor.u32 %v3135, 2147483648
    %v3178 = vmul.f32 %v3177, 1.442695
    %v3179 = vpow.pop %v3178
    %v3180 = vadd.f32 %v3179, 1.0
    %v3181 = vrcp.pop %v3180
    %v3182 = vmul.f32 1.0, %v3181
    %v3183 = vmul.f32 %v3175, %v2833
    %v3184 = vmul.f32 %v3169, %v3176
    %v3185 = vadd.f32 %v3183, %v3184
    %v3186 = vtanh.pop %v3185
    %v3187 = vmul.f32 %v3182, %v3186
    %3189 = vset.pattern.permute.xlu0 0
    %3190 = vperm.xlu0 %3189, %v3137
    %v3191 = vpop.permute.xlu0 %3190
    %v3193 = vmul.f32 %v3163, %v3191
    %3194 = vst [vmem:[%s540] sm:$0xff] %v3193
    %3196 = vset.pattern.permute.xlu0 0
    %3197 = vperm.xlu0 %3196, %v3139
    %v3198 = vpop.permute.xlu0 %3197
    %v3200 = vmul.f32 %v3187, %v3198
    %3201 = vst [vmem:[#allocation7 + $0x8] sm:$0xff] %v3200
    %v3202 = vsub.f32 %v3163, %v2824
    %v3203 = vmul.f32 %v3191, %v3202
    %v3204 = vadd.f32 %v2824, %v3203
    %v3205 = vsub.f32 %v3187, %v2830
    %v3206 = vmul.f32 %v3198, %v3205
    %v3207 = vadd.f32 %v2830, %v3206
    %3208 = vst [vmem:[#allocation8] sm:$0xff] %v3204
    %3209 = vst [vmem:[#allocation8 + $0x8] sm:$0xff] %v3207
    // Predicated region
    $region22: #{tpu_custom_call.1} parent=1 // pred_check
      _
    $region23: #{tpu_custom_call.1} parent=1 // pred_check_branch
      %3211 = sbr.rel (0) target = $region25
    $region24: #{tpu_custom_call.1} parent=1 // pred_region
      %s3213 = ssub.s32 2048, 2048
      %3214 = vsyncadd [#allocation4], %s3213
      %s3215 = sshll.u32 [#allocation7], 4
      %s3216 = int_to_ptr.vmem [resolvable:$true] %s3215
      %3221 = dma.vmem_to_hbm [thread:$0]  %s3216, 2048, %s3, [#allocation4], 256, 256, 16
    $region25: #{tpu_custom_call.1} parent=1 // pred_fallthru
      _
    // Predicated region
    $region26: #{tpu_custom_call.1} parent=1 // pred_check
      _
    $region27: #{tpu_custom_call.1} parent=1 // pred_check_branch
      %3223 = sbr.rel (0) target = $region29
    $region28: #{tpu_custom_call.1} parent=1 // pred_region
      %s3225 = ssub.s32 256, 256
      %3226 = vsyncadd [#allocation9], %s3225
      %s3228 = sshll.u32 [#allocation8], 4
      %s3229 = int_to_ptr.vmem [resolvable:$true] %s3228
      %3231 = dma.vmem_to_hbm [thread:$0]  %s3229, 256, %s4, [#allocation9]
    $region29: #{tpu_custom_call.1} parent=1 // pred_fallthru
      _
    // Predicated region
    $region30: #{tpu_custom_call.1} parent=1 // pred_check
      _
    $region31: #{tpu_custom_call.1} parent=1 // pred_check_branch
      %3233 = sbr.rel (0) target = $region33
    $region32: #{tpu_custom_call.1} parent=1 // pred_region
      %3234 = dma.done [#allocation4], 2048
    $region33: #{tpu_custom_call.1} parent=1 // pred_fallthru
      _
    // Predicated region
    $region34: #{tpu_custom_call.1} parent=1 // pred_check
      _
    $region35: #{tpu_custom_call.1} parent=1 // pred_check_branch
      %3236 = sbr.rel (0) target = $region37
    $region36: #{tpu_custom_call.1} parent=1 // pred_region
      %3237 = dma.done [#allocation9], 256
    $region37: #{tpu_custom_call.1} parent=1 // pred_fallthru
      _
    %3238 = vsyncpa [#allocation3], 1
    %3239 = vsyncpa [#allocation6], 1
    %3240 = vsyncpa [#allocation4], 1
    %3241 = vsyncpa [#allocation9], 1

</llo_original>
